<compile_context>
chip_gen: v6e
topology: v6e:2x2x1
jax: 0.10.0
libtpu: 0.0.40
codegen_flags: <defaults>
</compile_context>

<pallas_src>
import jax
import jax.numpy as jnp
from jax.experimental import pallas as pl
from jax.experimental.pallas import tpu as pltpu


# ----------------------------- Pallas kernel ------------------------------ #
def pointconv_kernel(nn_in_ref, lnn_ref, dens_ref, wn_ref, w_lin_ref, b_lin_ref,
                     dnet_ref, out_ref, wf_ref, feat_ref):
    cin = nn_in_ref.shape[1]          # C input channels
    knn = nn_in_ref.shape[2]          # K neighbors

    # --- density normalization: divide by per-point max over K neighbors ---
    dens = dens_ref[0]                                          # (K, TN) f32
    inv_max = jnp.maximum(jnp.max(dens, axis=0, keepdims=True), 1e-12)
    ds = dens * pl.reciprocal(inv_max)                          # exact recip

    # --- DensityNet: conv1x1(1->16)+BN+ReLU, conv1x1(16->1)+sigmoid --------
    # Packed SMEM params: [w_d1(16) | b_d1(16) | w_d2(16) | b_d2(1)]
    acc = jnp.zeros_like(ds)
    for m in range(16):
        h = jnp.maximum(ds * dnet_ref[m] + dnet_ref[16 + m], 0.0)
        acc = acc + h * dnet_ref[32 + m]
    d2 = jax.nn.sigmoid(acc + dnet_ref[48])                     # (K, TN)

    # --- WeightNet: conv1x1(3->32)+BN+ReLU, written per-k to VMEM scratch ---
    wn = wn_ref[...]                                            # (32, 4): W | b
    w0, w1, w2, bwn = wn[:, 0:1], wn[:, 1:2], wn[:, 2:3], wn[:, 3:4]
    lx = lnn_ref[0, 0]                                          # (K, TN)
    ly = lnn_ref[0, 1]
    lz = lnn_ref[0, 2]
    for k in range(knn):
        wf_ref[k] = jnp.maximum(
            lx[k:k + 1, :] * w0
            + ly[k:k + 1, :] * w1
            + lz[k:k + 1, :] * w2
            + bwn, 0.0)                                         # (32, TN)

    # --- per-point (C x K) @ (K x 32): c-outer / k-inner VPU accumulation ---
    # Only one (32, TN) accumulator + one (K, TN) row block live in registers;
    # wf streams from VMEM; finished c-slices land in the bf16 feat scratch.
    for ci in range(cin):
        rows = nn_in_ref[0, ci].astype(jnp.float32) * d2        # (K, TN)
        acc32 = None
        for k in range(knn):
            term = rows[k:k + 1, :] * wf_ref[k]                 # (32, TN)
            acc32 = term if acc32 is None else acc32 + term
        feat_ref[ci * 32:(ci + 1) * 32, :] = acc32.astype(jnp.bfloat16)

    # --- final Linear (C*32 -> Cout) on the MXU, lane-dense output ----------
    out = jnp.dot(w_lin_ref[...], feat_ref[...],
                  preferred_element_type=jnp.float32)           # (Cout, TN)
    out_ref[0] = (out + b_lin_ref[...]).astype(out_ref.dtype)


# ------------------------------- JAX glue ---------------------------------- #
def pairwise_sq_dist(pos_t):
    """pos_t: (B, N, 3) -> squared pairwise distance (B, N, N)."""
    sq = jnp.sum(pos_t * pos_t, axis=-1)
    inner = jnp.einsum('bnc,bmc->bnm', pos_t, pos_t)
    return sq[:, :, None] - 2.0 * inner + sq[:, None, :]


def init_pointconv_params(key, in_channels, out_channels, eps=1e-5):
    ks = jax.random.split(key, 8)
    s = 1.0 / jnp.sqrt(1.0 + eps)   # folded eval-mode BN (mean=0, var=1, g=1, b=0)

    w_wn = jax.random.normal(ks[0], (32, 3), jnp.float32) * 0.1   # WeightNet 3->32
    b_wn = jax.random.normal(ks[1], (32,), jnp.float32) * 0.1
    w_d1 = jax.random.normal(ks[2], (16,), jnp.float32) * 0.1     # DensityNet 1->16
    b_d1 = jax.random.normal(ks[3], (16,), jnp.float32) * 0.1
    w_d2 = jax.random.normal(ks[4], (16,), jnp.float32) * 0.1     # DensityNet 16->1
    b_d2 = jax.random.normal(ks[5], (1,), jnp.float32) * 0.1
    w_lin = jax.random.normal(ks[6], (out_channels, in_channels * 32),
                              jnp.float32) * 0.05                 # Linear
    b_lin = jax.random.normal(ks[7], (out_channels,), jnp.float32) * 0.05

    # Consolidated parameter blocks for the kernel (BN folded where applicable)
    dnet = jnp.concatenate([w_d1 * s, b_d1 * s, w_d2, b_d2]).astype(jnp.float32)   # (49,)
    wn = jnp.concatenate([w_wn * s, (b_wn * s)[:, None]], axis=1).astype(jnp.float32)  # (32, 4)
    return dict(dnet=dnet, wn=wn,
                w_lin=w_lin.astype(jnp.float32),      # (Cout, C*32)
                b_lin=b_lin.astype(jnp.float32))      # (Cout,)


def _vmem_budget_bytes():
    """Conservative per-kernel VMEM budget; respects v7x's 64 MiB/TC."""
    try:
        cap = int(pltpu.get_tpu_info().vmem_capacity_bytes)
    except Exception:
        cap = 64 * 1024 * 1024
    return min(cap // 2, 24 * 1024 * 1024)


def _tile_vmem_bytes(tn, c, k, cout):
    db = 2  # double-buffered pipeline copies of each I/O tile
    return (db * (k * c * tn * 2          # nn_in  (bf16)
                  + 3 * k * tn * 4        # lnn    (f32)
                  + k * tn * 4            # density(f32)
                  + cout * tn * 4)        # output (f32)
            + k * 32 * tn * 4             # wf scratch   (f32)
            + c * 32 * tn * 2)            # feat scratch (bf16)


def _pick_tile(n_pad, batch, c, k, cout, max_tn=256, min_steps=4):
    """Largest point tile (multiple of 128, <= max_tn) that fits the VMEM budget
    and still leaves >= min_steps grid steps (pipelining / v7x's 2 TCs)."""
    budget = _vmem_budget_bytes()
    tn = 128
    while (tn * 2 <= max_tn and n_pad % (tn * 2) == 0
           and batch * (n_pad // (tn * 2)) >= min_steps
           and _tile_vmem_bytes(tn * 2, c, k, cout) <= budget):
        tn *= 2
    return tn


def pointconv_forward(params, inputs, inputs_pos, inverse_density,
                      *, kernel_size, stride):
    """inputs (B,C,N), inputs_pos (B,3,N), inverse_density (B,1,N) -> (B,Cout,N)"""
    b, c, n = inputs.shape
    out_num = n // stride
    if n > out_num:
        # TODO(synk): fps_sampling downsample path (stride > 1) not implemented.
        raise NotImplementedError("stride > 1 (FPS sampling) not supported")
    k = kernel_size
    f32 = jnp.float32

    # KNN (data-dependent) stays in plain JAX.
    pos_cn = inputs_pos.astype(f32)                               # (B, 3, N)
    pos_t = jnp.transpose(pos_cn, (0, 2, 1))                      # (B, N, 3)
    dist = pairwise_sq_dist(pos_t)
    _, idx = jax.lax.top_k(-dist, k)                              # (B, N, K)
    idx_t = jnp.transpose(idx, (0, 2, 1))                         # (B, K, N)

    # TODO(synk): neighbor gather still runs as an XLA gather; an in-kernel DMA
    # gather (idx via scalar prefetch + features in HBM) would cut HBM traffic.
    def gather_ckn(x):   # (B, Cx, N) -> (B, Cx, K, N), points stay on lanes
        return jax.vmap(lambda a, i: a[:, i])(x, idx_t)

    nn_in = gather_ckn(inputs.astype(f32)).astype(jnp.bfloat16)   # (B, C, K, N)
    lnn = gather_ckn(pos_cn) - pos_cn[:, :, None, :]              # (B, 3, K, N)
    nn_den = gather_ckn(inverse_density.astype(f32))[:, 0]        # (B, K, N)

    cout = params['w_lin'].shape[0]

    # Pad N to a multiple of 128 so every tile is lane-dense (handles ragged N).
    n_pad = ((n + 127) // 128) * 128
    tn = _pick_tile(n_pad, b, c, k, cout)
    if n_pad != n:
        pad = n_pad - n
        nn_in = jnp.pad(nn_in, ((0, 0), (0, 0), (0, 0), (0, pad)))
        lnn = jnp.pad(lnn, ((0, 0), (0, 0), (0, 0), (0, pad)))
        nn_den = jnp.pad(nn_den, ((0, 0), (0, 0), (0, pad)), constant_values=1.0)

    grid = (b, n_pad // tn)
    tile4 = lambda bi, ni: (bi, 0, 0, ni)
    tile3 = lambda bi, ni: (bi, 0, ni)
    const2 = lambda bi, ni: (0, 0)

    pts = b * n_pad
    flops = pts * (2 * k * c * 32 + 2 * c * 32 * cout + 2 * k * 32 * 3 + k * 16 * 4)
    transc = pts * k
    bytes_acc = (pts * (k * c * 2 + k * 3 * 4 + k * 4 + cout * 4)
                 + 32 * 4 * 4 + cout * c * 32 * 2 + cout * 4 + 49 * 4)

    out = pl.pallas_call(
        pointconv_kernel,
        out_shape=jax.ShapeDtypeStruct((b, cout, n_pad), jnp.float32),
        grid_spec=pltpu.PrefetchScalarGridSpec(
            num_scalar_prefetch=0,
            grid=grid,
            in_specs=[
                pl.BlockSpec((1, c, k, tn), tile4),     # nn_in  (bf16)
                pl.BlockSpec((1, 3, k, tn), tile4),     # lnn    (f32)
                pl.BlockSpec((1, k, tn), tile3),        # dens   (f32)
                pl.BlockSpec((32, 4), const2),          # WeightNet W|b (resident)
                pl.BlockSpec((cout, c * 32), const2),   # Linear W (bf16, resident)
                pl.BlockSpec((cout, 1), const2),        # Linear b (resident)
                pl.BlockSpec(memory_space=pltpu.MemorySpace.SMEM),  # DensityNet params
            ],
            out_specs=pl.BlockSpec((1, cout, tn), tile3),
            scratch_shapes=[
                pltpu.VMEM((k, 32, tn), jnp.float32),       # wf scratch
                pltpu.VMEM((c * 32, tn), jnp.bfloat16),     # feat scratch (MXU input)
            ],
        ),
        compiler_params=pltpu.CompilerParams(
            dimension_semantics=("parallel", "parallel"),
            vmem_limit_bytes=32 * 1024 * 1024),
        cost_estimate=pl.CostEstimate(flops=int(flops),
                                      transcendentals=int(transc),
                                      bytes_accessed=int(bytes_acc)),
    )(nn_in, lnn, nn_den,
      params['wn'],
      params['w_lin'].astype(jnp.bfloat16),
      params['b_lin'][:, None].astype(jnp.float32),
      params['dnet'])

    return out[:, :, :n]                                  # (B, Cout, N)


# ------------------------ pure-JAX reference check ------------------------- #
def pointconv_reference(params, inputs, inputs_pos, inverse_density, *, kernel_size):
    hi = jax.lax.Precision.HIGHEST
    b, c, n = inputs.shape
    f32 = jnp.float32
    pos_t = jnp.transpose(inputs_pos, (0, 2, 1)).astype(f32)
    dist = pairwise_sq_dist(pos_t)
    _, idx = jax.lax.top_k(-dist, kernel_size)

    def g(x):
        xt = jnp.transpose(x, (0, 2, 1)).astype(f32)
        return jax.vmap(lambda a, i: a[i])(xt, idx)       # (B, N, K, Cx)

    nn_pos, nn_in, nn_den = g(inputs_pos), g(inputs), g(inverse_density)
    lnn = nn_pos - pos_t[:, :, None, :]

    w_d1 = params['dnet'][0:16]
    b_d1 = params['dnet'][16:32]
    w_d2 = params['dnet'][32:48]
    b_d2 = params['dnet'][48]
    w_wn = params['wn'][:, 0:3]
    b_wn = params['wn'][:, 3]

    ds = nn_den / jnp.max(nn_den, axis=2, keepdims=True)
    d1 = jnp.maximum(ds * w_d1 + b_d1, 0.0)
    d2 = jax.nn.sigmoid(jnp.sum(d1 * w_d2, axis=-1, keepdims=True) + b_d2)
    wf = jnp.maximum(jnp.einsum('bnkd,od->bnko', lnn, w_wn, precision=hi) + b_wn, 0.0)
    scaled = nn_in * d2
    feat = jnp.einsum('bnkc,bnko->bnco', scaled, wf, precision=hi).reshape(b, n, -1)
    out = jnp.einsum('bnf,jf->bjn', feat, params['w_lin'], precision=hi)
    return out + params['b_lin'][None, :, None]


if __name__ == "__main__":
    key = jax.random.PRNGKey(0)
    B, C, N = 2, 8, 500          # batch, in_channels, points (ragged N on purpose)
    COUT, K = 16, 8              # out_channels, kernel_size (knn neighbors)
    STRIDE = 1                   # stride=1 -> FPS downsampling branch is skipped

    k1, k2, k3, kp = jax.random.split(key, 4)
    inputs = jax.random.normal(k1, (B, C, N), jnp.float32)
    inputs_pos = jax.random.normal(k2, (B, 3, N), jnp.float32)
    inverse_density = jax.random.uniform(k3, (B, 1, N), jnp.float32,
                                         minval=0.5, maxval=1.5)

    params = init_pointconv_params(kp, C, COUT)

    out = pointconv_forward(params, inputs, inputs_pos, inverse_density,
                            kernel_size=K, stride=STRIDE)
    out = jax.block_until_ready(out)

    assert out.shape == (B, COUT, N), out.shape
    assert bool(jnp.all(jnp.isfinite(out)))
    ref = pointconv_reference(params, inputs, inputs_pos, inverse_density,
                              kernel_size=K)
    err = float(jnp.max(jnp.abs(out - ref)))
    assert bool(jnp.allclose(out, ref, atol=2e-2, rtol=2e-2)), err

    print("KERNEL_OK")
</pallas_src>

<mosaic_0001>
module attributes {stable_mosaic.version = 11 : i64} {
  func.func @pointconv_kernel(%arg0: i32, %arg1: i32, %arg2: memref<1x8x8x256xbf16, #tpu.memory_space<vmem>>, %arg3: memref<1x3x8x256xf32, #tpu.memory_space<vmem>>, %arg4: memref<1x8x256xf32, #tpu.memory_space<vmem>>, %arg5: memref<32x4xf32, #tpu.memory_space<vmem>>, %arg6: memref<16x256xbf16, #tpu.memory_space<vmem>>, %arg7: memref<16x1xf32, #tpu.memory_space<vmem>>, %arg8: memref<49xf32, #tpu.memory_space<smem>>, %arg9: memref<1x16x256xf32, #tpu.memory_space<vmem>>, %arg10: memref<8x32x256xf32, #tpu.memory_space<vmem>>, %arg11: memref<256x256xbf16, #tpu.memory_space<vmem>>) attributes {dimension_semantics = [#tpu.dimension_semantics<parallel>, #tpu.dimension_semantics<parallel>], iteration_bounds = array<i64: 2, 2>, scalar_prefetch = 0 : i64, scratch_operands = 2 : i64, tpu.core_type = #tpu.core_type<tc>, window_params = [{transform_indices = @transform_0, window_bounds = array<i64: 1, 8, 8, 256>}, {transform_indices = @transform_1, window_bounds = array<i64: 1, 3, 8, 256>}, {transform_indices = @transform_2, window_bounds = array<i64: 1, 8, 256>}, {pipeline_mode = #tpu.pipeline_mode<synchronous>, transform_indices = @transform_3, window_bounds = array<i64: 32, 4>}, {pipeline_mode = #tpu.pipeline_mode<synchronous>, transform_indices = @transform_4, window_bounds = array<i64: 16, 256>}, {pipeline_mode = #tpu.pipeline_mode<synchronous>, transform_indices = @transform_5, window_bounds = array<i64: 16, 1>}, {transform_indices = @transform_6, window_bounds = array<i64: 49>}, {transform_indices = @transform_7, window_bounds = array<i64: 1, 16, 256>}]} {
    %c0 = arith.constant 0 : index
    %c0_0 = arith.constant 0 : index
    %c0_1 = arith.constant 0 : index
    %0 = vector.load %arg4[%c0, %c0_0, %c0_1] : memref<1x8x256xf32, #tpu.memory_space<vmem>>, vector<1x8x256xf32>
    %1 = vector.shape_cast %0 : vector<1x8x256xf32> to vector<8x256xf32>
    %cst = arith.constant dense<0xFF800000> : vector<256xf32>
    %2 = vector.multi_reduction <maximumf>, %1, %cst [0] : vector<8x256xf32> to vector<256xf32>
    %3 = vector.shape_cast %2 : vector<256xf32> to vector<1x256xf32>
    %cst_2 = arith.constant 9.99999996E-13 : f32
    %4 = vector.broadcast %cst_2 : f32 to vector<1x256xf32>
    %5 = arith.maximumf %3, %4 : vector<1x256xf32>
    %6 = tpu.reciprocal %5 : vector<1x256xf32> -> vector<1x256xf32>
    %7 = vector.broadcast %6 : vector<1x256xf32> to vector<8x256xf32>
    %8 = arith.mulf %1, %7 : vector<8x256xf32>
    %cst_3 = arith.constant 0.000000e+00 : f32
    %9 = vector.broadcast %cst_3 : f32 to vector<8x256xf32>
    %c0_4 = arith.constant 0 : index
    %10 = memref.load %arg8[%c0_4] : memref<49xf32, #tpu.memory_space<smem>>
    %11 = vector.broadcast %10 : f32 to vector<8x256xf32>
    %12 = arith.mulf %8, %11 : vector<8x256xf32>
    %c16 = arith.constant 16 : index
    %13 = memref.load %arg8[%c16] : memref<49xf32, #tpu.memory_space<smem>>
    %14 = vector.broadcast %13 : f32 to vector<8x256xf32>
    %15 = arith.addf %12, %14 : vector<8x256xf32>
    %cst_5 = arith.constant 0.000000e+00 : f32
    %16 = vector.broadcast %cst_5 : f32 to vector<8x256xf32>
    %17 = arith.maximumf %15, %16 : vector<8x256xf32>
    %c32 = arith.constant 32 : index
    %18 = memref.load %arg8[%c32] : memref<49xf32, #tpu.memory_space<smem>>
    %19 = vector.broadcast %18 : f32 to vector<8x256xf32>
    %20 = arith.mulf %17, %19 : vector<8x256xf32>
    %21 = arith.addf %9, %20 : vector<8x256xf32>
    %c1 = arith.constant 1 : index
    %22 = memref.load %arg8[%c1] : memref<49xf32, #tpu.memory_space<smem>>
    %23 = vector.broadcast %22 : f32 to vector<8x256xf32>
    %24 = arith.mulf %8, %23 : vector<8x256xf32>
    %c17 = arith.constant 17 : index
    %25 = memref.load %arg8[%c17] : memref<49xf32, #tpu.memory_space<smem>>
    %26 = vector.broadcast %25 : f32 to vector<8x256xf32>
    %27 = arith.addf %24, %26 : vector<8x256xf32>
    %cst_6 = arith.constant 0.000000e+00 : f32
    %28 = vector.broadcast %cst_6 : f32 to vector<8x256xf32>
    %29 = arith.maximumf %27, %28 : vector<8x256xf32>
    %c33 = arith.constant 33 : index
    %30 = memref.load %arg8[%c33] : memref<49xf32, #tpu.memory_space<smem>>
    %31 = vector.broadcast %30 : f32 to vector<8x256xf32>
    %32 = arith.mulf %29, %31 : vector<8x256xf32>
    %33 = arith.addf %21, %32 : vector<8x256xf32>
    %c2 = arith.constant 2 : index
    %34 = memref.load %arg8[%c2] : memref<49xf32, #tpu.memory_space<smem>>
    %35 = vector.broadcast %34 : f32 to vector<8x256xf32>
    %36 = arith.mulf %8, %35 : vector<8x256xf32>
    %c18 = arith.constant 18 : index
    %37 = memref.load %arg8[%c18] : memref<49xf32, #tpu.memory_space<smem>>
    %38 = vector.broadcast %37 : f32 to vector<8x256xf32>
    %39 = arith.addf %36, %38 : vector<8x256xf32>
    %cst_7 = arith.constant 0.000000e+00 : f32
    %40 = vector.broadcast %cst_7 : f32 to vector<8x256xf32>
    %41 = arith.maximumf %39, %40 : vector<8x256xf32>
    %c34 = arith.constant 34 : index
    %42 = memref.load %arg8[%c34] : memref<49xf32, #tpu.memory_space<smem>>
    %43 = vector.broadcast %42 : f32 to vector<8x256xf32>
    %44 = arith.mulf %41, %43 : vector<8x256xf32>
    %45 = arith.addf %33, %44 : vector<8x256xf32>
    %c3 = arith.constant 3 : index
    %46 = memref.load %arg8[%c3] : memref<49xf32, #tpu.memory_space<smem>>
    %47 = vector.broadcast %46 : f32 to vector<8x256xf32>
    %48 = arith.mulf %8, %47 : vector<8x256xf32>
    %c19 = arith.constant 19 : index
    %49 = memref.load %arg8[%c19] : memref<49xf32, #tpu.memory_space<smem>>
    %50 = vector.broadcast %49 : f32 to vector<8x256xf32>
    %51 = arith.addf %48, %50 : vector<8x256xf32>
    %cst_8 = arith.constant 0.000000e+00 : f32
    %52 = vector.broadcast %cst_8 : f32 to vector<8x256xf32>
    %53 = arith.maximumf %51, %52 : vector<8x256xf32>
    %c35 = arith.constant 35 : index
    %54 = memref.load %arg8[%c35] : memref<49xf32, #tpu.memory_space<smem>>
    %55 = vector.broadcast %54 : f32 to vector<8x256xf32>
    %56 = arith.mulf %53, %55 : vector<8x256xf32>
    %57 = arith.addf %45, %56 : vector<8x256xf32>
    %c4 = arith.constant 4 : index
    %58 = memref.load %arg8[%c4] : memref<49xf32, #tpu.memory_space<smem>>
    %59 = vector.broadcast %58 : f32 to vector<8x256xf32>
    %60 = arith.mulf %8, %59 : vector<8x256xf32>
    %c20 = arith.constant 20 : index
    %61 = memref.load %arg8[%c20] : memref<49xf32, #tpu.memory_space<smem>>
    %62 = vector.broadcast %61 : f32 to vector<8x256xf32>
    %63 = arith.addf %60, %62 : vector<8x256xf32>
    %cst_9 = arith.constant 0.000000e+00 : f32
    %64 = vector.broadcast %cst_9 : f32 to vector<8x256xf32>
    %65 = arith.maximumf %63, %64 : vector<8x256xf32>
    %c36 = arith.constant 36 : index
    %66 = memref.load %arg8[%c36] : memref<49xf32, #tpu.memory_space<smem>>
    %67 = vector.broadcast %66 : f32 to vector<8x256xf32>
    %68 = arith.mulf %65, %67 : vector<8x256xf32>
    %69 = arith.addf %57, %68 : vector<8x256xf32>
    %c5 = arith.constant 5 : index
    %70 = memref.load %arg8[%c5] : memref<49xf32, #tpu.memory_space<smem>>
    %71 = vector.broadcast %70 : f32 to vector<8x256xf32>
    %72 = arith.mulf %8, %71 : vector<8x256xf32>
    %c21 = arith.constant 21 : index
    %73 = memref.load %arg8[%c21] : memref<49xf32, #tpu.memory_space<smem>>
    %74 = vector.broadcast %73 : f32 to vector<8x256xf32>
    %75 = arith.addf %72, %74 : vector<8x256xf32>
    %cst_10 = arith.constant 0.000000e+00 : f32
    %76 = vector.broadcast %cst_10 : f32 to vector<8x256xf32>
    %77 = arith.maximumf %75, %76 : vector<8x256xf32>
    %c37 = arith.constant 37 : index
    %78 = memref.load %arg8[%c37] : memref<49xf32, #tpu.memory_space<smem>>
    %79 = vector.broadcast %78 : f32 to vector<8x256xf32>
    %80 = arith.mulf %77, %79 : vector<8x256xf32>
    %81 = arith.addf %69, %80 : vector<8x256xf32>
    %c6 = arith.constant 6 : index
    %82 = memref.load %arg8[%c6] : memref<49xf32, #tpu.memory_space<smem>>
    %83 = vector.broadcast %82 : f32 to vector<8x256xf32>
    %84 = arith.mulf %8, %83 : vector<8x256xf32>
    %c22 = arith.constant 22 : index
    %85 = memref.load %arg8[%c22] : memref<49xf32, #tpu.memory_space<smem>>
    %86 = vector.broadcast %85 : f32 to vector<8x256xf32>
    %87 = arith.addf %84, %86 : vector<8x256xf32>
    %cst_11 = arith.constant 0.000000e+00 : f32
    %88 = vector.broadcast %cst_11 : f32 to vector<8x256xf32>
    %89 = arith.maximumf %87, %88 : vector<8x256xf32>
    %c38 = arith.constant 38 : index
    %90 = memref.load %arg8[%c38] : memref<49xf32, #tpu.memory_space<smem>>
    %91 = vector.broadcast %90 : f32 to vector<8x256xf32>
    %92 = arith.mulf %89, %91 : vector<8x256xf32>
    %93 = arith.addf %81, %92 : vector<8x256xf32>
    %c7 = arith.constant 7 : index
    %94 = memref.load %arg8[%c7] : memref<49xf32, #tpu.memory_space<smem>>
    %95 = vector.broadcast %94 : f32 to vector<8x256xf32>
    %96 = arith.mulf %8, %95 : vector<8x256xf32>
    %c23 = arith.constant 23 : index
    %97 = memref.load %arg8[%c23] : memref<49xf32, #tpu.memory_space<smem>>
    %98 = vector.broadcast %97 : f32 to vector<8x256xf32>
    %99 = arith.addf %96, %98 : vector<8x256xf32>
    %cst_12 = arith.constant 0.000000e+00 : f32
    %100 = vector.broadcast %cst_12 : f32 to vector<8x256xf32>
    %101 = arith.maximumf %99, %100 : vector<8x256xf32>
    %c39 = arith.constant 39 : index
    %102 = memref.load %arg8[%c39] : memref<49xf32, #tpu.memory_space<smem>>
    %103 = vector.broadcast %102 : f32 to vector<8x256xf32>
    %104 = arith.mulf %101, %103 : vector<8x256xf32>
    %105 = arith.addf %93, %104 : vector<8x256xf32>
    %c8 = arith.constant 8 : index
    %106 = memref.load %arg8[%c8] : memref<49xf32, #tpu.memory_space<smem>>
    %107 = vector.broadcast %106 : f32 to vector<8x256xf32>
    %108 = arith.mulf %8, %107 : vector<8x256xf32>
    %c24 = arith.constant 24 : index
    %109 = memref.load %arg8[%c24] : memref<49xf32, #tpu.memory_space<smem>>
    %110 = vector.broadcast %109 : f32 to vector<8x256xf32>
    %111 = arith.addf %108, %110 : vector<8x256xf32>
    %cst_13 = arith.constant 0.000000e+00 : f32
    %112 = vector.broadcast %cst_13 : f32 to vector<8x256xf32>
    %113 = arith.maximumf %111, %112 : vector<8x256xf32>
    %c40 = arith.constant 40 : index
    %114 = memref.load %arg8[%c40] : memref<49xf32, #tpu.memory_space<smem>>
    %115 = vector.broadcast %114 : f32 to vector<8x256xf32>
    %116 = arith.mulf %113, %115 : vector<8x256xf32>
    %117 = arith.addf %105, %116 : vector<8x256xf32>
    %c9 = arith.constant 9 : index
    %118 = memref.load %arg8[%c9] : memref<49xf32, #tpu.memory_space<smem>>
    %119 = vector.broadcast %118 : f32 to vector<8x256xf32>
    %120 = arith.mulf %8, %119 : vector<8x256xf32>
    %c25 = arith.constant 25 : index
    %121 = memref.load %arg8[%c25] : memref<49xf32, #tpu.memory_space<smem>>
    %122 = vector.broadcast %121 : f32 to vector<8x256xf32>
    %123 = arith.addf %120, %122 : vector<8x256xf32>
    %cst_14 = arith.constant 0.000000e+00 : f32
    %124 = vector.broadcast %cst_14 : f32 to vector<8x256xf32>
    %125 = arith.maximumf %123, %124 : vector<8x256xf32>
    %c41 = arith.constant 41 : index
    %126 = memref.load %arg8[%c41] : memref<49xf32, #tpu.memory_space<smem>>
    %127 = vector.broadcast %126 : f32 to vector<8x256xf32>
    %128 = arith.mulf %125, %127 : vector<8x256xf32>
    %129 = arith.addf %117, %128 : vector<8x256xf32>
    %c10 = arith.constant 10 : index
    %130 = memref.load %arg8[%c10] : memref<49xf32, #tpu.memory_space<smem>>
    %131 = vector.broadcast %130 : f32 to vector<8x256xf32>
    %132 = arith.mulf %8, %131 : vector<8x256xf32>
    %c26 = arith.constant 26 : index
    %133 = memref.load %arg8[%c26] : memref<49xf32, #tpu.memory_space<smem>>
    %134 = vector.broadcast %133 : f32 to vector<8x256xf32>
    %135 = arith.addf %132, %134 : vector<8x256xf32>
    %cst_15 = arith.constant 0.000000e+00 : f32
    %136 = vector.broadcast %cst_15 : f32 to vector<8x256xf32>
    %137 = arith.maximumf %135, %136 : vector<8x256xf32>
    %c42 = arith.constant 42 : index
    %138 = memref.load %arg8[%c42] : memref<49xf32, #tpu.memory_space<smem>>
    %139 = vector.broadcast %138 : f32 to vector<8x256xf32>
    %140 = arith.mulf %137, %139 : vector<8x256xf32>
    %141 = arith.addf %129, %140 : vector<8x256xf32>
    %c11 = arith.constant 11 : index
    %142 = memref.load %arg8[%c11] : memref<49xf32, #tpu.memory_space<smem>>
    %143 = vector.broadcast %142 : f32 to vector<8x256xf32>
    %144 = arith.mulf %8, %143 : vector<8x256xf32>
    %c27 = arith.constant 27 : index
    %145 = memref.load %arg8[%c27] : memref<49xf32, #tpu.memory_space<smem>>
    %146 = vector.broadcast %145 : f32 to vector<8x256xf32>
    %147 = arith.addf %144, %146 : vector<8x256xf32>
    %cst_16 = arith.constant 0.000000e+00 : f32
    %148 = vector.broadcast %cst_16 : f32 to vector<8x256xf32>
    %149 = arith.maximumf %147, %148 : vector<8x256xf32>
    %c43 = arith.constant 43 : index
    %150 = memref.load %arg8[%c43] : memref<49xf32, #tpu.memory_space<smem>>
    %151 = vector.broadcast %150 : f32 to vector<8x256xf32>
    %152 = arith.mulf %149, %151 : vector<8x256xf32>
    %153 = arith.addf %141, %152 : vector<8x256xf32>
    %c12 = arith.constant 12 : index
    %154 = memref.load %arg8[%c12] : memref<49xf32, #tpu.memory_space<smem>>
    %155 = vector.broadcast %154 : f32 to vector<8x256xf32>
    %156 = arith.mulf %8, %155 : vector<8x256xf32>
    %c28 = arith.constant 28 : index
    %157 = memref.load %arg8[%c28] : memref<49xf32, #tpu.memory_space<smem>>
    %158 = vector.broadcast %157 : f32 to vector<8x256xf32>
    %159 = arith.addf %156, %158 : vector<8x256xf32>
    %cst_17 = arith.constant 0.000000e+00 : f32
    %160 = vector.broadcast %cst_17 : f32 to vector<8x256xf32>
    %161 = arith.maximumf %159, %160 : vector<8x256xf32>
    %c44 = arith.constant 44 : index
    %162 = memref.load %arg8[%c44] : memref<49xf32, #tpu.memory_space<smem>>
    %163 = vector.broadcast %162 : f32 to vector<8x256xf32>
    %164 = arith.mulf %161, %163 : vector<8x256xf32>
    %165 = arith.addf %153, %164 : vector<8x256xf32>
    %c13 = arith.constant 13 : index
    %166 = memref.load %arg8[%c13] : memref<49xf32, #tpu.memory_space<smem>>
    %167 = vector.broadcast %166 : f32 to vector<8x256xf32>
    %168 = arith.mulf %8, %167 : vector<8x256xf32>
    %c29 = arith.constant 29 : index
    %169 = memref.load %arg8[%c29] : memref<49xf32, #tpu.memory_space<smem>>
    %170 = vector.broadcast %169 : f32 to vector<8x256xf32>
    %171 = arith.addf %168, %170 : vector<8x256xf32>
    %cst_18 = arith.constant 0.000000e+00 : f32
    %172 = vector.broadcast %cst_18 : f32 to vector<8x256xf32>
    %173 = arith.maximumf %171, %172 : vector<8x256xf32>
    %c45 = arith.constant 45 : index
    %174 = memref.load %arg8[%c45] : memref<49xf32, #tpu.memory_space<smem>>
    %175 = vector.broadcast %174 : f32 to vector<8x256xf32>
    %176 = arith.mulf %173, %175 : vector<8x256xf32>
    %177 = arith.addf %165, %176 : vector<8x256xf32>
    %c14 = arith.constant 14 : index
    %178 = memref.load %arg8[%c14] : memref<49xf32, #tpu.memory_space<smem>>
    %179 = vector.broadcast %178 : f32 to vector<8x256xf32>
    %180 = arith.mulf %8, %179 : vector<8x256xf32>
    %c30 = arith.constant 30 : index
    %181 = memref.load %arg8[%c30] : memref<49xf32, #tpu.memory_space<smem>>
    %182 = vector.broadcast %181 : f32 to vector<8x256xf32>
    %183 = arith.addf %180, %182 : vector<8x256xf32>
    %cst_19 = arith.constant 0.000000e+00 : f32
    %184 = vector.broadcast %cst_19 : f32 to vector<8x256xf32>
    %185 = arith.maximumf %183, %184 : vector<8x256xf32>
    %c46 = arith.constant 46 : index
    %186 = memref.load %arg8[%c46] : memref<49xf32, #tpu.memory_space<smem>>
    %187 = vector.broadcast %186 : f32 to vector<8x256xf32>
    %188 = arith.mulf %185, %187 : vector<8x256xf32>
    %189 = arith.addf %177, %188 : vector<8x256xf32>
    %c15 = arith.constant 15 : index
    %190 = memref.load %arg8[%c15] : memref<49xf32, #tpu.memory_space<smem>>
    %191 = vector.broadcast %190 : f32 to vector<8x256xf32>
    %192 = arith.mulf %8, %191 : vector<8x256xf32>
    %c31 = arith.constant 31 : index
    %193 = memref.load %arg8[%c31] : memref<49xf32, #tpu.memory_space<smem>>
    %194 = vector.broadcast %193 : f32 to vector<8x256xf32>
    %195 = arith.addf %192, %194 : vector<8x256xf32>
    %cst_20 = arith.constant 0.000000e+00 : f32
    %196 = vector.broadcast %cst_20 : f32 to vector<8x256xf32>
    %197 = arith.maximumf %195, %196 : vector<8x256xf32>
    %c47 = arith.constant 47 : index
    %198 = memref.load %arg8[%c47] : memref<49xf32, #tpu.memory_space<smem>>
    %199 = vector.broadcast %198 : f32 to vector<8x256xf32>
    %200 = arith.mulf %197, %199 : vector<8x256xf32>
    %201 = arith.addf %189, %200 : vector<8x256xf32>
    %c48 = arith.constant 48 : index
    %202 = memref.load %arg8[%c48] : memref<49xf32, #tpu.memory_space<smem>>
    %203 = vector.broadcast %202 : f32 to vector<8x256xf32>
    %204 = arith.addf %201, %203 : vector<8x256xf32>
    %205 = arith.negf %204 : vector<8x256xf32>
    %206 = math.exp %205 : vector<8x256xf32>
    %cst_21 = arith.constant 1.000000e+00 : f32
    %207 = vector.broadcast %cst_21 : f32 to vector<8x256xf32>
    %208 = arith.addf %207, %206 : vector<8x256xf32>
    %209 = arith.divf %207, %208 : vector<8x256xf32>
    %c0_22 = arith.constant 0 : index
    %c0_23 = arith.constant 0 : index
    %210 = vector.load %arg5[%c0_22, %c0_23] : memref<32x4xf32, #tpu.memory_space<vmem>>, vector<32x4xf32>
    %211 = vector.extract_strided_slice %210 {offsets = [0, 0], sizes = [32, 1], strides = [1, 1]} : vector<32x4xf32> to vector<32x1xf32>
    %212 = vector.extract_strided_slice %210 {offsets = [0, 1], sizes = [32, 1], strides = [1, 1]} : vector<32x4xf32> to vector<32x1xf32>
    %213 = vector.extract_strided_slice %210 {offsets = [0, 2], sizes = [32, 1], strides = [1, 1]} : vector<32x4xf32> to vector<32x1xf32>
    %214 = vector.extract_strided_slice %210 {offsets = [0, 3], sizes = [32, 1], strides = [1, 1]} : vector<32x4xf32> to vector<32x1xf32>
    %c0_24 = arith.constant 0 : index
    %c0_25 = arith.constant 0 : index
    %c0_26 = arith.constant 0 : index
    %c0_27 = arith.constant 0 : index
    %215 = vector.load %arg3[%c0_24, %c0_25, %c0_26, %c0_27] : memref<1x3x8x256xf32, #tpu.memory_space<vmem>>, vector<1x1x8x256xf32>
    %216 = vector.shape_cast %215 : vector<1x1x8x256xf32> to vector<8x256xf32>
    %c0_28 = arith.constant 0 : index
    %c1_29 = arith.constant 1 : index
    %c0_30 = arith.constant 0 : index
    %c0_31 = arith.constant 0 : index
    %217 = vector.load %arg3[%c0_28, %c1_29, %c0_30, %c0_31] : memref<1x3x8x256xf32, #tpu.memory_space<vmem>>, vector<1x1x8x256xf32>
    %218 = vector.shape_cast %217 : vector<1x1x8x256xf32> to vector<8x256xf32>
    %c0_32 = arith.constant 0 : index
    %c2_33 = arith.constant 2 : index
    %c0_34 = arith.constant 0 : index
    %c0_35 = arith.constant 0 : index
    %219 = vector.load %arg3[%c0_32, %c2_33, %c0_34, %c0_35] : memref<1x3x8x256xf32, #tpu.memory_space<vmem>>, vector<1x1x8x256xf32>
    %220 = vector.shape_cast %219 : vector<1x1x8x256xf32> to vector<8x256xf32>
    %221 = vector.extract_strided_slice %216 {offsets = [0, 0], sizes = [1, 256], strides = [1, 1]} : vector<8x256xf32> to vector<1x256xf32>
    %222 = vector.broadcast %221 : vector<1x256xf32> to vector<32x256xf32>
    %223 = vector.broadcast %211 : vector<32x1xf32> to vector<32x256xf32>
    %224 = arith.mulf %222, %223 : vector<32x256xf32>
    %225 = vector.extract_strided_slice %218 {offsets = [0, 0], sizes = [1, 256], strides = [1, 1]} : vector<8x256xf32> to vector<1x256xf32>
    %226 = vector.broadcast %225 : vector<1x256xf32> to vector<32x256xf32>
    %227 = vector.broadcast %212 : vector<32x1xf32> to vector<32x256xf32>
    %228 = arith.mulf %226, %227 : vector<32x256xf32>
    %229 = arith.addf %224, %228 : vector<32x256xf32>
    %230 = vector.extract_strided_slice %220 {offsets = [0, 0], sizes = [1, 256], strides = [1, 1]} : vector<8x256xf32> to vector<1x256xf32>
    %231 = vector.broadcast %230 : vector<1x256xf32> to vector<32x256xf32>
    %232 = vector.broadcast %213 : vector<32x1xf32> to vector<32x256xf32>
    %233 = arith.mulf %231, %232 : vector<32x256xf32>
    %234 = arith.addf %229, %233 : vector<32x256xf32>
    %235 = vector.broadcast %214 : vector<32x1xf32> to vector<32x256xf32>
    %236 = arith.addf %234, %235 : vector<32x256xf32>
    %cst_36 = arith.constant 0.000000e+00 : f32
    %237 = vector.broadcast %cst_36 : f32 to vector<32x256xf32>
    %238 = arith.maximumf %236, %237 : vector<32x256xf32>
    %c0_37 = arith.constant 0 : index
    %c0_38 = arith.constant 0 : index
    %c0_39 = arith.constant 0 : index
    %239 = vector.load %arg10[%c0_37, %c0_38, %c0_39] : memref<8x32x256xf32, #tpu.memory_space<vmem>>, vector<1x32x256xf32>
    %240 = vector.shape_cast %239 : vector<1x32x256xf32> to vector<32x256xf32>
    %241 = vector.shape_cast %238 : vector<32x256xf32> to vector<1x32x256xf32>
    tpu.vector_store %arg10[%c0_37, %c0_38, %c0_39], %241 {strides = array<i32>} : memref<8x32x256xf32, #tpu.memory_space<vmem>>, vector<1x32x256xf32>,
    %242 = vector.extract_strided_slice %216 {offsets = [1, 0], sizes = [1, 256], strides = [1, 1]} : vector<8x256xf32> to vector<1x256xf32>
    %243 = vector.broadcast %242 : vector<1x256xf32> to vector<32x256xf32>
    %244 = vector.broadcast %211 : vector<32x1xf32> to vector<32x256xf32>
    %245 = arith.mulf %243, %244 : vector<32x256xf32>
    %246 = vector.extract_strided_slice %218 {offsets = [1, 0], sizes = [1, 256], strides = [1, 1]} : vector<8x256xf32> to vector<1x256xf32>
    %247 = vector.broadcast %246 : vector<1x256xf32> to vector<32x256xf32>
    %248 = vector.broadcast %212 : vector<32x1xf32> to vector<32x256xf32>
    %249 = arith.mulf %247, %248 : vector<32x256xf32>
    %250 = arith.addf %245, %249 : vector<32x256xf32>
    %251 = vector.extract_strided_slice %220 {offsets = [1, 0], sizes = [1, 256], strides = [1, 1]} : vector<8x256xf32> to vector<1x256xf32>
    %252 = vector.broadcast %251 : vector<1x256xf32> to vector<32x256xf32>
    %253 = vector.broadcast %213 : vector<32x1xf32> to vector<32x256xf32>
    %254 = arith.mulf %252, %253 : vector<32x256xf32>
    %255 = arith.addf %250, %254 : vector<32x256xf32>
    %256 = vector.broadcast %214 : vector<32x1xf32> to vector<32x256xf32>
    %257 = arith.addf %255, %256 : vector<32x256xf32>
    %cst_40 = arith.constant 0.000000e+00 : f32
    %258 = vector.broadcast %cst_40 : f32 to vector<32x256xf32>
    %259 = arith.maximumf %257, %258 : vector<32x256xf32>
    %c1_41 = arith.constant 1 : index
    %c0_42 = arith.constant 0 : index
    %c0_43 = arith.constant 0 : index
    %260 = vector.load %arg10[%c1_41, %c0_42, %c0_43] : memref<8x32x256xf32, #tpu.memory_space<vmem>>, vector<1x32x256xf32>
    %261 = vector.shape_cast %260 : vector<1x32x256xf32> to vector<32x256xf32>
    %262 = vector.shape_cast %259 : vector<32x256xf32> to vector<1x32x256xf32>
    tpu.vector_store %arg10[%c1_41, %c0_42, %c0_43], %262 {strides = array<i32>} : memref<8x32x256xf32, #tpu.memory_space<vmem>>, vector<1x32x256xf32>,
    %263 = vector.extract_strided_slice %216 {offsets = [2, 0], sizes = [1, 256], strides = [1, 1]} : vector<8x256xf32> to vector<1x256xf32>
    %264 = vector.broadcast %263 : vector<1x256xf32> to vector<32x256xf32>
    %265 = vector.broadcast %211 : vector<32x1xf32> to vector<32x256xf32>
    %266 = arith.mulf %264, %265 : vector<32x256xf32>
    %267 = vector.extract_strided_slice %218 {offsets = [2, 0], sizes = [1, 256], strides = [1, 1]} : vector<8x256xf32> to vector<1x256xf32>
    %268 = vector.broadcast %267 : vector<1x256xf32> to vector<32x256xf32>
    %269 = vector.broadcast %212 : vector<32x1xf32> to vector<32x256xf32>
    %270 = arith.mulf %268, %269 : vector<32x256xf32>
    %271 = arith.addf %266, %270 : vector<32x256xf32>
    %272 = vector.extract_strided_slice %220 {offsets = [2, 0], sizes = [1, 256], strides = [1, 1]} : vector<8x256xf32> to vector<1x256xf32>
    %273 = vector.broadcast %272 : vector<1x256xf32> to vector<32x256xf32>
    %274 = vector.broadcast %213 : vector<32x1xf32> to vector<32x256xf32>
    %275 = arith.mulf %273, %274 : vector<32x256xf32>
    %276 = arith.addf %271, %275 : vector<32x256xf32>
    %277 = vector.broadcast %214 : vector<32x1xf32> to vector<32x256xf32>
    %278 = arith.addf %276, %277 : vector<32x256xf32>
    %cst_44 = arith.constant 0.000000e+00 : f32
    %279 = vector.broadcast %cst_44 : f32 to vector<32x256xf32>
    %280 = arith.maximumf %278, %279 : vector<32x256xf32>
    %c2_45 = arith.constant 2 : index
    %c0_46 = arith.constant 0 : index
    %c0_47 = arith.constant 0 : index
    %281 = vector.load %arg10[%c2_45, %c0_46, %c0_47] : memref<8x32x256xf32, #tpu.memory_space<vmem>>, vector<1x32x256xf32>
    %282 = vector.shape_cast %281 : vector<1x32x256xf32> to vector<32x256xf32>
    %283 = vector.shape_cast %280 : vector<32x256xf32> to vector<1x32x256xf32>
    tpu.vector_store %arg10[%c2_45, %c0_46, %c0_47], %283 {strides = array<i32>} : memref<8x32x256xf32, #tpu.memory_space<vmem>>, vector<1x32x256xf32>,
    %284 = vector.extract_strided_slice %216 {offsets = [3, 0], sizes = [1, 256], strides = [1, 1]} : vector<8x256xf32> to vector<1x256xf32>
    %285 = vector.broadcast %284 : vector<1x256xf32> to vector<32x256xf32>
    %286 = vector.broadcast %211 : vector<32x1xf32> to vector<32x256xf32>
    %287 = arith.mulf %285, %286 : vector<32x256xf32>
    %288 = vector.extract_strided_slice %218 {offsets = [3, 0], sizes = [1, 256], strides = [1, 1]} : vector<8x256xf32> to vector<1x256xf32>
    %289 = vector.broadcast %288 : vector<1x256xf32> to vector<32x256xf32>
    %290 = vector.broadcast %212 : vector<32x1xf32> to vector<32x256xf32>
    %291 = arith.mulf %289, %290 : vector<32x256xf32>
    %292 = arith.addf %287, %291 : vector<32x256xf32>
    %293 = vector.extract_strided_slice %220 {offsets = [3, 0], sizes = [1, 256], strides = [1, 1]} : vector<8x256xf32> to vector<1x256xf32>
    %294 = vector.broadcast %293 : vector<1x256xf32> to vector<32x256xf32>
    %295 = vector.broadcast %213 : vector<32x1xf32> to vector<32x256xf32>
    %296 = arith.mulf %294, %295 : vector<32x256xf32>
    %297 = arith.addf %292, %296 : vector<32x256xf32>
    %298 = vector.broadcast %214 : vector<32x1xf32> to vector<32x256xf32>
    %299 = arith.addf %297, %298 : vector<32x256xf32>
    %cst_48 = arith.constant 0.000000e+00 : f32
    %300 = vector.broadcast %cst_48 : f32 to vector<32x256xf32>
    %301 = arith.maximumf %299, %300 : vector<32x256xf32>
    %c3_49 = arith.constant 3 : index
    %c0_50 = arith.constant 0 : index
    %c0_51 = arith.constant 0 : index
    %302 = vector.load %arg10[%c3_49, %c0_50, %c0_51] : memref<8x32x256xf32, #tpu.memory_space<vmem>>, vector<1x32x256xf32>
    %303 = vector.shape_cast %302 : vector<1x32x256xf32> to vector<32x256xf32>
    %304 = vector.shape_cast %301 : vector<32x256xf32> to vector<1x32x256xf32>
    tpu.vector_store %arg10[%c3_49, %c0_50, %c0_51], %304 {strides = array<i32>} : memref<8x32x256xf32, #tpu.memory_space<vmem>>, vector<1x32x256xf32>,
    %305 = vector.extract_strided_slice %216 {offsets = [4, 0], sizes = [1, 256], strides = [1, 1]} : vector<8x256xf32> to vector<1x256xf32>
    %306 = vector.broadcast %305 : vector<1x256xf32> to vector<32x256xf32>
    %307 = vector.broadcast %211 : vector<32x1xf32> to vector<32x256xf32>
    %308 = arith.mulf %306, %307 : vector<32x256xf32>
    %309 = vector.extract_strided_slice %218 {offsets = [4, 0], sizes = [1, 256], strides = [1, 1]} : vector<8x256xf32> to vector<1x256xf32>
    %310 = vector.broadcast %309 : vector<1x256xf32> to vector<32x256xf32>
    %311 = vector.broadcast %212 : vector<32x1xf32> to vector<32x256xf32>
    %312 = arith.mulf %310, %311 : vector<32x256xf32>
    %313 = arith.addf %308, %312 : vector<32x256xf32>
    %314 = vector.extract_strided_slice %220 {offsets = [4, 0], sizes = [1, 256], strides = [1, 1]} : vector<8x256xf32> to vector<1x256xf32>
    %315 = vector.broadcast %314 : vector<1x256xf32> to vector<32x256xf32>
    %316 = vector.broadcast %213 : vector<32x1xf32> to vector<32x256xf32>
    %317 = arith.mulf %315, %316 : vector<32x256xf32>
    %318 = arith.addf %313, %317 : vector<32x256xf32>
    %319 = vector.broadcast %214 : vector<32x1xf32> to vector<32x256xf32>
    %320 = arith.addf %318, %319 : vector<32x256xf32>
    %cst_52 = arith.constant 0.000000e+00 : f32
    %321 = vector.broadcast %cst_52 : f32 to vector<32x256xf32>
    %322 = arith.maximumf %320, %321 : vector<32x256xf32>
    %c4_53 = arith.constant 4 : index
    %c0_54 = arith.constant 0 : index
    %c0_55 = arith.constant 0 : index
    %323 = vector.load %arg10[%c4_53, %c0_54, %c0_55] : memref<8x32x256xf32, #tpu.memory_space<vmem>>, vector<1x32x256xf32>
    %324 = vector.shape_cast %323 : vector<1x32x256xf32> to vector<32x256xf32>
    %325 = vector.shape_cast %322 : vector<32x256xf32> to vector<1x32x256xf32>
    tpu.vector_store %arg10[%c4_53, %c0_54, %c0_55], %325 {strides = array<i32>} : memref<8x32x256xf32, #tpu.memory_space<vmem>>, vector<1x32x256xf32>,
    %326 = vector.extract_strided_slice %216 {offsets = [5, 0], sizes = [1, 256], strides = [1, 1]} : vector<8x256xf32> to vector<1x256xf32>
    %327 = vector.broadcast %326 : vector<1x256xf32> to vector<32x256xf32>
    %328 = vector.broadcast %211 : vector<32x1xf32> to vector<32x256xf32>
    %329 = arith.mulf %327, %328 : vector<32x256xf32>
    %330 = vector.extract_strided_slice %218 {offsets = [5, 0], sizes = [1, 256], strides = [1, 1]} : vector<8x256xf32> to vector<1x256xf32>
    %331 = vector.broadcast %330 : vector<1x256xf32> to vector<32x256xf32>
    %332 = vector.broadcast %212 : vector<32x1xf32> to vector<32x256xf32>
    %333 = arith.mulf %331, %332 : vector<32x256xf32>
    %334 = arith.addf %329, %333 : vector<32x256xf32>
    %335 = vector.extract_strided_slice %220 {offsets = [5, 0], sizes = [1, 256], strides = [1, 1]} : vector<8x256xf32> to vector<1x256xf32>
    %336 = vector.broadcast %335 : vector<1x256xf32> to vector<32x256xf32>
    %337 = vector.broadcast %213 : vector<32x1xf32> to vector<32x256xf32>
    %338 = arith.mulf %336, %337 : vector<32x256xf32>
    %339 = arith.addf %334, %338 : vector<32x256xf32>
    %340 = vector.broadcast %214 : vector<32x1xf32> to vector<32x256xf32>
    %341 = arith.addf %339, %340 : vector<32x256xf32>
    %cst_56 = arith.constant 0.000000e+00 : f32
    %342 = vector.broadcast %cst_56 : f32 to vector<32x256xf32>
    %343 = arith.maximumf %341, %342 : vector<32x256xf32>
    %c5_57 = arith.constant 5 : index
    %c0_58 = arith.constant 0 : index
    %c0_59 = arith.constant 0 : index
    %344 = vector.load %arg10[%c5_57, %c0_58, %c0_59] : memref<8x32x256xf32, #tpu.memory_space<vmem>>, vector<1x32x256xf32>
    %345 = vector.shape_cast %344 : vector<1x32x256xf32> to vector<32x256xf32>
    %346 = vector.shape_cast %343 : vector<32x256xf32> to vector<1x32x256xf32>
    tpu.vector_store %arg10[%c5_57, %c0_58, %c0_59], %346 {strides = array<i32>} : memref<8x32x256xf32, #tpu.memory_space<vmem>>, vector<1x32x256xf32>,
    %347 = vector.extract_strided_slice %216 {offsets = [6, 0], sizes = [1, 256], strides = [1, 1]} : vector<8x256xf32> to vector<1x256xf32>
    %348 = vector.broadcast %347 : vector<1x256xf32> to vector<32x256xf32>
    %349 = vector.broadcast %211 : vector<32x1xf32> to vector<32x256xf32>
    %350 = arith.mulf %348, %349 : vector<32x256xf32>
    %351 = vector.extract_strided_slice %218 {offsets = [6, 0], sizes = [1, 256], strides = [1, 1]} : vector<8x256xf32> to vector<1x256xf32>
    %352 = vector.broadcast %351 : vector<1x256xf32> to vector<32x256xf32>
    %353 = vector.broadcast %212 : vector<32x1xf32> to vector<32x256xf32>
    %354 = arith.mulf %352, %353 : vector<32x256xf32>
    %355 = arith.addf %350, %354 : vector<32x256xf32>
    %356 = vector.extract_strided_slice %220 {offsets = [6, 0], sizes = [1, 256], strides = [1, 1]} : vector<8x256xf32> to vector<1x256xf32>
    %357 = vector.broadcast %356 : vector<1x256xf32> to vector<32x256xf32>
    %358 = vector.broadcast %213 : vector<32x1xf32> to vector<32x256xf32>
    %359 = arith.mulf %357, %358 : vector<32x256xf32>
    %360 = arith.addf %355, %359 : vector<32x256xf32>
    %361 = vector.broadcast %214 : vector<32x1xf32> to vector<32x256xf32>
    %362 = arith.addf %360, %361 : vector<32x256xf32>
    %cst_60 = arith.constant 0.000000e+00 : f32
    %363 = vector.broadcast %cst_60 : f32 to vector<32x256xf32>
    %364 = arith.maximumf %362, %363 : vector<32x256xf32>
    %c6_61 = arith.constant 6 : index
    %c0_62 = arith.constant 0 : index
    %c0_63 = arith.constant 0 : index
    %365 = vector.load %arg10[%c6_61, %c0_62, %c0_63] : memref<8x32x256xf32, #tpu.memory_space<vmem>>, vector<1x32x256xf32>
    %366 = vector.shape_cast %365 : vector<1x32x256xf32> to vector<32x256xf32>
    %367 = vector.shape_cast %364 : vector<32x256xf32> to vector<1x32x256xf32>
    tpu.vector_store %arg10[%c6_61, %c0_62, %c0_63], %367 {strides = array<i32>} : memref<8x32x256xf32, #tpu.memory_space<vmem>>, vector<1x32x256xf32>,
    %368 = vector.extract_strided_slice %216 {offsets = [7, 0], sizes = [1, 256], strides = [1, 1]} : vector<8x256xf32> to vector<1x256xf32>
    %369 = vector.broadcast %368 : vector<1x256xf32> to vector<32x256xf32>
    %370 = vector.broadcast %211 : vector<32x1xf32> to vector<32x256xf32>
    %371 = arith.mulf %369, %370 : vector<32x256xf32>
    %372 = vector.extract_strided_slice %218 {offsets = [7, 0], sizes = [1, 256], strides = [1, 1]} : vector<8x256xf32> to vector<1x256xf32>
    %373 = vector.broadcast %372 : vector<1x256xf32> to vector<32x256xf32>
    %374 = vector.broadcast %212 : vector<32x1xf32> to vector<32x256xf32>
    %375 = arith.mulf %373, %374 : vector<32x256xf32>
    %376 = arith.addf %371, %375 : vector<32x256xf32>
    %377 = vector.extract_strided_slice %220 {offsets = [7, 0], sizes = [1, 256], strides = [1, 1]} : vector<8x256xf32> to vector<1x256xf32>
    %378 = vector.broadcast %377 : vector<1x256xf32> to vector<32x256xf32>
    %379 = vector.broadcast %213 : vector<32x1xf32> to vector<32x256xf32>
    %380 = arith.mulf %378, %379 : vector<32x256xf32>
    %381 = arith.addf %376, %380 : vector<32x256xf32>
    %382 = vector.broadcast %214 : vector<32x1xf32> to vector<32x256xf32>
    %383 = arith.addf %381, %382 : vector<32x256xf32>
    %cst_64 = arith.constant 0.000000e+00 : f32
    %384 = vector.broadcast %cst_64 : f32 to vector<32x256xf32>
    %385 = arith.maximumf %383, %384 : vector<32x256xf32>
    %c7_65 = arith.constant 7 : index
    %c0_66 = arith.constant 0 : index
    %c0_67 = arith.constant 0 : index
    %386 = vector.load %arg10[%c7_65, %c0_66, %c0_67] : memref<8x32x256xf32, #tpu.memory_space<vmem>>, vector<1x32x256xf32>
    %387 = vector.shape_cast %386 : vector<1x32x256xf32> to vector<32x256xf32>
    %388 = vector.shape_cast %385 : vector<32x256xf32> to vector<1x32x256xf32>
    tpu.vector_store %arg10[%c7_65, %c0_66, %c0_67], %388 {strides = array<i32>} : memref<8x32x256xf32, #tpu.memory_space<vmem>>, vector<1x32x256xf32>,
    %c0_68 = arith.constant 0 : index
    %c0_69 = arith.constant 0 : index
    %c0_70 = arith.constant 0 : index
    %c0_71 = arith.constant 0 : index
    %389 = vector.load %arg2[%c0_68, %c0_69, %c0_70, %c0_71] : memref<1x8x8x256xbf16, #tpu.memory_space<vmem>>, vector<1x1x8x256xbf16>
    %390 = vector.shape_cast %389 : vector<1x1x8x256xbf16> to vector<8x256xbf16>
    %391 = arith.extf %390 : vector<8x256xbf16> to vector<8x256xf32>
    %392 = arith.mulf %391, %209 : vector<8x256xf32>
    %393 = vector.extract_strided_slice %392 {offsets = [0, 0], sizes = [1, 256], strides = [1, 1]} : vector<8x256xf32> to vector<1x256xf32>
    %c0_72 = arith.constant 0 : index
    %c0_73 = arith.constant 0 : index
    %c0_74 = arith.constant 0 : index
    %394 = vector.load %arg10[%c0_72, %c0_73, %c0_74] : memref<8x32x256xf32, #tpu.memory_space<vmem>>, vector<1x32x256xf32>
    %395 = vector.shape_cast %394 : vector<1x32x256xf32> to vector<32x256xf32>
    %396 = vector.broadcast %393 : vector<1x256xf32> to vector<32x256xf32>
    %397 = arith.mulf %396, %395 : vector<32x256xf32>
    %398 = vector.extract_strided_slice %392 {offsets = [1, 0], sizes = [1, 256], strides = [1, 1]} : vector<8x256xf32> to vector<1x256xf32>
    %c1_75 = arith.constant 1 : index
    %c0_76 = arith.constant 0 : index
    %c0_77 = arith.constant 0 : index
    %399 = vector.load %arg10[%c1_75, %c0_76, %c0_77] : memref<8x32x256xf32, #tpu.memory_space<vmem>>, vector<1x32x256xf32>
    %400 = vector.shape_cast %399 : vector<1x32x256xf32> to vector<32x256xf32>
    %401 = vector.broadcast %398 : vector<1x256xf32> to vector<32x256xf32>
    %402 = arith.mulf %401, %400 : vector<32x256xf32>
    %403 = arith.addf %397, %402 : vector<32x256xf32>
    %404 = vector.extract_strided_slice %392 {offsets = [2, 0], sizes = [1, 256], strides = [1, 1]} : vector<8x256xf32> to vector<1x256xf32>
    %c2_78 = arith.constant 2 : index
    %c0_79 = arith.constant 0 : index
    %c0_80 = arith.constant 0 : index
    %405 = vector.load %arg10[%c2_78, %c0_79, %c0_80] : memref<8x32x256xf32, #tpu.memory_space<vmem>>, vector<1x32x256xf32>
    %406 = vector.shape_cast %405 : vector<1x32x256xf32> to vector<32x256xf32>
    %407 = vector.broadcast %404 : vector<1x256xf32> to vector<32x256xf32>
    %408 = arith.mulf %407, %406 : vector<32x256xf32>
    %409 = arith.addf %403, %408 : vector<32x256xf32>
    %410 = vector.extract_strided_slice %392 {offsets = [3, 0], sizes = [1, 256], strides = [1, 1]} : vector<8x256xf32> to vector<1x256xf32>
    %c3_81 = arith.constant 3 : index
    %c0_82 = arith.constant 0 : index
    %c0_83 = arith.constant 0 : index
    %411 = vector.load %arg10[%c3_81, %c0_82, %c0_83] : memref<8x32x256xf32, #tpu.memory_space<vmem>>, vector<1x32x256xf32>
    %412 = vector.shape_cast %411 : vector<1x32x256xf32> to vector<32x256xf32>
    %413 = vector.broadcast %410 : vector<1x256xf32> to vector<32x256xf32>
    %414 = arith.mulf %413, %412 : vector<32x256xf32>
    %415 = arith.addf %409, %414 : vector<32x256xf32>
    %416 = vector.extract_strided_slice %392 {offsets = [4, 0], sizes = [1, 256], strides = [1, 1]} : vector<8x256xf32> to vector<1x256xf32>
    %c4_84 = arith.constant 4 : index
    %c0_85 = arith.constant 0 : index
    %c0_86 = arith.constant 0 : index
    %417 = vector.load %arg10[%c4_84, %c0_85, %c0_86] : memref<8x32x256xf32, #tpu.memory_space<vmem>>, vector<1x32x256xf32>
    %418 = vector.shape_cast %417 : vector<1x32x256xf32> to vector<32x256xf32>
    %419 = vector.broadcast %416 : vector<1x256xf32> to vector<32x256xf32>
    %420 = arith.mulf %419, %418 : vector<32x256xf32>
    %421 = arith.addf %415, %420 : vector<32x256xf32>
    %422 = vector.extract_strided_slice %392 {offsets = [5, 0], sizes = [1, 256], strides = [1, 1]} : vector<8x256xf32> to vector<1x256xf32>
    %c5_87 = arith.constant 5 : index
    %c0_88 = arith.constant 0 : index
    %c0_89 = arith.constant 0 : index
    %423 = vector.load %arg10[%c5_87, %c0_88, %c0_89] : memref<8x32x256xf32, #tpu.memory_space<vmem>>, vector<1x32x256xf32>
    %424 = vector.shape_cast %423 : vector<1x32x256xf32> to vector<32x256xf32>
    %425 = vector.broadcast %422 : vector<1x256xf32> to vector<32x256xf32>
    %426 = arith.mulf %425, %424 : vector<32x256xf32>
    %427 = arith.addf %421, %426 : vector<32x256xf32>
    %428 = vector.extract_strided_slice %392 {offsets = [6, 0], sizes = [1, 256], strides = [1, 1]} : vector<8x256xf32> to vector<1x256xf32>
    %c6_90 = arith.constant 6 : index
    %c0_91 = arith.constant 0 : index
    %c0_92 = arith.constant 0 : index
    %429 = vector.load %arg10[%c6_90, %c0_91, %c0_92] : memref<8x32x256xf32, #tpu.memory_space<vmem>>, vector<1x32x256xf32>
    %430 = vector.shape_cast %429 : vector<1x32x256xf32> to vector<32x256xf32>
    %431 = vector.broadcast %428 : vector<1x256xf32> to vector<32x256xf32>
    %432 = arith.mulf %431, %430 : vector<32x256xf32>
    %433 = arith.addf %427, %432 : vector<32x256xf32>
    %434 = vector.extract_strided_slice %392 {offsets = [7, 0], sizes = [1, 256], strides = [1, 1]} : vector<8x256xf32> to vector<1x256xf32>
    %c7_93 = arith.constant 7 : index
    %c0_94 = arith.constant 0 : index
    %c0_95 = arith.constant 0 : index
    %435 = vector.load %arg10[%c7_93, %c0_94, %c0_95] : memref<8x32x256xf32, #tpu.memory_space<vmem>>, vector<1x32x256xf32>
    %436 = vector.shape_cast %435 : vector<1x32x256xf32> to vector<32x256xf32>
    %437 = vector.broadcast %434 : vector<1x256xf32> to vector<32x256xf32>
    %438 = arith.mulf %437, %436 : vector<32x256xf32>
    %439 = arith.addf %433, %438 : vector<32x256xf32>
    %440 = arith.truncf %439 : vector<32x256xf32> to vector<32x256xbf16>
    %c0_96 = arith.constant 0 : index
    %c0_97 = arith.constant 0 : index
    %441 = vector.load %arg11[%c0_96, %c0_97] : memref<256x256xbf16, #tpu.memory_space<vmem>>, vector<32x256xbf16>
    tpu.vector_store %arg11[%c0_96, %c0_97], %440 {strides = array<i32>} : memref<256x256xbf16, #tpu.memory_space<vmem>>, vector<32x256xbf16>,
    %c0_98 = arith.constant 0 : index
    %c1_99 = arith.constant 1 : index
    %c0_100 = arith.constant 0 : index
    %c0_101 = arith.constant 0 : index
    %442 = vector.load %arg2[%c0_98, %c1_99, %c0_100, %c0_101] : memref<1x8x8x256xbf16, #tpu.memory_space<vmem>>, vector<1x1x8x256xbf16>
    %443 = vector.shape_cast %442 : vector<1x1x8x256xbf16> to vector<8x256xbf16>
    %444 = arith.extf %443 : vector<8x256xbf16> to vector<8x256xf32>
    %445 = arith.mulf %444, %209 : vector<8x256xf32>
    %446 = vector.extract_strided_slice %445 {offsets = [0, 0], sizes = [1, 256], strides = [1, 1]} : vector<8x256xf32> to vector<1x256xf32>
    %c0_102 = arith.constant 0 : index
    %c0_103 = arith.constant 0 : index
    %c0_104 = arith.constant 0 : index
    %447 = vector.load %arg10[%c0_102, %c0_103, %c0_104] : memref<8x32x256xf32, #tpu.memory_space<vmem>>, vector<1x32x256xf32>
    %448 = vector.shape_cast %447 : vector<1x32x256xf32> to vector<32x256xf32>
    %449 = vector.broadcast %446 : vector<1x256xf32> to vector<32x256xf32>
    %450 = arith.mulf %449, %448 : vector<32x256xf32>
    %451 = vector.extract_strided_slice %445 {offsets = [1, 0], sizes = [1, 256], strides = [1, 1]} : vector<8x256xf32> to vector<1x256xf32>
    %c1_105 = arith.constant 1 : index
    %c0_106 = arith.constant 0 : index
    %c0_107 = arith.constant 0 : index
    %452 = vector.load %arg10[%c1_105, %c0_106, %c0_107] : memref<8x32x256xf32, #tpu.memory_space<vmem>>, vector<1x32x256xf32>
    %453 = vector.shape_cast %452 : vector<1x32x256xf32> to vector<32x256xf32>
    %454 = vector.broadcast %451 : vector<1x256xf32> to vector<32x256xf32>
    %455 = arith.mulf %454, %453 : vector<32x256xf32>
    %456 = arith.addf %450, %455 : vector<32x256xf32>
    %457 = vector.extract_strided_slice %445 {offsets = [2, 0], sizes = [1, 256], strides = [1, 1]} : vector<8x256xf32> to vector<1x256xf32>
    %c2_108 = arith.constant 2 : index
    %c0_109 = arith.constant 0 : index
    %c0_110 = arith.constant 0 : index
    %458 = vector.load %arg10[%c2_108, %c0_109, %c0_110] : memref<8x32x256xf32, #tpu.memory_space<vmem>>, vector<1x32x256xf32>
    %459 = vector.shape_cast %458 : vector<1x32x256xf32> to vector<32x256xf32>
    %460 = vector.broadcast %457 : vector<1x256xf32> to vector<32x256xf32>
    %461 = arith.mulf %460, %459 : vector<32x256xf32>
    %462 = arith.addf %456, %461 : vector<32x256xf32>
    %463 = vector.extract_strided_slice %445 {offsets = [3, 0], sizes = [1, 256], strides = [1, 1]} : vector<8x256xf32> to vector<1x256xf32>
    %c3_111 = arith.constant 3 : index
    %c0_112 = arith.constant 0 : index
    %c0_113 = arith.constant 0 : index
    %464 = vector.load %arg10[%c3_111, %c0_112, %c0_113] : memref<8x32x256xf32, #tpu.memory_space<vmem>>, vector<1x32x256xf32>
    %465 = vector.shape_cast %464 : vector<1x32x256xf32> to vector<32x256xf32>
    %466 = vector.broadcast %463 : vector<1x256xf32> to vector<32x256xf32>
    %467 = arith.mulf %466, %465 : vector<32x256xf32>
    %468 = arith.addf %462, %467 : vector<32x256xf32>
    %469 = vector.extract_strided_slice %445 {offsets = [4, 0], sizes = [1, 256], strides = [1, 1]} : vector<8x256xf32> to vector<1x256xf32>
    %c4_114 = arith.constant 4 : index
    %c0_115 = arith.constant 0 : index
    %c0_116 = arith.constant 0 : index
    %470 = vector.load %arg10[%c4_114, %c0_115, %c0_116] : memref<8x32x256xf32, #tpu.memory_space<vmem>>, vector<1x32x256xf32>
    %471 = vector.shape_cast %470 : vector<1x32x256xf32> to vector<32x256xf32>
    %472 = vector.broadcast %469 : vector<1x256xf32> to vector<32x256xf32>
    %473 = arith.mulf %472, %471 : vector<32x256xf32>
    %474 = arith.addf %468, %473 : vector<32x256xf32>
    %475 = vector.extract_strided_slice %445 {offsets = [5, 0], sizes = [1, 256], strides = [1, 1]} : vector<8x256xf32> to vector<1x256xf32>
    %c5_117 = arith.constant 5 : index
    %c0_118 = arith.constant 0 : index
    %c0_119 = arith.constant 0 : index
    %476 = vector.load %arg10[%c5_117, %c0_118, %c0_119] : memref<8x32x256xf32, #tpu.memory_space<vmem>>, vector<1x32x256xf32>
    %477 = vector.shape_cast %476 : vector<1x32x256xf32> to vector<32x256xf32>
    %478 = vector.broadcast %475 : vector<1x256xf32> to vector<32x256xf32>
    %479 = arith.mulf %478, %477 : vector<32x256xf32>
    %480 = arith.addf %474, %479 : vector<32x256xf32>
    %481 = vector.extract_strided_slice %445 {offsets = [6, 0], sizes = [1, 256], strides = [1, 1]} : vector<8x256xf32> to vector<1x256xf32>
    %c6_120 = arith.constant 6 : index
    %c0_121 = arith.constant 0 : index
    %c0_122 = arith.constant 0 : index
    %482 = vector.load %arg10[%c6_120, %c0_121, %c0_122] : memref<8x32x256xf32, #tpu.memory_space<vmem>>, vector<1x32x256xf32>
    %483 = vector.shape_cast %482 : vector<1x32x256xf32> to vector<32x256xf32>
    %484 = vector.broadcast %481 : vector<1x256xf32> to vector<32x256xf32>
    %485 = arith.mulf %484, %483 : vector<32x256xf32>
    %486 = arith.addf %480, %485 : vector<32x256xf32>
    %487 = vector.extract_strided_slice %445 {offsets = [7, 0], sizes = [1, 256], strides = [1, 1]} : vector<8x256xf32> to vector<1x256xf32>
    %c7_123 = arith.constant 7 : index
    %c0_124 = arith.constant 0 : index
    %c0_125 = arith.constant 0 : index
    %488 = vector.load %arg10[%c7_123, %c0_124, %c0_125] : memref<8x32x256xf32, #tpu.memory_space<vmem>>, vector<1x32x256xf32>
    %489 = vector.shape_cast %488 : vector<1x32x256xf32> to vector<32x256xf32>
    %490 = vector.broadcast %487 : vector<1x256xf32> to vector<32x256xf32>
    %491 = arith.mulf %490, %489 : vector<32x256xf32>
    %492 = arith.addf %486, %491 : vector<32x256xf32>
    %493 = arith.truncf %492 : vector<32x256xf32> to vector<32x256xbf16>
    %c32_126 = arith.constant 32 : index
    %c0_127 = arith.constant 0 : index
    %494 = vector.load %arg11[%c32_126, %c0_127] : memref<256x256xbf16, #tpu.memory_space<vmem>>, vector<32x256xbf16>
    tpu.vector_store %arg11[%c32_126, %c0_127], %493 {strides = array<i32>} : memref<256x256xbf16, #tpu.memory_space<vmem>>, vector<32x256xbf16>,
    %c0_128 = arith.constant 0 : index
    %c2_129 = arith.constant 2 : index
    %c0_130 = arith.constant 0 : index
    %c0_131 = arith.constant 0 : index
    %495 = vector.load %arg2[%c0_128, %c2_129, %c0_130, %c0_131] : memref<1x8x8x256xbf16, #tpu.memory_space<vmem>>, vector<1x1x8x256xbf16>
    %496 = vector.shape_cast %495 : vector<1x1x8x256xbf16> to vector<8x256xbf16>
    %497 = arith.extf %496 : vector<8x256xbf16> to vector<8x256xf32>
    %498 = arith.mulf %497, %209 : vector<8x256xf32>
    %499 = vector.extract_strided_slice %498 {offsets = [0, 0], sizes = [1, 256], strides = [1, 1]} : vector<8x256xf32> to vector<1x256xf32>
    %c0_132 = arith.constant 0 : index
    %c0_133 = arith.constant 0 : index
    %c0_134 = arith.constant 0 : index
    %500 = vector.load %arg10[%c0_132, %c0_133, %c0_134] : memref<8x32x256xf32, #tpu.memory_space<vmem>>, vector<1x32x256xf32>
    %501 = vector.shape_cast %500 : vector<1x32x256xf32> to vector<32x256xf32>
    %502 = vector.broadcast %499 : vector<1x256xf32> to vector<32x256xf32>
    %503 = arith.mulf %502, %501 : vector<32x256xf32>
    %504 = vector.extract_strided_slice %498 {offsets = [1, 0], sizes = [1, 256], strides = [1, 1]} : vector<8x256xf32> to vector<1x256xf32>
    %c1_135 = arith.constant 1 : index
    %c0_136 = arith.constant 0 : index
    %c0_137 = arith.constant 0 : index
    %505 = vector.load %arg10[%c1_135, %c0_136, %c0_137] : memref<8x32x256xf32, #tpu.memory_space<vmem>>, vector<1x32x256xf32>
    %506 = vector.shape_cast %505 : vector<1x32x256xf32> to vector<32x256xf32>
    %507 = vector.broadcast %504 : vector<1x256xf32> to vector<32x256xf32>
    %508 = arith.mulf %507, %506 : vector<32x256xf32>
    %509 = arith.addf %503, %508 : vector<32x256xf32>
    %510 = vector.extract_strided_slice %498 {offsets = [2, 0], sizes = [1, 256], strides = [1, 1]} : vector<8x256xf32> to vector<1x256xf32>
    %c2_138 = arith.constant 2 : index
    %c0_139 = arith.constant 0 : index
    %c0_140 = arith.constant 0 : index
    %511 = vector.load %arg10[%c2_138, %c0_139, %c0_140] : memref<8x32x256xf32, #tpu.memory_space<vmem>>, vector<1x32x256xf32>
    %512 = vector.shape_cast %511 : vector<1x32x256xf32> to vector<32x256xf32>
    %513 = vector.broadcast %510 : vector<1x256xf32> to vector<32x256xf32>
    %514 = arith.mulf %513, %512 : vector<32x256xf32>
    %515 = arith.addf %509, %514 : vector<32x256xf32>
    %516 = vector.extract_strided_slice %498 {offsets = [3, 0], sizes = [1, 256], strides = [1, 1]} : vector<8x256xf32> to vector<1x256xf32>
    %c3_141 = arith.constant 3 : index
    %c0_142 = arith.constant 0 : index
    %c0_143 = arith.constant 0 : index
    %517 = vector.load %arg10[%c3_141, %c0_142, %c0_143] : memref<8x32x256xf32, #tpu.memory_space<vmem>>, vector<1x32x256xf32>
    %518 = vector.shape_cast %517 : vector<1x32x256xf32> to vector<32x256xf32>
    %519 = vector.broadcast %516 : vector<1x256xf32> to vector<32x256xf32>
    %520 = arith.mulf %519, %518 : vector<32x256xf32>
    %521 = arith.addf %515, %520 : vector<32x256xf32>
    %522 = vector.extract_strided_slice %498 {offsets = [4, 0], sizes = [1, 256], strides = [1, 1]} : vector<8x256xf32> to vector<1x256xf32>
    %c4_144 = arith.constant 4 : index
    %c0_145 = arith.constant 0 : index
    %c0_146 = arith.constant 0 : index
    %523 = vector.load %arg10[%c4_144, %c0_145, %c0_146] : memref<8x32x256xf32, #tpu.memory_space<vmem>>, vector<1x32x256xf32>
    %524 = vector.shape_cast %523 : vector<1x32x256xf32> to vector<32x256xf32>
    %525 = vector.broadcast %522 : vector<1x256xf32> to vector<32x256xf32>
    %526 = arith.mulf %525, %524 : vector<32x256xf32>
    %527 = arith.addf %521, %526 : vector<32x256xf32>
    %528 = vector.extract_strided_slice %498 {offsets = [5, 0], sizes = [1, 256], strides = [1, 1]} : vector<8x256xf32> to vector<1x256xf32>
    %c5_147 = arith.constant 5 : index
    %c0_148 = arith.constant 0 : index
    %c0_149 = arith.constant 0 : index
    %529 = vector.load %arg10[%c5_147, %c0_148, %c0_149] : memref<8x32x256xf32, #tpu.memory_space<vmem>>, vector<1x32x256xf32>
    %530 = vector.shape_cast %529 : vector<1x32x256xf32> to vector<32x256xf32>
    %531 = vector.broadcast %528 : vector<1x256xf32> to vector<32x256xf32>
    %532 = arith.mulf %531, %530 : vector<32x256xf32>
    %533 = arith.addf %527, %532 : vector<32x256xf32>
    %534 = vector.extract_strided_slice %498 {offsets = [6, 0], sizes = [1, 256], strides = [1, 1]} : vector<8x256xf32> to vector<1x256xf32>
    %c6_150 = arith.constant 6 : index
    %c0_151 = arith.constant 0 : index
    %c0_152 = arith.constant 0 : index
    %535 = vector.load %arg10[%c6_150, %c0_151, %c0_152] : memref<8x32x256xf32, #tpu.memory_space<vmem>>, vector<1x32x256xf32>
    %536 = vector.shape_cast %535 : vector<1x32x256xf32> to vector<32x256xf32>
    %537 = vector.broadcast %534 : vector<1x256xf32> to vector<32x256xf32>
    %538 = arith.mulf %537, %536 : vector<32x256xf32>
    %539 = arith.addf %533, %538 : vector<32x256xf32>
    %540 = vector.extract_strided_slice %498 {offsets = [7, 0], sizes = [1, 256], strides = [1, 1]} : vector<8x256xf32> to vector<1x256xf32>
    %c7_153 = arith.constant 7 : index
    %c0_154 = arith.constant 0 : index
    %c0_155 = arith.constant 0 : index
    %541 = vector.load %arg10[%c7_153, %c0_154, %c0_155] : memref<8x32x256xf32, #tpu.memory_space<vmem>>, vector<1x32x256xf32>
    %542 = vector.shape_cast %541 : vector<1x32x256xf32> to vector<32x256xf32>
    %543 = vector.broadcast %540 : vector<1x256xf32> to vector<32x256xf32>
    %544 = arith.mulf %543, %542 : vector<32x256xf32>
    %545 = arith.addf %539, %544 : vector<32x256xf32>
    %546 = arith.truncf %545 : vector<32x256xf32> to vector<32x256xbf16>
    %c64 = arith.constant 64 : index
    %c0_156 = arith.constant 0 : index
    %547 = vector.load %arg11[%c64, %c0_156] : memref<256x256xbf16, #tpu.memory_space<vmem>>, vector<32x256xbf16>
    tpu.vector_store %arg11[%c64, %c0_156], %546 {strides = array<i32>} : memref<256x256xbf16, #tpu.memory_space<vmem>>, vector<32x256xbf16>,
    %c0_157 = arith.constant 0 : index
    %c3_158 = arith.constant 3 : index
    %c0_159 = arith.constant 0 : index
    %c0_160 = arith.constant 0 : index
    %548 = vector.load %arg2[%c0_157, %c3_158, %c0_159, %c0_160] : memref<1x8x8x256xbf16, #tpu.memory_space<vmem>>, vector<1x1x8x256xbf16>
    %549 = vector.shape_cast %548 : vector<1x1x8x256xbf16> to vector<8x256xbf16>
    %550 = arith.extf %549 : vector<8x256xbf16> to vector<8x256xf32>
    %551 = arith.mulf %550, %209 : vector<8x256xf32>
    %552 = vector.extract_strided_slice %551 {offsets = [0, 0], sizes = [1, 256], strides = [1, 1]} : vector<8x256xf32> to vector<1x256xf32>
    %c0_161 = arith.constant 0 : index
    %c0_162 = arith.constant 0 : index
    %c0_163 = arith.constant 0 : index
    %553 = vector.load %arg10[%c0_161, %c0_162, %c0_163] : memref<8x32x256xf32, #tpu.memory_space<vmem>>, vector<1x32x256xf32>
    %554 = vector.shape_cast %553 : vector<1x32x256xf32> to vector<32x256xf32>
    %555 = vector.broadcast %552 : vector<1x256xf32> to vector<32x256xf32>
    %556 = arith.mulf %555, %554 : vector<32x256xf32>
    %557 = vector.extract_strided_slice %551 {offsets = [1, 0], sizes = [1, 256], strides = [1, 1]} : vector<8x256xf32> to vector<1x256xf32>
    %c1_164 = arith.constant 1 : index
    %c0_165 = arith.constant 0 : index
    %c0_166 = arith.constant 0 : index
    %558 = vector.load %arg10[%c1_164, %c0_165, %c0_166] : memref<8x32x256xf32, #tpu.memory_space<vmem>>, vector<1x32x256xf32>
    %559 = vector.shape_cast %558 : vector<1x32x256xf32> to vector<32x256xf32>
    %560 = vector.broadcast %557 : vector<1x256xf32> to vector<32x256xf32>
    %561 = arith.mulf %560, %559 : vector<32x256xf32>
    %562 = arith.addf %556, %561 : vector<32x256xf32>
    %563 = vector.extract_strided_slice %551 {offsets = [2, 0], sizes = [1, 256], strides = [1, 1]} : vector<8x256xf32> to vector<1x256xf32>
    %c2_167 = arith.constant 2 : index
    %c0_168 = arith.constant 0 : index
    %c0_169 = arith.constant 0 : index
    %564 = vector.load %arg10[%c2_167, %c0_168, %c0_169] : memref<8x32x256xf32, #tpu.memory_space<vmem>>, vector<1x32x256xf32>
    %565 = vector.shape_cast %564 : vector<1x32x256xf32> to vector<32x256xf32>
    %566 = vector.broadcast %563 : vector<1x256xf32> to vector<32x256xf32>
    %567 = arith.mulf %566, %565 : vector<32x256xf32>
    %568 = arith.addf %562, %567 : vector<32x256xf32>
    %569 = vector.extract_strided_slice %551 {offsets = [3, 0], sizes = [1, 256], strides = [1, 1]} : vector<8x256xf32> to vector<1x256xf32>
    %c3_170 = arith.constant 3 : index
    %c0_171 = arith.constant 0 : index
    %c0_172 = arith.constant 0 : index
    %570 = vector.load %arg10[%c3_170, %c0_171, %c0_172] : memref<8x32x256xf32, #tpu.memory_space<vmem>>, vector<1x32x256xf32>
    %571 = vector.shape_cast %570 : vector<1x32x256xf32> to vector<32x256xf32>
    %572 = vector.broadcast %569 : vector<1x256xf32> to vector<32x256xf32>
    %573 = arith.mulf %572, %571 : vector<32x256xf32>
    %574 = arith.addf %568, %573 : vector<32x256xf32>
    %575 = vector.extract_strided_slice %551 {offsets = [4, 0], sizes = [1, 256], strides = [1, 1]} : vector<8x256xf32> to vector<1x256xf32>
    %c4_173 = arith.constant 4 : index
    %c0_174 = arith.constant 0 : index
    %c0_175 = arith.constant 0 : index
    %576 = vector.load %arg10[%c4_173, %c0_174, %c0_175] : memref<8x32x256xf32, #tpu.memory_space<vmem>>, vector<1x32x256xf32>
    %577 = vector.shape_cast %576 : vector<1x32x256xf32> to vector<32x256xf32>
    %578 = vector.broadcast %575 : vector<1x256xf32> to vector<32x256xf32>
    %579 = arith.mulf %578, %577 : vector<32x256xf32>
    %580 = arith.addf %574, %579 : vector<32x256xf32>
    %581 = vector.extract_strided_slice %551 {offsets = [5, 0], sizes = [1, 256], strides = [1, 1]} : vector<8x256xf32> to vector<1x256xf32>
    %c5_176 = arith.constant 5 : index
    %c0_177 = arith.constant 0 : index
    %c0_178 = arith.constant 0 : index
    %582 = vector.load %arg10[%c5_176, %c0_177, %c0_178] : memref<8x32x256xf32, #tpu.memory_space<vmem>>, vector<1x32x256xf32>
    %583 = vector.shape_cast %582 : vector<1x32x256xf32> to vector<32x256xf32>
    %584 = vector.broadcast %581 : vector<1x256xf32> to vector<32x256xf32>
    %585 = arith.mulf %584, %583 : vector<32x256xf32>
    %586 = arith.addf %580, %585 : vector<32x256xf32>
    %587 = vector.extract_strided_slice %551 {offsets = [6, 0], sizes = [1, 256], strides = [1, 1]} : vector<8x256xf32> to vector<1x256xf32>
    %c6_179 = arith.constant 6 : index
    %c0_180 = arith.constant 0 : index
    %c0_181 = arith.constant 0 : index
    %588 = vector.load %arg10[%c6_179, %c0_180, %c0_181] : memref<8x32x256xf32, #tpu.memory_space<vmem>>, vector<1x32x256xf32>
    %589 = vector.shape_cast %588 : vector<1x32x256xf32> to vector<32x256xf32>
    %590 = vector.broadcast %587 : vector<1x256xf32> to vector<32x256xf32>
    %591 = arith.mulf %590, %589 : vector<32x256xf32>
    %592 = arith.addf %586, %591 : vector<32x256xf32>
    %593 = vector.extract_strided_slice %551 {offsets = [7, 0], sizes = [1, 256], strides = [1, 1]} : vector<8x256xf32> to vector<1x256xf32>
    %c7_182 = arith.constant 7 : index
    %c0_183 = arith.constant 0 : index
    %c0_184 = arith.constant 0 : index
    %594 = vector.load %arg10[%c7_182, %c0_183, %c0_184] : memref<8x32x256xf32, #tpu.memory_space<vmem>>, vector<1x32x256xf32>
    %595 = vector.shape_cast %594 : vector<1x32x256xf32> to vector<32x256xf32>
    %596 = vector.broadcast %593 : vector<1x256xf32> to vector<32x256xf32>
    %597 = arith.mulf %596, %595 : vector<32x256xf32>
    %598 = arith.addf %592, %597 : vector<32x256xf32>
    %599 = arith.truncf %598 : vector<32x256xf32> to vector<32x256xbf16>
    %c96 = arith.constant 96 : index
    %c0_185 = arith.constant 0 : index
    %600 = vector.load %arg11[%c96, %c0_185] : memref<256x256xbf16, #tpu.memory_space<vmem>>, vector<32x256xbf16>
    tpu.vector_store %arg11[%c96, %c0_185], %599 {strides = array<i32>} : memref<256x256xbf16, #tpu.memory_space<vmem>>, vector<32x256xbf16>,
    %c0_186 = arith.constant 0 : index
    %c4_187 = arith.constant 4 : index
    %c0_188 = arith.constant 0 : index
    %c0_189 = arith.constant 0 : index
    %601 = vector.load %arg2[%c0_186, %c4_187, %c0_188, %c0_189] : memref<1x8x8x256xbf16, #tpu.memory_space<vmem>>, vector<1x1x8x256xbf16>
    %602 = vector.shape_cast %601 : vector<1x1x8x256xbf16> to vector<8x256xbf16>
    %603 = arith.extf %602 : vector<8x256xbf16> to vector<8x256xf32>
    %604 = arith.mulf %603, %209 : vector<8x256xf32>
    %605 = vector.extract_strided_slice %604 {offsets = [0, 0], sizes = [1, 256], strides = [1, 1]} : vector<8x256xf32> to vector<1x256xf32>
    %c0_190 = arith.constant 0 : index
    %c0_191 = arith.constant 0 : index
    %c0_192 = arith.constant 0 : index
    %606 = vector.load %arg10[%c0_190, %c0_191, %c0_192] : memref<8x32x256xf32, #tpu.memory_space<vmem>>, vector<1x32x256xf32>
    %607 = vector.shape_cast %606 : vector<1x32x256xf32> to vector<32x256xf32>
    %608 = vector.broadcast %605 : vector<1x256xf32> to vector<32x256xf32>
    %609 = arith.mulf %608, %607 : vector<32x256xf32>
    %610 = vector.extract_strided_slice %604 {offsets = [1, 0], sizes = [1, 256], strides = [1, 1]} : vector<8x256xf32> to vector<1x256xf32>
    %c1_193 = arith.constant 1 : index
    %c0_194 = arith.constant 0 : index
    %c0_195 = arith.constant 0 : index
    %611 = vector.load %arg10[%c1_193, %c0_194, %c0_195] : memref<8x32x256xf32, #tpu.memory_space<vmem>>, vector<1x32x256xf32>
    %612 = vector.shape_cast %611 : vector<1x32x256xf32> to vector<32x256xf32>
    %613 = vector.broadcast %610 : vector<1x256xf32> to vector<32x256xf32>
    %614 = arith.mulf %613, %612 : vector<32x256xf32>
    %615 = arith.addf %609, %614 : vector<32x256xf32>
    %616 = vector.extract_strided_slice %604 {offsets = [2, 0], sizes = [1, 256], strides = [1, 1]} : vector<8x256xf32> to vector<1x256xf32>
    %c2_196 = arith.constant 2 : index
    %c0_197 = arith.constant 0 : index
    %c0_198 = arith.constant 0 : index
    %617 = vector.load %arg10[%c2_196, %c0_197, %c0_198] : memref<8x32x256xf32, #tpu.memory_space<vmem>>, vector<1x32x256xf32>
    %618 = vector.shape_cast %617 : vector<1x32x256xf32> to vector<32x256xf32>
    %619 = vector.broadcast %616 : vector<1x256xf32> to vector<32x256xf32>
    %620 = arith.mulf %619, %618 : vector<32x256xf32>
    %621 = arith.addf %615, %620 : vector<32x256xf32>
    %622 = vector.extract_strided_slice %604 {offsets = [3, 0], sizes = [1, 256], strides = [1, 1]} : vector<8x256xf32> to vector<1x256xf32>
    %c3_199 = arith.constant 3 : index
    %c0_200 = arith.constant 0 : index
    %c0_201 = arith.constant 0 : index
    %623 = vector.load %arg10[%c3_199, %c0_200, %c0_201] : memref<8x32x256xf32, #tpu.memory_space<vmem>>, vector<1x32x256xf32>
    %624 = vector.shape_cast %623 : vector<1x32x256xf32> to vector<32x256xf32>
    %625 = vector.broadcast %622 : vector<1x256xf32> to vector<32x256xf32>
    %626 = arith.mulf %625, %624 : vector<32x256xf32>
    %627 = arith.addf %621, %626 : vector<32x256xf32>
    %628 = vector.extract_strided_slice %604 {offsets = [4, 0], sizes = [1, 256], strides = [1, 1]} : vector<8x256xf32> to vector<1x256xf32>
    %c4_202 = arith.constant 4 : index
    %c0_203 = arith.constant 0 : index
    %c0_204 = arith.constant 0 : index
    %629 = vector.load %arg10[%c4_202, %c0_203, %c0_204] : memref<8x32x256xf32, #tpu.memory_space<vmem>>, vector<1x32x256xf32>
    %630 = vector.shape_cast %629 : vector<1x32x256xf32> to vector<32x256xf32>
    %631 = vector.broadcast %628 : vector<1x256xf32> to vector<32x256xf32>
    %632 = arith.mulf %631, %630 : vector<32x256xf32>
    %633 = arith.addf %627, %632 : vector<32x256xf32>
    %634 = vector.extract_strided_slice %604 {offsets = [5, 0], sizes = [1, 256], strides = [1, 1]} : vector<8x256xf32> to vector<1x256xf32>
    %c5_205 = arith.constant 5 : index
    %c0_206 = arith.constant 0 : index
    %c0_207 = arith.constant 0 : index
    %635 = vector.load %arg10[%c5_205, %c0_206, %c0_207] : memref<8x32x256xf32, #tpu.memory_space<vmem>>, vector<1x32x256xf32>
    %636 = vector.shape_cast %635 : vector<1x32x256xf32> to vector<32x256xf32>
    %637 = vector.broadcast %634 : vector<1x256xf32> to vector<32x256xf32>
    %638 = arith.mulf %637, %636 : vector<32x256xf32>
    %639 = arith.addf %633, %638 : vector<32x256xf32>
    %640 = vector.extract_strided_slice %604 {offsets = [6, 0], sizes = [1, 256], strides = [1, 1]} : vector<8x256xf32> to vector<1x256xf32>
    %c6_208 = arith.constant 6 : index
    %c0_209 = arith.constant 0 : index
    %c0_210 = arith.constant 0 : index
    %641 = vector.load %arg10[%c6_208, %c0_209, %c0_210] : memref<8x32x256xf32, #tpu.memory_space<vmem>>, vector<1x32x256xf32>
    %642 = vector.shape_cast %641 : vector<1x32x256xf32> to vector<32x256xf32>
    %643 = vector.broadcast %640 : vector<1x256xf32> to vector<32x256xf32>
    %644 = arith.mulf %643, %642 : vector<32x256xf32>
    %645 = arith.addf %639, %644 : vector<32x256xf32>
    %646 = vector.extract_strided_slice %604 {offsets = [7, 0], sizes = [1, 256], strides = [1, 1]} : vector<8x256xf32> to vector<1x256xf32>
    %c7_211 = arith.constant 7 : index
    %c0_212 = arith.constant 0 : index
    %c0_213 = arith.constant 0 : index
    %647 = vector.load %arg10[%c7_211, %c0_212, %c0_213] : memref<8x32x256xf32, #tpu.memory_space<vmem>>, vector<1x32x256xf32>
    %648 = vector.shape_cast %647 : vector<1x32x256xf32> to vector<32x256xf32>
    %649 = vector.broadcast %646 : vector<1x256xf32> to vector<32x256xf32>
    %650 = arith.mulf %649, %648 : vector<32x256xf32>
    %651 = arith.addf %645, %650 : vector<32x256xf32>
    %652 = arith.truncf %651 : vector<32x256xf32> to vector<32x256xbf16>
    %c128 = arith.constant 128 : index
    %c0_214 = arith.constant 0 : index
    %653 = vector.load %arg11[%c128, %c0_214] : memref<256x256xbf16, #tpu.memory_space<vmem>>, vector<32x256xbf16>
    tpu.vector_store %arg11[%c128, %c0_214], %652 {strides = array<i32>} : memref<256x256xbf16, #tpu.memory_space<vmem>>, vector<32x256xbf16>,
    %c0_215 = arith.constant 0 : index
    %c5_216 = arith.constant 5 : index
    %c0_217 = arith.constant 0 : index
    %c0_218 = arith.constant 0 : index
    %654 = vector.load %arg2[%c0_215, %c5_216, %c0_217, %c0_218] : memref<1x8x8x256xbf16, #tpu.memory_space<vmem>>, vector<1x1x8x256xbf16>
    %655 = vector.shape_cast %654 : vector<1x1x8x256xbf16> to vector<8x256xbf16>
    %656 = arith.extf %655 : vector<8x256xbf16> to vector<8x256xf32>
    %657 = arith.mulf %656, %209 : vector<8x256xf32>
    %658 = vector.extract_strided_slice %657 {offsets = [0, 0], sizes = [1, 256], strides = [1, 1]} : vector<8x256xf32> to vector<1x256xf32>
    %c0_219 = arith.constant 0 : index
    %c0_220 = arith.constant 0 : index
    %c0_221 = arith.constant 0 : index
    %659 = vector.load %arg10[%c0_219, %c0_220, %c0_221] : memref<8x32x256xf32, #tpu.memory_space<vmem>>, vector<1x32x256xf32>
    %660 = vector.shape_cast %659 : vector<1x32x256xf32> to vector<32x256xf32>
    %661 = vector.broadcast %658 : vector<1x256xf32> to vector<32x256xf32>
    %662 = arith.mulf %661, %660 : vector<32x256xf32>
    %663 = vector.extract_strided_slice %657 {offsets = [1, 0], sizes = [1, 256], strides = [1, 1]} : vector<8x256xf32> to vector<1x256xf32>
    %c1_222 = arith.constant 1 : index
    %c0_223 = arith.constant 0 : index
    %c0_224 = arith.constant 0 : index
    %664 = vector.load %arg10[%c1_222, %c0_223, %c0_224] : memref<8x32x256xf32, #tpu.memory_space<vmem>>, vector<1x32x256xf32>
    %665 = vector.shape_cast %664 : vector<1x32x256xf32> to vector<32x256xf32>
    %666 = vector.broadcast %663 : vector<1x256xf32> to vector<32x256xf32>
    %667 = arith.mulf %666, %665 : vector<32x256xf32>
    %668 = arith.addf %662, %667 : vector<32x256xf32>
    %669 = vector.extract_strided_slice %657 {offsets = [2, 0], sizes = [1, 256], strides = [1, 1]} : vector<8x256xf32> to vector<1x256xf32>
    %c2_225 = arith.constant 2 : index
    %c0_226 = arith.constant 0 : index
    %c0_227 = arith.constant 0 : index
    %670 = vector.load %arg10[%c2_225, %c0_226, %c0_227] : memref<8x32x256xf32, #tpu.memory_space<vmem>>, vector<1x32x256xf32>
    %671 = vector.shape_cast %670 : vector<1x32x256xf32> to vector<32x256xf32>
    %672 = vector.broadcast %669 : vector<1x256xf32> to vector<32x256xf32>
    %673 = arith.mulf %672, %671 : vector<32x256xf32>
    %674 = arith.addf %668, %673 : vector<32x256xf32>
    %675 = vector.extract_strided_slice %657 {offsets = [3, 0], sizes = [1, 256], strides = [1, 1]} : vector<8x256xf32> to vector<1x256xf32>
    %c3_228 = arith.constant 3 : index
    %c0_229 = arith.constant 0 : index
    %c0_230 = arith.constant 0 : index
    %676 = vector.load %arg10[%c3_228, %c0_229, %c0_230] : memref<8x32x256xf32, #tpu.memory_space<vmem>>, vector<1x32x256xf32>
    %677 = vector.shape_cast %676 : vector<1x32x256xf32> to vector<32x256xf32>
    %678 = vector.broadcast %675 : vector<1x256xf32> to vector<32x256xf32>
    %679 = arith.mulf %678, %677 : vector<32x256xf32>
    %680 = arith.addf %674, %679 : vector<32x256xf32>
    %681 = vector.extract_strided_slice %657 {offsets = [4, 0], sizes = [1, 256], strides = [1, 1]} : vector<8x256xf32> to vector<1x256xf32>
    %c4_231 = arith.constant 4 : index
    %c0_232 = arith.constant 0 : index
    %c0_233 = arith.constant 0 : index
    %682 = vector.load %arg10[%c4_231, %c0_232, %c0_233] : memref<8x32x256xf32, #tpu.memory_space<vmem>>, vector<1x32x256xf32>
    %683 = vector.shape_cast %682 : vector<1x32x256xf32> to vector<32x256xf32>
    %684 = vector.broadcast %681 : vector<1x256xf32> to vector<32x256xf32>
    %685 = arith.mulf %684, %683 : vector<32x256xf32>
    %686 = arith.addf %680, %685 : vector<32x256xf32>
    %687 = vector.extract_strided_slice %657 {offsets = [5, 0], sizes = [1, 256], strides = [1, 1]} : vector<8x256xf32> to vector<1x256xf32>
    %c5_234 = arith.constant 5 : index
    %c0_235 = arith.constant 0 : index
    %c0_236 = arith.constant 0 : index
    %688 = vector.load %arg10[%c5_234, %c0_235, %c0_236] : memref<8x32x256xf32, #tpu.memory_space<vmem>>, vector<1x32x256xf32>
    %689 = vector.shape_cast %688 : vector<1x32x256xf32> to vector<32x256xf32>
    %690 = vector.broadcast %687 : vector<1x256xf32> to vector<32x256xf32>
    %691 = arith.mulf %690, %689 : vector<32x256xf32>
    %692 = arith.addf %686, %691 : vector<32x256xf32>
    %693 = vector.extract_strided_slice %657 {offsets = [6, 0], sizes = [1, 256], strides = [1, 1]} : vector<8x256xf32> to vector<1x256xf32>
    %c6_237 = arith.constant 6 : index
    %c0_238 = arith.constant 0 : index
    %c0_239 = arith.constant 0 : index
    %694 = vector.load %arg10[%c6_237, %c0_238, %c0_239] : memref<8x32x256xf32, #tpu.memory_space<vmem>>, vector<1x32x256xf32>
    %695 = vector.shape_cast %694 : vector<1x32x256xf32> to vector<32x256xf32>
    %696 = vector.broadcast %693 : vector<1x256xf32> to vector<32x256xf32>
    %697 = arith.mulf %696, %695 : vector<32x256xf32>
    %698 = arith.addf %692, %697 : vector<32x256xf32>
    %699 = vector.extract_strided_slice %657 {offsets = [7, 0], sizes = [1, 256], strides = [1, 1]} : vector<8x256xf32> to vector<1x256xf32>
    %c7_240 = arith.constant 7 : index
    %c0_241 = arith.constant 0 : index
    %c0_242 = arith.constant 0 : index
    %700 = vector.load %arg10[%c7_240, %c0_241, %c0_242] : memref<8x32x256xf32, #tpu.memory_space<vmem>>, vector<1x32x256xf32>
    %701 = vector.shape_cast %700 : vector<1x32x256xf32> to vector<32x256xf32>
    %702 = vector.broadcast %699 : vector<1x256xf32> to vector<32x256xf32>
    %703 = arith.mulf %702, %701 : vector<32x256xf32>
    %704 = arith.addf %698, %703 : vector<32x256xf32>
    %705 = arith.truncf %704 : vector<32x256xf32> to vector<32x256xbf16>
    %c160 = arith.constant 160 : index
    %c0_243 = arith.constant 0 : index
    %706 = vector.load %arg11[%c160, %c0_243] : memref<256x256xbf16, #tpu.memory_space<vmem>>, vector<32x256xbf16>
    tpu.vector_store %arg11[%c160, %c0_243], %705 {strides = array<i32>} : memref<256x256xbf16, #tpu.memory_space<vmem>>, vector<32x256xbf16>,
    %c0_244 = arith.constant 0 : index
    %c6_245 = arith.constant 6 : index
    %c0_246 = arith.constant 0 : index
    %c0_247 = arith.constant 0 : index
    %707 = vector.load %arg2[%c0_244, %c6_245, %c0_246, %c0_247] : memref<1x8x8x256xbf16, #tpu.memory_space<vmem>>, vector<1x1x8x256xbf16>
    %708 = vector.shape_cast %707 : vector<1x1x8x256xbf16> to vector<8x256xbf16>
    %709 = arith.extf %708 : vector<8x256xbf16> to vector<8x256xf32>
    %710 = arith.mulf %709, %209 : vector<8x256xf32>
    %711 = vector.extract_strided_slice %710 {offsets = [0, 0], sizes = [1, 256], strides = [1, 1]} : vector<8x256xf32> to vector<1x256xf32>
    %c0_248 = arith.constant 0 : index
    %c0_249 = arith.constant 0 : index
    %c0_250 = arith.constant 0 : index
    %712 = vector.load %arg10[%c0_248, %c0_249, %c0_250] : memref<8x32x256xf32, #tpu.memory_space<vmem>>, vector<1x32x256xf32>
    %713 = vector.shape_cast %712 : vector<1x32x256xf32> to vector<32x256xf32>
    %714 = vector.broadcast %711 : vector<1x256xf32> to vector<32x256xf32>
    %715 = arith.mulf %714, %713 : vector<32x256xf32>
    %716 = vector.extract_strided_slice %710 {offsets = [1, 0], sizes = [1, 256], strides = [1, 1]} : vector<8x256xf32> to vector<1x256xf32>
    %c1_251 = arith.constant 1 : index
    %c0_252 = arith.constant 0 : index
    %c0_253 = arith.constant 0 : index
    %717 = vector.load %arg10[%c1_251, %c0_252, %c0_253] : memref<8x32x256xf32, #tpu.memory_space<vmem>>, vector<1x32x256xf32>
    %718 = vector.shape_cast %717 : vector<1x32x256xf32> to vector<32x256xf32>
    %719 = vector.broadcast %716 : vector<1x256xf32> to vector<32x256xf32>
    %720 = arith.mulf %719, %718 : vector<32x256xf32>
    %721 = arith.addf %715, %720 : vector<32x256xf32>
    %722 = vector.extract_strided_slice %710 {offsets = [2, 0], sizes = [1, 256], strides = [1, 1]} : vector<8x256xf32> to vector<1x256xf32>
    %c2_254 = arith.constant 2 : index
    %c0_255 = arith.constant 0 : index
    %c0_256 = arith.constant 0 : index
    %723 = vector.load %arg10[%c2_254, %c0_255, %c0_256] : memref<8x32x256xf32, #tpu.memory_space<vmem>>, vector<1x32x256xf32>
    %724 = vector.shape_cast %723 : vector<1x32x256xf32> to vector<32x256xf32>
    %725 = vector.broadcast %722 : vector<1x256xf32> to vector<32x256xf32>
    %726 = arith.mulf %725, %724 : vector<32x256xf32>
    %727 = arith.addf %721, %726 : vector<32x256xf32>
    %728 = vector.extract_strided_slice %710 {offsets = [3, 0], sizes = [1, 256], strides = [1, 1]} : vector<8x256xf32> to vector<1x256xf32>
    %c3_257 = arith.constant 3 : index
    %c0_258 = arith.constant 0 : index
    %c0_259 = arith.constant 0 : index
    %729 = vector.load %arg10[%c3_257, %c0_258, %c0_259] : memref<8x32x256xf32, #tpu.memory_space<vmem>>, vector<1x32x256xf32>
    %730 = vector.shape_cast %729 : vector<1x32x256xf32> to vector<32x256xf32>
    %731 = vector.broadcast %728 : vector<1x256xf32> to vector<32x256xf32>
    %732 = arith.mulf %731, %730 : vector<32x256xf32>
    %733 = arith.addf %727, %732 : vector<32x256xf32>
    %734 = vector.extract_strided_slice %710 {offsets = [4, 0], sizes = [1, 256], strides = [1, 1]} : vector<8x256xf32> to vector<1x256xf32>
    %c4_260 = arith.constant 4 : index
    %c0_261 = arith.constant 0 : index
    %c0_262 = arith.constant 0 : index
    %735 = vector.load %arg10[%c4_260, %c0_261, %c0_262] : memref<8x32x256xf32, #tpu.memory_space<vmem>>, vector<1x32x256xf32>
    %736 = vector.shape_cast %735 : vector<1x32x256xf32> to vector<32x256xf32>
    %737 = vector.broadcast %734 : vector<1x256xf32> to vector<32x256xf32>
    %738 = arith.mulf %737, %736 : vector<32x256xf32>
    %739 = arith.addf %733, %738 : vector<32x256xf32>
    %740 = vector.extract_strided_slice %710 {offsets = [5, 0], sizes = [1, 256], strides = [1, 1]} : vector<8x256xf32> to vector<1x256xf32>
    %c5_263 = arith.constant 5 : index
    %c0_264 = arith.constant 0 : index
    %c0_265 = arith.constant 0 : index
    %741 = vector.load %arg10[%c5_263, %c0_264, %c0_265] : memref<8x32x256xf32, #tpu.memory_space<vmem>>, vector<1x32x256xf32>
    %742 = vector.shape_cast %741 : vector<1x32x256xf32> to vector<32x256xf32>
    %743 = vector.broadcast %740 : vector<1x256xf32> to vector<32x256xf32>
    %744 = arith.mulf %743, %742 : vector<32x256xf32>
    %745 = arith.addf %739, %744 : vector<32x256xf32>
    %746 = vector.extract_strided_slice %710 {offsets = [6, 0], sizes = [1, 256], strides = [1, 1]} : vector<8x256xf32> to vector<1x256xf32>
    %c6_266 = arith.constant 6 : index
    %c0_267 = arith.constant 0 : index
    %c0_268 = arith.constant 0 : index
    %747 = vector.load %arg10[%c6_266, %c0_267, %c0_268] : memref<8x32x256xf32, #tpu.memory_space<vmem>>, vector<1x32x256xf32>
    %748 = vector.shape_cast %747 : vector<1x32x256xf32> to vector<32x256xf32>
    %749 = vector.broadcast %746 : vector<1x256xf32> to vector<32x256xf32>
    %750 = arith.mulf %749, %748 : vector<32x256xf32>
    %751 = arith.addf %745, %750 : vector<32x256xf32>
    %752 = vector.extract_strided_slice %710 {offsets = [7, 0], sizes = [1, 256], strides = [1, 1]} : vector<8x256xf32> to vector<1x256xf32>
    %c7_269 = arith.constant 7 : index
    %c0_270 = arith.constant 0 : index
    %c0_271 = arith.constant 0 : index
    %753 = vector.load %arg10[%c7_269, %c0_270, %c0_271] : memref<8x32x256xf32, #tpu.memory_space<vmem>>, vector<1x32x256xf32>
    %754 = vector.shape_cast %753 : vector<1x32x256xf32> to vector<32x256xf32>
    %755 = vector.broadcast %752 : vector<1x256xf32> to vector<32x256xf32>
    %756 = arith.mulf %755, %754 : vector<32x256xf32>
    %757 = arith.addf %751, %756 : vector<32x256xf32>
    %758 = arith.truncf %757 : vector<32x256xf32> to vector<32x256xbf16>
    %c192 = arith.constant 192 : index
    %c0_272 = arith.constant 0 : index
    %759 = vector.load %arg11[%c192, %c0_272] : memref<256x256xbf16, #tpu.memory_space<vmem>>, vector<32x256xbf16>
    tpu.vector_store %arg11[%c192, %c0_272], %758 {strides = array<i32>} : memref<256x256xbf16, #tpu.memory_space<vmem>>, vector<32x256xbf16>,
    %c0_273 = arith.constant 0 : index
    %c7_274 = arith.constant 7 : index
    %c0_275 = arith.constant 0 : index
    %c0_276 = arith.constant 0 : index
    %760 = vector.load %arg2[%c0_273, %c7_274, %c0_275, %c0_276] : memref<1x8x8x256xbf16, #tpu.memory_space<vmem>>, vector<1x1x8x256xbf16>
    %761 = vector.shape_cast %760 : vector<1x1x8x256xbf16> to vector<8x256xbf16>
    %762 = arith.extf %761 : vector<8x256xbf16> to vector<8x256xf32>
    %763 = arith.mulf %762, %209 : vector<8x256xf32>
    %764 = vector.extract_strided_slice %763 {offsets = [0, 0], sizes = [1, 256], strides = [1, 1]} : vector<8x256xf32> to vector<1x256xf32>
    %c0_277 = arith.constant 0 : index
    %c0_278 = arith.constant 0 : index
    %c0_279 = arith.constant 0 : index
    %765 = vector.load %arg10[%c0_277, %c0_278, %c0_279] : memref<8x32x256xf32, #tpu.memory_space<vmem>>, vector<1x32x256xf32>
    %766 = vector.shape_cast %765 : vector<1x32x256xf32> to vector<32x256xf32>
    %767 = vector.broadcast %764 : vector<1x256xf32> to vector<32x256xf32>
    %768 = arith.mulf %767, %766 : vector<32x256xf32>
    %769 = vector.extract_strided_slice %763 {offsets = [1, 0], sizes = [1, 256], strides = [1, 1]} : vector<8x256xf32> to vector<1x256xf32>
    %c1_280 = arith.constant 1 : index
    %c0_281 = arith.constant 0 : index
    %c0_282 = arith.constant 0 : index
    %770 = vector.load %arg10[%c1_280, %c0_281, %c0_282] : memref<8x32x256xf32, #tpu.memory_space<vmem>>, vector<1x32x256xf32>
    %771 = vector.shape_cast %770 : vector<1x32x256xf32> to vector<32x256xf32>
    %772 = vector.broadcast %769 : vector<1x256xf32> to vector<32x256xf32>
    %773 = arith.mulf %772, %771 : vector<32x256xf32>
    %774 = arith.addf %768, %773 : vector<32x256xf32>
    %775 = vector.extract_strided_slice %763 {offsets = [2, 0], sizes = [1, 256], strides = [1, 1]} : vector<8x256xf32> to vector<1x256xf32>
    %c2_283 = arith.constant 2 : index
    %c0_284 = arith.constant 0 : index
    %c0_285 = arith.constant 0 : index
    %776 = vector.load %arg10[%c2_283, %c0_284, %c0_285] : memref<8x32x256xf32, #tpu.memory_space<vmem>>, vector<1x32x256xf32>
    %777 = vector.shape_cast %776 : vector<1x32x256xf32> to vector<32x256xf32>
    %778 = vector.broadcast %775 : vector<1x256xf32> to vector<32x256xf32>
    %779 = arith.mulf %778, %777 : vector<32x256xf32>
    %780 = arith.addf %774, %779 : vector<32x256xf32>
    %781 = vector.extract_strided_slice %763 {offsets = [3, 0], sizes = [1, 256], strides = [1, 1]} : vector<8x256xf32> to vector<1x256xf32>
    %c3_286 = arith.constant 3 : index
    %c0_287 = arith.constant 0 : index
    %c0_288 = arith.constant 0 : index
    %782 = vector.load %arg10[%c3_286, %c0_287, %c0_288] : memref<8x32x256xf32, #tpu.memory_space<vmem>>, vector<1x32x256xf32>
    %783 = vector.shape_cast %782 : vector<1x32x256xf32> to vector<32x256xf32>
    %784 = vector.broadcast %781 : vector<1x256xf32> to vector<32x256xf32>
    %785 = arith.mulf %784, %783 : vector<32x256xf32>
    %786 = arith.addf %780, %785 : vector<32x256xf32>
    %787 = vector.extract_strided_slice %763 {offsets = [4, 0], sizes = [1, 256], strides = [1, 1]} : vector<8x256xf32> to vector<1x256xf32>
    %c4_289 = arith.constant 4 : index
    %c0_290 = arith.constant 0 : index
    %c0_291 = arith.constant 0 : index
    %788 = vector.load %arg10[%c4_289, %c0_290, %c0_291] : memref<8x32x256xf32, #tpu.memory_space<vmem>>, vector<1x32x256xf32>
    %789 = vector.shape_cast %788 : vector<1x32x256xf32> to vector<32x256xf32>
    %790 = vector.broadcast %787 : vector<1x256xf32> to vector<32x256xf32>
    %791 = arith.mulf %790, %789 : vector<32x256xf32>
    %792 = arith.addf %786, %791 : vector<32x256xf32>
    %793 = vector.extract_strided_slice %763 {offsets = [5, 0], sizes = [1, 256], strides = [1, 1]} : vector<8x256xf32> to vector<1x256xf32>
    %c5_292 = arith.constant 5 : index
    %c0_293 = arith.constant 0 : index
    %c0_294 = arith.constant 0 : index
    %794 = vector.load %arg10[%c5_292, %c0_293, %c0_294] : memref<8x32x256xf32, #tpu.memory_space<vmem>>, vector<1x32x256xf32>
    %795 = vector.shape_cast %794 : vector<1x32x256xf32> to vector<32x256xf32>
    %796 = vector.broadcast %793 : vector<1x256xf32> to vector<32x256xf32>
    %797 = arith.mulf %796, %795 : vector<32x256xf32>
    %798 = arith.addf %792, %797 : vector<32x256xf32>
    %799 = vector.extract_strided_slice %763 {offsets = [6, 0], sizes = [1, 256], strides = [1, 1]} : vector<8x256xf32> to vector<1x256xf32>
    %c6_295 = arith.constant 6 : index
    %c0_296 = arith.constant 0 : index
    %c0_297 = arith.constant 0 : index
    %800 = vector.load %arg10[%c6_295, %c0_296, %c0_297] : memref<8x32x256xf32, #tpu.memory_space<vmem>>, vector<1x32x256xf32>
    %801 = vector.shape_cast %800 : vector<1x32x256xf32> to vector<32x256xf32>
    %802 = vector.broadcast %799 : vector<1x256xf32> to vector<32x256xf32>
    %803 = arith.mulf %802, %801 : vector<32x256xf32>
    %804 = arith.addf %798, %803 : vector<32x256xf32>
    %805 = vector.extract_strided_slice %763 {offsets = [7, 0], sizes = [1, 256], strides = [1, 1]} : vector<8x256xf32> to vector<1x256xf32>
    %c7_298 = arith.constant 7 : index
    %c0_299 = arith.constant 0 : index
    %c0_300 = arith.constant 0 : index
    %806 = vector.load %arg10[%c7_298, %c0_299, %c0_300] : memref<8x32x256xf32, #tpu.memory_space<vmem>>, vector<1x32x256xf32>
    %807 = vector.shape_cast %806 : vector<1x32x256xf32> to vector<32x256xf32>
    %808 = vector.broadcast %805 : vector<1x256xf32> to vector<32x256xf32>
    %809 = arith.mulf %808, %807 : vector<32x256xf32>
    %810 = arith.addf %804, %809 : vector<32x256xf32>
    %811 = arith.truncf %810 : vector<32x256xf32> to vector<32x256xbf16>
    %c224 = arith.constant 224 : index
    %c0_301 = arith.constant 0 : index
    %812 = vector.load %arg11[%c224, %c0_301] : memref<256x256xbf16, #tpu.memory_space<vmem>>, vector<32x256xbf16>
    tpu.vector_store %arg11[%c224, %c0_301], %811 {strides = array<i32>} : memref<256x256xbf16, #tpu.memory_space<vmem>>, vector<32x256xbf16>,
    %c0_302 = arith.constant 0 : index
    %c0_303 = arith.constant 0 : index
    %813 = vector.load %arg6[%c0_302, %c0_303] : memref<16x256xbf16, #tpu.memory_space<vmem>>, vector<16x256xbf16>
    %c0_304 = arith.constant 0 : index
    %c0_305 = arith.constant 0 : index
    %814 = vector.load %arg11[%c0_304, %c0_305] : memref<256x256xbf16, #tpu.memory_space<vmem>>, vector<256x256xbf16>
    %cst_306 = arith.constant dense<0.000000e+00> : vector<16x256xf32>
    %815 = tpu.matmul %813, %814, %cst_306 {dimension_numbers = #tpu.dot_dimension_numbers<[1], [0], [0], [1], [0, 0, 1, 1], [], []>} : vector<16x256xbf16>, vector<256x256xbf16>, vector<16x256xf32> -> vector<16x256xf32>
    %c0_307 = arith.constant 0 : index
    %c0_308 = arith.constant 0 : index
    %816 = vector.load %arg7[%c0_307, %c0_308] : memref<16x1xf32, #tpu.memory_space<vmem>>, vector<16x1xf32>
    %817 = vector.broadcast %816 : vector<16x1xf32> to vector<16x256xf32>
    %818 = arith.addf %815, %817 : vector<16x256xf32>
    %c0_309 = arith.constant 0 : index
    %c0_310 = arith.constant 0 : index
    %c0_311 = arith.constant 0 : index
    %819 = vector.load %arg9[%c0_309, %c0_310, %c0_311] : memref<1x16x256xf32, #tpu.memory_space<vmem>>, vector<1x16x256xf32>
    %820 = vector.shape_cast %819 : vector<1x16x256xf32> to vector<16x256xf32>
    %821 = vector.shape_cast %818 : vector<16x256xf32> to vector<1x16x256xf32>
    tpu.vector_store %arg9[%c0_309, %c0_310, %c0_311], %821 {strides = array<i32>} : memref<1x16x256xf32, #tpu.memory_space<vmem>>, vector<1x16x256xf32>,
    return
  }
  func.func @transform_0(%arg0: i32, %arg1: i32) -> (i32, i32, i32, i32) {
    %c0_i32 = arith.constant 0 : i32
    %c0_i32_0 = arith.constant 0 : i32
    %c0_i32_1 = arith.constant 0 : i32
    return %arg0, %c0_i32, %c0_i32_0, %arg1 : i32, i32, i32, i32
  }
  func.func @transform_1(%arg0: i32, %arg1: i32) -> (i32, i32, i32, i32) {
    %c0_i32 = arith.constant 0 : i32
    %c0_i32_0 = arith.constant 0 : i32
    %c0_i32_1 = arith.constant 0 : i32
    return %arg0, %c0_i32, %c0_i32_0, %arg1 : i32, i32, i32, i32
  }
  func.func @transform_2(%arg0: i32, %arg1: i32) -> (i32, i32, i32) {
    %c0_i32 = arith.constant 0 : i32
    %c0_i32_0 = arith.constant 0 : i32
    return %arg0, %c0_i32, %arg1 : i32, i32, i32
  }
  func.func @transform_3(%arg0: i32, %arg1: i32) -> (i32, i32) {
    %c0_i32 = arith.constant 0 : i32
    %c0_i32_0 = arith.constant 0 : i32
    %c0_i32_1 = arith.constant 0 : i32
    return %c0_i32, %c0_i32_0 : i32, i32
  }
  func.func @transform_4(%arg0: i32, %arg1: i32) -> (i32, i32) {
    %c0_i32 = arith.constant 0 : i32
    %c0_i32_0 = arith.constant 0 : i32
    %c0_i32_1 = arith.constant 0 : i32
    return %c0_i32, %c0_i32_0 : i32, i32
  }
  func.func @transform_5(%arg0: i32, %arg1: i32) -> (i32, i32) {
    %c0_i32 = arith.constant 0 : i32
    %c0_i32_0 = arith.constant 0 : i32
    %c0_i32_1 = arith.constant 0 : i32
    return %c0_i32, %c0_i32_0 : i32, i32
  }
  func.func @transform_6(%arg0: i32, %arg1: i32) -> i32 {
    %c0_i32 = arith.constant 0 : i32
    %c0_i32_0 = arith.constant 0 : i32
    return %c0_i32 : i32
  }
  func.func @transform_7(%arg0: i32, %arg1: i32) -> (i32, i32, i32) {
    %c0_i32 = arith.constant 0 : i32
    %c0_i32_0 = arith.constant 0 : i32
    return %arg0, %c0_i32, %arg1 : i32, i32, i32
  }
}

</mosaic_0001>

<llo_original>
// kernel: tpu_custom_call.1
$region0: #{tpu_custom_call.1}
  #allocation0 [shape = 'u32[]', space=smem, size = 0x4, offset = 0x4, fixed_abs, tag = 'smem constant byte address 0x4 - core index']
  #allocation1 [shape = 'u32[144,128]{1,0:T(1,128)}', space=vmem, size = 0x12000, scoped, tag = 'internal scratch']
  #allocation2 [shape = 'f32[8,32,256]{2,1,0:T(8,128)}', space=vmem, size = 0x40000, scoped, tag = 'scratch operand']
  #allocation3 [shape = 'bf16[256,256]{1,0:T(8,128)(2,1)}', space=vmem, size = 0x20000, scoped, tag = 'scratch operand']
  %s0 = inlined_call_operand.hbm [shape: bf16[2,8,8,512], index: 0, kind: input, shape index: {}]
  %s1 = inlined_call_operand.hbm [shape: f32[2,3,8,512], index: 1, kind: input, shape index: {}]
  %s2 = inlined_call_operand.hbm [shape: f32[2,8,512], index: 2, kind: input, shape index: {}]
  %s3 = inlined_call_operand.vmem [shape: f32[32,4], index: 3, kind: input, shape index: {}]
  %s4 = inlined_call_operand.vmem [shape: bf16[16,256], index: 4, kind: input, shape index: {}]
  %s5 = inlined_call_operand.vmem [shape: f32[16,1], index: 5, kind: input, shape index: {}]
  %s6 = inlined_call_operand.vmem [shape: f32[49], index: 6, kind: input, shape index: {}]
  %s7 = inlined_call_operand.hbm [shape: f32[2,16,512], index: 7, kind: output, shape index: {}]
  %s8 = sld [smem:[#allocation0]]
  $region77: #{tpu_custom_call.1} parent=0
    _
  %s10 = ssub.s32 1, %s8
  %s11 = scalar_select 0, %s10, %s8
  $region1: #{tpu_custom_call.1} parent=0
    #allocation4 [shape = 'u8[65536]{0}', space=vmem, size = 0x10000, scoped, tag = 'input window, operand 0']
    #allocation5 [shape = 's32[2]{0}', space=sflag, size = 0x8, scoped, tag = 'scoped memory for tpu_custom_call.1']
    #allocation6 [shape = 's32[2]{0}', space=sflag, size = 0x8, scoped, tag = 'scoped memory for tpu_custom_call.1']
    #allocation7 [shape = 's32[2]{0}', space=sflag, size = 0x8, scoped, tag = 'scoped memory for tpu_custom_call.1']
    #allocation8 [shape = 'u8[49152]{0}', space=vmem, size = 0xc000, scoped, tag = 'input window, operand 1']
    #allocation9 [shape = 's32[2]{0}', space=sflag, size = 0x8, scoped, tag = 'scoped memory for tpu_custom_call.1']
    #allocation10 [shape = 'u8[16384]{0}', space=vmem, size = 0x4000, scoped, tag = 'input window, operand 2']
    #allocation11 [shape = 'u8[512]{0}', space=smem, size = 0x200, scoped, tag = 'input window, operand 6, single buffered']
    #allocation12 [shape = 'u8[32768]{0}', space=vmem, size = 0x8000, scoped, tag = 'output window, operand 0']
    %12 = vsyncpa [#allocation5], 0
    %s13 = scalar_lea.sflag [#allocation5], 1
    %14 = vsyncpa %s13, 0
    %15 = vsyncpa [#allocation9], 0
    %s16 = scalar_lea.sflag [#allocation9], 1
    %17 = vsyncpa %s16, 0
    %18 = vsyncpa [#allocation7], 0
    %19 = vsyncpa [#allocation6], 0
    %s20 = scalar_lea.sflag [#allocation6], 1
    %21 = vsyncpa %s20, 0
    loop: start=0, step=1, limit=6
    $region2: #{tpu_custom_call.1} parent=1 // loop_pre_header
      _
    $region3: #{tpu_custom_call.1} parent=1 // loop_header
      %s23 = sphi 0, %s27
      %p24 = scmp.ge.s32.totalorder %s23, 6
      %s30 = sphi 0, %s42
      %s31 = sphi 0, %s38
      %s32 = sphi 0, %s30
      %s33 = sphi 0, %s31
      %s34 = sphi 0, %s32
      %s35 = sphi 0, %s33
      %s47 = sphi 0, %s49
      %s50 = sphi 0, %s47
      %s51 = sphi 0, %s50
      %s67 = sphi 0, %s51
      %s75 = sphi 0, %s77
      %s78 = sphi 0, %s75
      %s79 = sphi 0, %s78
      %s95 = sphi 0, %s79
      %s103 = sphi 0, %s105
      %s106 = sphi 0, %s103
      %s107 = sphi 0, %s106
      %s123 = sphi 0, %s107
      %s127 = sphi 0, %s127
      %s129 = sphi 0, %s127
      %s130 = sphi 0, %s129
      %s144 = sphi 0, %s130
      %s148 = sphi 0, %s148
      %s150 = sphi 0, %s148
      %s151 = sphi 0, %s150
      %s165 = sphi 0, %s151
      %s169 = sphi 0, %s169
      %s171 = sphi 0, %s169
      %s172 = sphi 0, %s171
      %s186 = sphi 0, %s172
      %s190 = sphi 0, %s190
      %s192 = sphi 0, %s190
      %s193 = sphi 0, %s192
      %s207 = sphi 0, %s193
      %s215 = sphi 0, %s217
      %s218 = sphi 0, %s215
      %s219 = sphi 0, %s218
      %s235 = sphi 0, %s219
    $region4: #{tpu_custom_call.1} parent=1 // loop_header_branch
      %26 = sbr.rel (%p24) target = $region8
    $region5: #{tpu_custom_call.1} parent=1 // loop_body
      %s28 = ssub.s32 %s23, 1
      %s29 = ssub.s32 %s23, 2
      %s36 = sadd.s32 1, %s31
      %p37 = scmp.ge.s32.totalorder %s36, 2
      %s38 = scalar_select %p37, 0, %s36
      %s39 = sadd.s32 1, %s30
      %s40 = scalar_select %p37, %s39, %s30
      %p41 = scmp.ge.s32.totalorder %s40, 2
      %s42 = scalar_select %p41, 0, %s40
      %s43 = ssub.s32 %s30, %s42
      %s44 = ssub.s32 %s31, %s38
      %s45 = sor.u32 %s43, %s44
      %p46 = scmp.eq.s32.totalorder %s45, 0
      %s48 = sadd.s32 %s47, 1
      %s49 = scalar_select %p46, %s47, %s48
      %p52 = pneg %p46
      %p53 = scmp.eq.s32.totalorder %s23, 3
      %p54 = por %p52, %p53
      %p55 = scmp.ne.s32.totalorder %s47, %s50
      %p56 = scmp.eq.s32.totalorder %s23, 0
      %p57 = por %p55, %p56
      %p58 = scmp.ne.s32.totalorder %s47, %s50
      %p59 = scmp.eq.s32.totalorder %s28, 3
      %p60 = por %p58, %p59
      %p61 = scmp.ne.s32.totalorder %s50, %s51
      %p62 = scmp.eq.s32.totalorder %s28, 0
      %p63 = por %p61, %p62
      %p64 = scmp.ne.s32.totalorder %s50, %s51
      %p65 = scmp.eq.s32.totalorder %s29, 3
      %p66 = por %p64, %p65
      %p68 = scmp.ne.s32.totalorder %s51, %s67
      %p69 = scmp.eq.s32.totalorder %s29, 0
      %p70 = por %p68, %p69
      %s71 = ssub.s32 %s30, %s42
      %s72 = ssub.s32 %s31, %s38
      %s73 = sor.u32 %s71, %s72
      %p74 = scmp.eq.s32.totalorder %s73, 0
      %s76 = sadd.s32 %s75, 1
      %s77 = scalar_select %p74, %s75, %s76
      %p80 = pneg %p74
      %p81 = scmp.eq.s32.totalorder %s23, 3
      %p82 = por %p80, %p81
      %p83 = scmp.ne.s32.totalorder %s75, %s78
      %p84 = scmp.eq.s32.totalorder %s23, 0
      %p85 = por %p83, %p84
      %p86 = scmp.ne.s32.totalorder %s75, %s78
      %p87 = scmp.eq.s32.totalorder %s28, 3
      %p88 = por %p86, %p87
      %p89 = scmp.ne.s32.totalorder %s78, %s79
      %p90 = scmp.eq.s32.totalorder %s28, 0
      %p91 = por %p89, %p90
      %p92 = scmp.ne.s32.totalorder %s78, %s79
      %p93 = scmp.eq.s32.totalorder %s29, 3
      %p94 = por %p92, %p93
      %p96 = scmp.ne.s32.totalorder %s79, %s95
      %p97 = scmp.eq.s32.totalorder %s29, 0
      %p98 = por %p96, %p97
      %s99 = ssub.s32 %s30, %s42
      %s100 = ssub.s32 %s31, %s38
      %s101 = sor.u32 %s99, %s100
      %p102 = scmp.eq.s32.totalorder %s101, 0
      %s104 = sadd.s32 %s103, 1
      %s105 = scalar_select %p102, %s103, %s104
      %p108 = pneg %p102
      %p109 = scmp.eq.s32.totalorder %s23, 3
      %p110 = por %p108, %p109
      %p111 = scmp.ne.s32.totalorder %s103, %s106
      %p112 = scmp.eq.s32.totalorder %s23, 0
      %p113 = por %p111, %p112
      %p114 = scmp.ne.s32.totalorder %s103, %s106
      %p115 = scmp.eq.s32.totalorder %s28, 3
      %p116 = por %p114, %p115
      %p117 = scmp.ne.s32.totalorder %s106, %s107
      %p118 = scmp.eq.s32.totalorder %s28, 0
      %p119 = por %p117, %p118
      %p120 = scmp.ne.s32.totalorder %s106, %s107
      %p121 = scmp.eq.s32.totalorder %s29, 3
      %p122 = por %p120, %p121
      %p124 = scmp.ne.s32.totalorder %s107, %s123
      %p125 = scmp.eq.s32.totalorder %s29, 0
      %p126 = por %p124, %p125
      %s128 = sadd.s32 %s127, 1
      %p131 = scmp.eq.s32.totalorder %s23, 3
      %p132 = scmp.ne.s32.totalorder %s127, %s129
      %p133 = scmp.eq.s32.totalorder %s23, 0
      %p134 = por %p132, %p133
      %p135 = scmp.ne.s32.totalorder %s127, %s129
      %p136 = scmp.eq.s32.totalorder %s28, 3
      %p137 = por %p135, %p136
      %p138 = scmp.ne.s32.totalorder %s129, %s130
      %p139 = scmp.eq.s32.totalorder %s28, 0
      %p140 = por %p138, %p139
      %p141 = scmp.ne.s32.totalorder %s129, %s130
      %p142 = scmp.eq.s32.totalorder %s29, 3
      %p143 = por %p141, %p142
      %p145 = scmp.ne.s32.totalorder %s130, %s144
      %p146 = scmp.eq.s32.totalorder %s29, 0
      %p147 = por %p145, %p146
      %s149 = sadd.s32 %s148, 1
      %p152 = scmp.eq.s32.totalorder %s23, 3
      %p153 = scmp.ne.s32.totalorder %s148, %s150
      %p154 = scmp.eq.s32.totalorder %s23, 0
      %p155 = por %p153, %p154
      %p156 = scmp.ne.s32.totalorder %s148, %s150
      %p157 = scmp.eq.s32.totalorder %s28, 3
      %p158 = por %p156, %p157
      %p159 = scmp.ne.s32.totalorder %s150, %s151
      %p160 = scmp.eq.s32.totalorder %s28, 0
      %p161 = por %p159, %p160
      %p162 = scmp.ne.s32.totalorder %s150, %s151
      %p163 = scmp.eq.s32.totalorder %s29, 3
      %p164 = por %p162, %p163
      %p166 = scmp.ne.s32.totalorder %s151, %s165
      %p167 = scmp.eq.s32.totalorder %s29, 0
      %p168 = por %p166, %p167
      %s170 = sadd.s32 %s169, 1
      %p173 = scmp.eq.s32.totalorder %s23, 3
      %p174 = scmp.ne.s32.totalorder %s169, %s171
      %p175 = scmp.eq.s32.totalorder %s23, 0
      %p176 = por %p174, %p175
      %p177 = scmp.ne.s32.totalorder %s169, %s171
      %p178 = scmp.eq.s32.totalorder %s28, 3
      %p179 = por %p177, %p178
      %p180 = scmp.ne.s32.totalorder %s171, %s172
      %p181 = scmp.eq.s32.totalorder %s28, 0
      %p182 = por %p180, %p181
      %p183 = scmp.ne.s32.totalorder %s171, %s172
      %p184 = scmp.eq.s32.totalorder %s29, 3
      %p185 = por %p183, %p184
      %p187 = scmp.ne.s32.totalorder %s172, %s186
      %p188 = scmp.eq.s32.totalorder %s29, 0
      %p189 = por %p187, %p188
      %s191 = sadd.s32 %s190, 1
      %p194 = scmp.eq.s32.totalorder %s23, 3
      %p195 = scmp.ne.s32.totalorder %s190, %s192
      %p196 = scmp.eq.s32.totalorder %s23, 0
      %p197 = por %p195, %p196
      %p198 = scmp.ne.s32.totalorder %s190, %s192
      %p199 = scmp.eq.s32.totalorder %s28, 3
      %p200 = por %p198, %p199
      %p201 = scmp.ne.s32.totalorder %s192, %s193
      %p202 = scmp.eq.s32.totalorder %s28, 0
      %p203 = por %p201, %p202
      %p204 = scmp.ne.s32.totalorder %s192, %s193
      %p205 = scmp.eq.s32.totalorder %s29, 3
      %p206 = por %p204, %p205
      %p208 = scmp.ne.s32.totalorder %s193, %s207
      %p209 = scmp.eq.s32.totalorder %s29, 0
      %p210 = por %p208, %p209
      %s211 = ssub.s32 %s30, %s42
      %s212 = ssub.s32 %s31, %s38
      %s213 = sor.u32 %s211, %s212
      %p214 = scmp.eq.s32.totalorder %s213, 0
      %s216 = sadd.s32 %s215, 1
      %s217 = scalar_select %p214, %s215, %s216
      %p220 = pneg %p214
      %p221 = scmp.eq.s32.totalorder %s23, 3
      %p222 = por %p220, %p221
      %p223 = scmp.ne.s32.totalorder %s215, %s218
      %p224 = scmp.eq.s32.totalorder %s23, 0
      %p225 = por %p223, %p224
      %p226 = scmp.ne.s32.totalorder %s215, %s218
      %p227 = scmp.eq.s32.totalorder %s28, 3
      %p228 = por %p226, %p227
      %p229 = scmp.ne.s32.totalorder %s218, %s219
      %p230 = scmp.eq.s32.totalorder %s28, 0
      %p231 = por %p229, %p230
      %p232 = scmp.ne.s32.totalorder %s218, %s219
      %p233 = scmp.eq.s32.totalorder %s29, 3
      %p234 = por %p232, %p233
      %p236 = scmp.ne.s32.totalorder %s219, %s235
      %p237 = scmp.eq.s32.totalorder %s29, 0
      %p238 = por %p236, %p237
      %p239 = scmp.le.s32.totalorder 1, %s23
      %p240 = scmp.lt.s32.totalorder %s23, 5
      %p241 = pnand %p239, %p240
      %p242 = pneg %p241
      // Predicated region
      $region9: #{tpu_custom_call.1} parent=5 // pred_check
        _
      $region10: #{tpu_custom_call.1} parent=5 // pred_check_branch
        %244 = sbr.rel (%p241) target = $region12
      $region11: #{tpu_custom_call.1} parent=5 // pred_region
        %s245 = ssub.s32 %s23, 1
        // Predicated region
        $region13: #{tpu_custom_call.1} parent=11 // pred_check
          %p246 = pneg %p140
        $region14: #{tpu_custom_call.1} parent=11 // pred_check_branch
          %248 = sbr.rel (%p246) target = $region16
        $region15: #{tpu_custom_call.1} parent=11 // pred_region
          _
        $region16: #{tpu_custom_call.1} parent=11 // pred_fallthru
          _
        // Predicated region
        $region17: #{tpu_custom_call.1} parent=11 // pred_check
          %p249 = pneg %p161
        $region18: #{tpu_custom_call.1} parent=11 // pred_check_branch
          %251 = sbr.rel (%p249) target = $region20
        $region19: #{tpu_custom_call.1} parent=11 // pred_region
          _
        $region20: #{tpu_custom_call.1} parent=11 // pred_fallthru
          _
        // Predicated region
        $region21: #{tpu_custom_call.1} parent=11 // pred_check
          %p252 = pneg %p182
        $region22: #{tpu_custom_call.1} parent=11 // pred_check_branch
          %254 = sbr.rel (%p252) target = $region24
        $region23: #{tpu_custom_call.1} parent=11 // pred_region
          _
        $region24: #{tpu_custom_call.1} parent=11 // pred_fallthru
          _
        // Predicated region
        $region25: #{tpu_custom_call.1} parent=11 // pred_check
          %p255 = pneg %p203
        $region26: #{tpu_custom_call.1} parent=11 // pred_check_branch
          %257 = sbr.rel (%p255) target = $region28
        $region27: #{tpu_custom_call.1} parent=11 // pred_region
          %s259 = ssub.s32 16, 16
          %260 = vsyncadd [#allocation7], %s259
          %s262 = sshll.u32 %s6, 4
          %s263 = int_to_ptr.vmem [resolvable:$true] %s262
          %265 = dma.vmem_to_smem %s263, 16, [#allocation11], [#allocation7]
        $region28: #{tpu_custom_call.1} parent=11 // pred_fallthru
          _
      $region12: #{tpu_custom_call.1} parent=5 // pred_fallthru
        _
      %p266 = scmp.lt.s32.totalorder %s23, 4
      // Predicated region
      $region29: #{tpu_custom_call.1} parent=5 // pred_check
        %p267 = pneg %p266
      $region30: #{tpu_custom_call.1} parent=5 // pred_check_branch
        %269 = sbr.rel (%p267) target = $region32
      $region31: #{tpu_custom_call.1} parent=5 // pred_region
        // Predicated region
        $region33: #{tpu_custom_call.1} parent=31 // pred_check
          %p270 = pneg %p57
        $region34: #{tpu_custom_call.1} parent=31 // pred_check_branch
          %272 = sbr.rel (%p270) target = $region36
        $region35: #{tpu_custom_call.1} parent=31 // pred_region
          %s273 = sand.u32 %s47, 1
          %s274 = scalar_lea.sflag [#allocation5], %s273
          %s275 = sand.u32 %s47, 1
          %s276 = smul.addr %s275, 64
          %s277 = scalar_lea.vmem [#allocation4], %s276
          %s278 = smul.u32 2, %s31
          %s280 = ssub.s32 1024, 1024
          %281 = vsyncadd %s274, %s280
          %s282 = smul.addr %s30, 32
          %s283 = sadd.s32 %s278, %s282
          %s284 = smul.addr %s283, 64
          %s285 = scalar_lea.hbm %s0, %s284
          %s286 = sshll.u32 %s277, 4
          %s287 = int_to_ptr.vmem [resolvable:$true] %s286
          %292 = dma.hbm_to_vmem [thread:$0]  %s285, 1024, %s287, %s274, 256, 128, 8
        $region36: #{tpu_custom_call.1} parent=31 // pred_fallthru
          _
        // Predicated region
        $region37: #{tpu_custom_call.1} parent=31 // pred_check
          %p293 = pneg %p85
        $region38: #{tpu_custom_call.1} parent=31 // pred_check_branch
          %295 = sbr.rel (%p293) target = $region40
        $region39: #{tpu_custom_call.1} parent=31 // pred_region
          %s296 = sand.u32 %s23, 1
          %s297 = scalar_lea.sflag [#allocation9], %s296
          %s298 = sand.u32 %s75, 1
          %s299 = smul.addr %s298, 48
          %s300 = scalar_lea.vmem [#allocation8], %s299
          %s301 = smul.u32 2, %s31
          %s303 = ssub.s32 768, 768
          %304 = vsyncadd %s297, %s303
          %s305 = smul.addr %s30, 12
          %s306 = sadd.s32 %s301, %s305
          %s307 = smul.addr %s306, 128
          %s308 = scalar_lea.hbm %s1, %s307
          %s309 = sshll.u32 %s300, 4
          %s310 = int_to_ptr.vmem [resolvable:$true] %s309
          %315 = dma.hbm_to_vmem [thread:$0]  %s308, 768, %s310, %s297, 512, 256, 16
        $region40: #{tpu_custom_call.1} parent=31 // pred_fallthru
          _
        // Predicated region
        $region41: #{tpu_custom_call.1} parent=31 // pred_check
          %p316 = pneg %p113
        $region42: #{tpu_custom_call.1} parent=31 // pred_check_branch
          %318 = sbr.rel (%p316) target = $region44
        $region43: #{tpu_custom_call.1} parent=31 // pred_region
          %s319 = sand.u32 %s23, 1
          %s320 = scalar_lea.sflag [#allocation9], %s319
          %s321 = sand.u32 %s103, 1
          %s322 = smul.addr %s321, 16
          %s323 = scalar_lea.vmem [#allocation10], %s322
          %s324 = smul.u32 2, %s31
          %s326 = ssub.s32 256, 256
          %327 = vsyncadd %s320, %s326
          %s328 = smul.addr %s30, 4
          %s329 = sadd.s32 %s324, %s328
          %s330 = smul.addr %s329, 128
          %s331 = scalar_lea.hbm %s2, %s330
          %s333 = sshll.u32 %s323, 4
          %s334 = int_to_ptr.vmem [resolvable:$true] %s333
          %336 = dma.hbm_to_vmem [thread:$0]  %s331, 256, %s334, %s320
        $region44: #{tpu_custom_call.1} parent=31 // pred_fallthru
          _
      $region32: #{tpu_custom_call.1} parent=5 // pred_fallthru
        _
      %p337 = scmp.le.s32.totalorder 1, %s23
      %p338 = scmp.lt.s32.totalorder %s23, 5
      %p339 = pnand %p337, %p338
      %p340 = pneg %p339
      // Predicated region
      $region45: #{tpu_custom_call.1} parent=5 // pred_check
        _
      $region46: #{tpu_custom_call.1} parent=5 // pred_check_branch
        %342 = sbr.rel (%p339) target = $region48
      $region47: #{tpu_custom_call.1} parent=5 // pred_region
        %s343 = ssub.s32 %s23, 1
        %s344 = sand.u32 %s50, 1
        %s345 = scalar_lea.sflag [#allocation5], %s344
        %s346 = sand.u32 %s50, 1
        %s347 = smul.addr %s346, 64
        %s348 = scalar_lea.vmem [#allocation4], %s347
        // Predicated region
        $region49: #{tpu_custom_call.1} parent=47 // pred_check
          %p349 = pneg %p63
        $region50: #{tpu_custom_call.1} parent=47 // pred_check_branch
          %351 = sbr.rel (%p349) target = $region52
        $region51: #{tpu_custom_call.1} parent=47 // pred_region
          %352 = dma.done %s345, 1024
        $region52: #{tpu_custom_call.1} parent=47 // pred_fallthru
          _
        %s353 = sand.u32 %s28, 1
        %s354 = scalar_lea.sflag [#allocation9], %s353
        %s355 = sand.u32 %s78, 1
        %s356 = smul.addr %s355, 48
        %s357 = scalar_lea.vmem [#allocation8], %s356
        // Predicated region
        $region53: #{tpu_custom_call.1} parent=47 // pred_check
          %p358 = pneg %p91
        $region54: #{tpu_custom_call.1} parent=47 // pred_check_branch
          %360 = sbr.rel (%p358) target = $region56
        $region55: #{tpu_custom_call.1} parent=47 // pred_region
          %361 = dma.done %s354, 768
        $region56: #{tpu_custom_call.1} parent=47 // pred_fallthru
          _
        %s362 = sand.u32 %s28, 1
        %s363 = scalar_lea.sflag [#allocation9], %s362
        %s364 = sand.u32 %s106, 1
        %s365 = smul.addr %s364, 16
        %s366 = scalar_lea.vmem [#allocation10], %s365
        // Predicated region
        $region57: #{tpu_custom_call.1} parent=47 // pred_check
          %p367 = pneg %p119
        $region58: #{tpu_custom_call.1} parent=47 // pred_check_branch
          %369 = sbr.rel (%p367) target = $region60
        $region59: #{tpu_custom_call.1} parent=47 // pred_region
          %370 = dma.done %s363, 256
        $region60: #{tpu_custom_call.1} parent=47 // pred_fallthru
          _
        // Predicated region
        $region61: #{tpu_custom_call.1} parent=47 // pred_check
          %p371 = pneg %p203
        $region62: #{tpu_custom_call.1} parent=47 // pred_check_branch
          %373 = sbr.rel (%p371) target = $region64
        $region63: #{tpu_custom_call.1} parent=47 // pred_region
          %374 = dma.done [#allocation7], 16
        $region64: #{tpu_custom_call.1} parent=47 // pred_fallthru
          _
        %375 = sfence
        %s376 = sand.u32 %s50, 1
        %s377 = scalar_lea.sflag [#allocation5], %s376
        %s378 = sand.u32 %s50, 1
        %s379 = smul.addr %s378, 64
        %s380 = scalar_lea.vmem [#allocation4], %s379
        %p381 = pneg %p63
        %p382 = pneg %p60
        %s383 = sand.u32 %s28, 1
        %s384 = scalar_lea.sflag [#allocation9], %s383
        %s385 = sand.u32 %s78, 1
        %s386 = smul.addr %s385, 48
        %s387 = scalar_lea.vmem [#allocation8], %s386
        %p388 = pneg %p91
        %p389 = pneg %p88
        %s390 = sand.u32 %s28, 1
        %s391 = scalar_lea.sflag [#allocation9], %s390
        %s392 = sand.u32 %s106, 1
        %s393 = smul.addr %s392, 16
        %s394 = scalar_lea.vmem [#allocation10], %s393
        %p395 = pneg %p119
        %p396 = pneg %p116
        %p397 = pneg %p140
        %p398 = pneg %p137
        %p399 = pneg %p161
        %p400 = pneg %p158
        %p401 = pneg %p182
        %p402 = pneg %p179
        %p403 = pneg %p203
        %p404 = pneg %p200
        %p405 = pneg %p231
        %p406 = pneg %p228
        %s407 = sand.u32 %s218, 1
        %s408 = scalar_lea.sflag [#allocation6], %s407
        %s409 = sand.u32 %s218, 1
        %s410 = smul.addr %s409, 32
        %s411 = scalar_lea.vmem [#allocation12], %s410
        %s412 = smul.u32 2, %s33
        %s413 = smul.u32 2, %s33
        %s414 = smul.u32 2, %s33
        %s415 = smul.u32 2, %s33
        %v416 = vld [vmem:[%s366] sm:$0xff]
        %v417 = vld [vmem:[%s366 + $0x8] sm:$0xff]
        %v418 = vrot.slane %v416, 4
        %v419 = vmax.f32 %v416, %v418
        %v420 = vrot.slane %v419, 2
        %v421 = vmax.f32 %v419, %v420
        %v422 = vrot.slane %v421, 1
        %v423 = vmax.f32 %v421, %v422
        %v424 = vrot.slane %v417, 4
        %v425 = vmax.f32 %v417, %v424
        %v426 = vrot.slane %v425, 2
        %v427 = vmax.f32 %v425, %v426
        %v428 = vrot.slane %v427, 1
        %v429 = vmax.f32 %v427, %v428
        %v430 = vmax.f32 %v423, 1e-12
        %v431 = vmax.f32 %v429, 1e-12
        %v432 = vrcp.pop %v430
        %v433 = vrcp.pop %v431
        %v434 = vmul.f32 %v416, %v432
        %v435 = vmul.f32 %v417, %v433
        %s436 = sld [smem:[#allocation11]]
        %v437 = vstv %s436
        %v438 = vmul.f32 %v434, %v437
        %v439 = vmul.f32 %v435, %v437
        %s440 = sld [smem:[#allocation11 + $0x10]]
        %v441 = vstv %s440
        %v442 = vadd.f32 %v438, %v441
        %v443 = vadd.f32 %v439, %v441
        %v444 = vmax.f32 %v442, 0.0
        %v445 = vmax.f32 %v443, 0.0
        %s446 = sld [smem:[#allocation11 + $0x20]]
        %v447 = vstv %s446
        %v448 = vmul.f32 %v444, %v447
        %v449 = vmul.f32 %v445, %v447
        %v450 = vadd.f32 %v448, 0.0
        %v451 = vadd.f32 %v449, 0.0
        %s452 = sld [smem:[#allocation11 + $0x1]]
        %v453 = vstv %s452
        %v454 = vmul.f32 %v434, %v453
        %v455 = vmul.f32 %v435, %v453
        %s456 = sld [smem:[#allocation11 + $0x11]]
        %v457 = vstv %s456
        %v458 = vadd.f32 %v454, %v457
        %v459 = vadd.f32 %v455, %v457
        %v460 = vmax.f32 %v458, 0.0
        %v461 = vmax.f32 %v459, 0.0
        %s462 = sld [smem:[#allocation11 + $0x21]]
        %v463 = vstv %s462
        %v464 = vmul.f32 %v460, %v463
        %v465 = vmul.f32 %v461, %v463
        %v466 = vadd.f32 %v450, %v464
        %v467 = vadd.f32 %v451, %v465
        %s468 = sld [smem:[#allocation11 + $0x2]]
        %v469 = vstv %s468
        %v470 = vmul.f32 %v434, %v469
        %v471 = vmul.f32 %v435, %v469
        %s472 = sld [smem:[#allocation11 + $0x12]]
        %v473 = vstv %s472
        %v474 = vadd.f32 %v470, %v473
        %v475 = vadd.f32 %v471, %v473
        %v476 = vmax.f32 %v474, 0.0
        %v477 = vmax.f32 %v475, 0.0
        %s478 = sld [smem:[#allocation11 + $0x22]]
        %v479 = vstv %s478
        %v480 = vmul.f32 %v476, %v479
        %v481 = vmul.f32 %v477, %v479
        %v482 = vadd.f32 %v466, %v480
        %v483 = vadd.f32 %v467, %v481
        %s484 = sld [smem:[#allocation11 + $0x3]]
        %v485 = vstv %s484
        %v486 = vmul.f32 %v434, %v485
        %v487 = vmul.f32 %v435, %v485
        %s488 = sld [smem:[#allocation11 + $0x13]]
        %v489 = vstv %s488
        %v490 = vadd.f32 %v486, %v489
        %v491 = vadd.f32 %v487, %v489
        %v492 = vmax.f32 %v490, 0.0
        %v493 = vmax.f32 %v491, 0.0
        %s494 = sld [smem:[#allocation11 + $0x23]]
        %v495 = vstv %s494
        %v496 = vmul.f32 %v492, %v495
        %v497 = vmul.f32 %v493, %v495
        %v498 = vadd.f32 %v482, %v496
        %v499 = vadd.f32 %v483, %v497
        %s500 = sld [smem:[#allocation11 + $0x4]]
        %v501 = vstv %s500
        %v502 = vmul.f32 %v434, %v501
        %v503 = vmul.f32 %v435, %v501
        %s504 = sld [smem:[#allocation11 + $0x14]]
        %v505 = vstv %s504
        %v506 = vadd.f32 %v502, %v505
        %v507 = vadd.f32 %v503, %v505
        %v508 = vmax.f32 %v506, 0.0
        %v509 = vmax.f32 %v507, 0.0
        %s510 = sld [smem:[#allocation11 + $0x24]]
        %v511 = vstv %s510
        %v512 = vmul.f32 %v508, %v511
        %v513 = vmul.f32 %v509, %v511
        %v514 = vadd.f32 %v498, %v512
        %v515 = vadd.f32 %v499, %v513
        %s516 = sld [smem:[#allocation11 + $0x5]]
        %v517 = vstv %s516
        %v518 = vmul.f32 %v434, %v517
        %v519 = vmul.f32 %v435, %v517
        %s520 = sld [smem:[#allocation11 + $0x15]]
        %v521 = vstv %s520
        %v522 = vadd.f32 %v518, %v521
        %v523 = vadd.f32 %v519, %v521
        %v524 = vmax.f32 %v522, 0.0
        %v525 = vmax.f32 %v523, 0.0
        %s526 = sld [smem:[#allocation11 + $0x25]]
        %v527 = vstv %s526
        %v528 = vmul.f32 %v524, %v527
        %v529 = vmul.f32 %v525, %v527
        %v530 = vadd.f32 %v514, %v528
        %v531 = vadd.f32 %v515, %v529
        %s532 = sld [smem:[#allocation11 + $0x6]]
        %v533 = vstv %s532
        %v534 = vmul.f32 %v434, %v533
        %v535 = vmul.f32 %v435, %v533
        %s536 = sld [smem:[#allocation11 + $0x16]]
        %v537 = vstv %s536
        %v538 = vadd.f32 %v534, %v537
        %v539 = vadd.f32 %v535, %v537
        %v540 = vmax.f32 %v538, 0.0
        %v541 = vmax.f32 %v539, 0.0
        %s542 = sld [smem:[#allocation11 + $0x26]]
        %v543 = vstv %s542
        %v544 = vmul.f32 %v540, %v543
        %v545 = vmul.f32 %v541, %v543
        %v546 = vadd.f32 %v530, %v544
        %v547 = vadd.f32 %v531, %v545
        %s548 = sld [smem:[#allocation11 + $0x7]]
        %v549 = vstv %s548
        %v550 = vmul.f32 %v434, %v549
        %v551 = vmul.f32 %v435, %v549
        %s552 = sld [smem:[#allocation11 + $0x17]]
        %v553 = vstv %s552
        %v554 = vadd.f32 %v550, %v553
        %v555 = vadd.f32 %v551, %v553
        %v556 = vmax.f32 %v554, 0.0
        %v557 = vmax.f32 %v555, 0.0
        %s558 = sld [smem:[#allocation11 + $0x27]]
        %v559 = vstv %s558
        %v560 = vmul.f32 %v556, %v559
        %v561 = vmul.f32 %v557, %v559
        %v562 = vadd.f32 %v546, %v560
        %v563 = vadd.f32 %v547, %v561
        %s564 = sld [smem:[#allocation11 + $0x8]]
        %v565 = vstv %s564
        %v566 = vmul.f32 %v434, %v565
        %v567 = vmul.f32 %v435, %v565
        %s568 = sld [smem:[#allocation11 + $0x18]]
        %v569 = vstv %s568
        %v570 = vadd.f32 %v566, %v569
        %v571 = vadd.f32 %v567, %v569
        %v572 = vmax.f32 %v570, 0.0
        %v573 = vmax.f32 %v571, 0.0
        %s574 = sld [smem:[#allocation11 + $0x28]]
        %v575 = vstv %s574
        %v576 = vmul.f32 %v572, %v575
        %v577 = vmul.f32 %v573, %v575
        %v578 = vadd.f32 %v562, %v576
        %v579 = vadd.f32 %v563, %v577
        %s580 = sld [smem:[#allocation11 + $0x9]]
        %v581 = vstv %s580
        %v582 = vmul.f32 %v434, %v581
        %v583 = vmul.f32 %v435, %v581
        %s584 = sld [smem:[#allocation11 + $0x19]]
        %v585 = vstv %s584
        %v586 = vadd.f32 %v582, %v585
        %v587 = vadd.f32 %v583, %v585
        %v588 = vmax.f32 %v586, 0.0
        %v589 = vmax.f32 %v587, 0.0
        %s590 = sld [smem:[#allocation11 + $0x29]]
        %v591 = vstv %s590
        %v592 = vmul.f32 %v588, %v591
        %v593 = vmul.f32 %v589, %v591
        %v594 = vadd.f32 %v578, %v592
        %v595 = vadd.f32 %v579, %v593
        %s596 = sld [smem:[#allocation11 + $0xa]]
        %v597 = vstv %s596
        %v598 = vmul.f32 %v434, %v597
        %v599 = vmul.f32 %v435, %v597
        %s600 = sld [smem:[#allocation11 + $0x1a]]
        %v601 = vstv %s600
        %v602 = vadd.f32 %v598, %v601
        %v603 = vadd.f32 %v599, %v601
        %v604 = vmax.f32 %v602, 0.0
        %v605 = vmax.f32 %v603, 0.0
        %s606 = sld [smem:[#allocation11 + $0x2a]]
        %v607 = vstv %s606
        %v608 = vmul.f32 %v604, %v607
        %v609 = vmul.f32 %v605, %v607
        %v610 = vadd.f32 %v594, %v608
        %v611 = vadd.f32 %v595, %v609
        %s612 = sld [smem:[#allocation11 + $0xb]]
        %v613 = vstv %s612
        %v614 = vmul.f32 %v434, %v613
        %v615 = vmul.f32 %v435, %v613
        %s616 = sld [smem:[#allocation11 + $0x1b]]
        %v617 = vstv %s616
        %v618 = vadd.f32 %v614, %v617
        %v619 = vadd.f32 %v615, %v617
        %v620 = vmax.f32 %v618, 0.0
        %v621 = vmax.f32 %v619, 0.0
        %s622 = sld [smem:[#allocation11 + $0x2b]]
        %v623 = vstv %s622
        %v624 = vmul.f32 %v620, %v623
        %v625 = vmul.f32 %v621, %v623
        %v626 = vadd.f32 %v610, %v624
        %v627 = vadd.f32 %v611, %v625
        %s628 = sld [smem:[#allocation11 + $0xc]]
        %v629 = vstv %s628
        %v630 = vmul.f32 %v434, %v629
        %v631 = vmul.f32 %v435, %v629
        %s632 = sld [smem:[#allocation11 + $0x1c]]
        %v633 = vstv %s632
        %v634 = vadd.f32 %v630, %v633
        %v635 = vadd.f32 %v631, %v633
        %v636 = vmax.f32 %v634, 0.0
        %v637 = vmax.f32 %v635, 0.0
        %s638 = sld [smem:[#allocation11 + $0x2c]]
        %v639 = vstv %s638
        %v640 = vmul.f32 %v636, %v639
        %v641 = vmul.f32 %v637, %v639
        %v642 = vadd.f32 %v626, %v640
        %v643 = vadd.f32 %v627, %v641
        %s644 = sld [smem:[#allocation11 + $0xd]]
        %v645 = vstv %s644
        %v646 = vmul.f32 %v434, %v645
        %v647 = vmul.f32 %v435, %v645
        %s648 = sld [smem:[#allocation11 + $0x1d]]
        %v649 = vstv %s648
        %v650 = vadd.f32 %v646, %v649
        %v651 = vadd.f32 %v647, %v649
        %v652 = vmax.f32 %v650, 0.0
        %v653 = vmax.f32 %v651, 0.0
        %s654 = sld [smem:[#allocation11 + $0x2d]]
        %v655 = vstv %s654
        %v656 = vmul.f32 %v652, %v655
        %v657 = vmul.f32 %v653, %v655
        %v658 = vadd.f32 %v642, %v656
        %v659 = vadd.f32 %v643, %v657
        %s660 = sld [smem:[#allocation11 + $0xe]]
        %v661 = vstv %s660
        %v662 = vmul.f32 %v434, %v661
        %v663 = vmul.f32 %v435, %v661
        %s664 = sld [smem:[#allocation11 + $0x1e]]
        %v665 = vstv %s664
        %v666 = vadd.f32 %v662, %v665
        %v667 = vadd.f32 %v663, %v665
        %v668 = vmax.f32 %v666, 0.0
        %v669 = vmax.f32 %v667, 0.0
        %s670 = sld [smem:[#allocation11 + $0x2e]]
        %v671 = vstv %s670
        %v672 = vmul.f32 %v668, %v671
        %v673 = vmul.f32 %v669, %v671
        %v674 = vadd.f32 %v658, %v672
        %v675 = vadd.f32 %v659, %v673
        %s676 = sld [smem:[#allocation11 + $0xf]]
        %v677 = vstv %s676
        %v678 = vmul.f32 %v434, %v677
        %v679 = vmul.f32 %v435, %v677
        %s680 = sld [smem:[#allocation11 + $0x1f]]
        %v681 = vstv %s680
        %v682 = vadd.f32 %v678, %v681
        %v683 = vadd.f32 %v679, %v681
        %v684 = vmax.f32 %v682, 0.0
        %v685 = vmax.f32 %v683, 0.0
        %s686 = sld [smem:[#allocation11 + $0x2f]]
        %v687 = vstv %s686
        %v688 = vmul.f32 %v684, %v687
        %v689 = vmul.f32 %v685, %v687
        %v690 = vadd.f32 %v674, %v688
        %v691 = vadd.f32 %v675, %v689
        %s692 = sld [smem:[#allocation11 + $0x30]]
        %v693 = vstv %s692
        %v694 = vadd.f32 %v690, %v693
        %v695 = vadd.f32 %v691, %v693
        %v696 = vxor.u32 %v694, 2147483648
        %v697 = vxor.u32 %v695, 2147483648
        %v698 = vmul.f32 %v696, 1.442695
        %v699 = vpow.pop %v698
        %v700 = vmul.f32 %v697, 1.442695
        %v701 = vpow.pop %v700
        %v702 = vadd.f32 %v699, 1.0
        %v703 = vadd.f32 %v701, 1.0
        %v704 = vrcp.pop %v702
        %v705 = vmul.f32 1.0, %v704
        %v706 = vrcp.pop %v703
        %v707 = vmul.f32 1.0, %v706
        %v708 = vld [vmem:[%s3] sm:$0xff]
        %v709 = vld [vmem:[%s3 + $0x8] sm:$0xff]
        %v710 = vld [vmem:[%s3 + $0x10] sm:$0xff]
        %v711 = vld [vmem:[%s3 + $0x18] sm:$0xff]
        %v712 = vld [vmem:[%s357] sm:$0xff]
        %v713 = vld [vmem:[%s357 + $0x8] sm:$0xff]
        %s714 = scalar_lea.vmem %s357, 16 [#allocation8]
        %v715 = vld [vmem:[%s714] sm:$0xff]
        %v716 = vld [vmem:[%s714 + $0x8] sm:$0xff]
        %s717 = scalar_lea.vmem %s357, 32 [#allocation8]
        %v718 = vld [vmem:[%s717] sm:$0xff]
        %v719 = vld [vmem:[%s717 + $0x8] sm:$0xff]
        %v720 = vlaneseq
        %v721 = vshrl.u32 %v720, 7
        %v722 = vsub.s32 0, %v721
        %v723 = vrot.slane %v712, %v722
        %v724 = vlaneseq
        %v725 = vshrl.u32 %v724, 7
        %v726 = vsub.s32 0, %v725
        %v727 = vrot.slane %v713, %v726
        %729 = vset.pattern.permute.xlu0 0
        %730 = vperm.xlu0 %729, %v708
        %v731 = vpop.permute.xlu0 %730
        %734 = vset.pattern.permute.xlu0 0
        %735 = vperm.xlu0 %734, %v709
        %v736 = vpop.permute.xlu0 %735
        %739 = vset.pattern.permute.xlu0 0
        %740 = vperm.xlu0 %739, %v710
        %v741 = vpop.permute.xlu0 %740
        %744 = vset.pattern.permute.xlu0 0
        %745 = vperm.xlu0 %744, %v711
        %v746 = vpop.permute.xlu0 %745
        %v748 = vmul.f32 %v723, %v731
        %v749 = vmul.f32 %v727, %v731
        %v750 = vmul.f32 %v723, %v736
        %v751 = vmul.f32 %v727, %v736
        %v752 = vmul.f32 %v723, %v741
        %v753 = vmul.f32 %v727, %v741
        %v754 = vmul.f32 %v723, %v746
        %v755 = vmul.f32 %v727, %v746
        %v756 = vlaneseq
        %v757 = vshrl.u32 %v756, 7
        %v758 = vsub.s32 0, %v757
        %v759 = vrot.slane %v715, %v758
        %v760 = vlaneseq
        %v761 = vshrl.u32 %v760, 7
        %v762 = vsub.s32 0, %v761
        %v763 = vrot.slane %v716, %v762
        %764 = vset.pattern.permute.xlu0 1
        %765 = vperm.xlu0 %764, %v708
        %v766 = vpop.permute.xlu0 %765
        %768 = vset.pattern.permute.xlu0 1
        %769 = vperm.xlu0 %768, %v709
        %v770 = vpop.permute.xlu0 %769
        %772 = vset.pattern.permute.xlu0 1
        %773 = vperm.xlu0 %772, %v710
        %v774 = vpop.permute.xlu0 %773
        %776 = vset.pattern.permute.xlu0 1
        %777 = vperm.xlu0 %776, %v711
        %v778 = vpop.permute.xlu0 %777
        %v780 = vmul.f32 %v759, %v766
        %v781 = vmul.f32 %v763, %v766
        %v782 = vmul.f32 %v759, %v770
        %v783 = vmul.f32 %v763, %v770
        %v784 = vmul.f32 %v759, %v774
        %v785 = vmul.f32 %v763, %v774
        %v786 = vmul.f32 %v759, %v778
        %v787 = vmul.f32 %v763, %v778
        %v788 = vadd.f32 %v748, %v780
        %v789 = vadd.f32 %v749, %v781
        %v790 = vadd.f32 %v750, %v782
        %v791 = vadd.f32 %v751, %v783
        %v792 = vadd.f32 %v752, %v784
        %v793 = vadd.f32 %v753, %v785
        %v794 = vadd.f32 %v754, %v786
        %v795 = vadd.f32 %v755, %v787
        %v796 = vlaneseq
        %v797 = vshrl.u32 %v796, 7
        %v798 = vsub.s32 0, %v797
        %v799 = vrot.slane %v718, %v798
        %v800 = vlaneseq
        %v801 = vshrl.u32 %v800, 7
        %v802 = vsub.s32 0, %v801
        %v803 = vrot.slane %v719, %v802
        %804 = vset.pattern.permute.xlu0 2
        %805 = vperm.xlu0 %804, %v708
        %v806 = vpop.permute.xlu0 %805
        %808 = vset.pattern.permute.xlu0 2
        %809 = vperm.xlu0 %808, %v709
        %v810 = vpop.permute.xlu0 %809
        %812 = vset.pattern.permute.xlu0 2
        %813 = vperm.xlu0 %812, %v710
        %v814 = vpop.permute.xlu0 %813
        %816 = vset.pattern.permute.xlu0 2
        %817 = vperm.xlu0 %816, %v711
        %v818 = vpop.permute.xlu0 %817
        %v820 = vmul.f32 %v799, %v806
        %v821 = vmul.f32 %v803, %v806
        %v822 = vmul.f32 %v799, %v810
        %v823 = vmul.f32 %v803, %v810
        %v824 = vmul.f32 %v799, %v814
        %v825 = vmul.f32 %v803, %v814
        %v826 = vmul.f32 %v799, %v818
        %v827 = vmul.f32 %v803, %v818
        %v828 = vadd.f32 %v788, %v820
        %v829 = vadd.f32 %v789, %v821
        %v830 = vadd.f32 %v790, %v822
        %v831 = vadd.f32 %v791, %v823
        %v832 = vadd.f32 %v792, %v824
        %v833 = vadd.f32 %v793, %v825
        %v834 = vadd.f32 %v794, %v826
        %v835 = vadd.f32 %v795, %v827
        %836 = vset.pattern.permute.xlu0 3
        %837 = vperm.xlu0 %836, %v708
        %v838 = vpop.permute.xlu0 %837
        %840 = vset.pattern.permute.xlu0 3
        %841 = vperm.xlu0 %840, %v709
        %v842 = vpop.permute.xlu0 %841
        %844 = vset.pattern.permute.xlu0 3
        %845 = vperm.xlu0 %844, %v710
        %v846 = vpop.permute.xlu0 %845
        %848 = vset.pattern.permute.xlu0 3
        %849 = vperm.xlu0 %848, %v711
        %v850 = vpop.permute.xlu0 %849
        %v852 = vadd.f32 %v828, %v838
        %v853 = vadd.f32 %v829, %v838
        %v854 = vadd.f32 %v830, %v842
        %v855 = vadd.f32 %v831, %v842
        %v856 = vadd.f32 %v832, %v846
        %v857 = vadd.f32 %v833, %v846
        %v858 = vadd.f32 %v834, %v850
        %v859 = vadd.f32 %v835, %v850
        %v860 = vmax.f32 %v852, 0.0
        %v861 = vmax.f32 %v853, 0.0
        %v862 = vmax.f32 %v854, 0.0
        %v863 = vmax.f32 %v855, 0.0
        %v864 = vmax.f32 %v856, 0.0
        %v865 = vmax.f32 %v857, 0.0
        %v866 = vmax.f32 %v858, 0.0
        %v867 = vmax.f32 %v859, 0.0
        %868 = vst [vmem:[#allocation2] sm:$0xff] %v860
        %869 = vst [vmem:[#allocation2 + $0x8] sm:$0xff] %v861
        %870 = vst [vmem:[#allocation2 + $0x10] sm:$0xff] %v862
        %871 = vst [vmem:[#allocation2 + $0x18] sm:$0xff] %v863
        %872 = vst [vmem:[#allocation2 + $0x20] sm:$0xff] %v864
        %873 = vst [vmem:[#allocation2 + $0x28] sm:$0xff] %v865
        %874 = vst [vmem:[#allocation2 + $0x30] sm:$0xff] %v866
        %875 = vst [vmem:[#allocation2 + $0x38] sm:$0xff] %v867
        %v876 = vlaneseq
        %v877 = vshrl.u32 %v876, 7
        %v878 = vsub.s32 1, %v877
        %v879 = vrot.slane %v712, %v878
        %v880 = vlaneseq
        %v881 = vshrl.u32 %v880, 7
        %v882 = vsub.s32 1, %v881
        %v883 = vrot.slane %v713, %v882
        %v884 = vmul.f32 %v879, %v731
        %v885 = vmul.f32 %v883, %v731
        %v886 = vmul.f32 %v879, %v736
        %v887 = vmul.f32 %v883, %v736
        %v888 = vmul.f32 %v879, %v741
        %v889 = vmul.f32 %v883, %v741
        %v890 = vmul.f32 %v879, %v746
        %v891 = vmul.f32 %v883, %v746
        %v892 = vlaneseq
        %v893 = vshrl.u32 %v892, 7
        %v894 = vsub.s32 1, %v893
        %v895 = vrot.slane %v715, %v894
        %v896 = vlaneseq
        %v897 = vshrl.u32 %v896, 7
        %v898 = vsub.s32 1, %v897
        %v899 = vrot.slane %v716, %v898
        %v900 = vmul.f32 %v895, %v766
        %v901 = vmul.f32 %v899, %v766
        %v902 = vmul.f32 %v895, %v770
        %v903 = vmul.f32 %v899, %v770
        %v904 = vmul.f32 %v895, %v774
        %v905 = vmul.f32 %v899, %v774
        %v906 = vmul.f32 %v895, %v778
        %v907 = vmul.f32 %v899, %v778
        %v908 = vadd.f32 %v884, %v900
        %v909 = vadd.f32 %v885, %v901
        %v910 = vadd.f32 %v886, %v902
        %v911 = vadd.f32 %v887, %v903
        %v912 = vadd.f32 %v888, %v904
        %v913 = vadd.f32 %v889, %v905
        %v914 = vadd.f32 %v890, %v906
        %v915 = vadd.f32 %v891, %v907
        %v916 = vlaneseq
        %v917 = vshrl.u32 %v916, 7
        %v918 = vsub.s32 1, %v917
        %v919 = vrot.slane %v718, %v918
        %v920 = vlaneseq
        %v921 = vshrl.u32 %v920, 7
        %v922 = vsub.s32 1, %v921
        %v923 = vrot.slane %v719, %v922
        %v924 = vmul.f32 %v919, %v806
        %v925 = vmul.f32 %v923, %v806
        %v926 = vmul.f32 %v919, %v810
        %v927 = vmul.f32 %v923, %v810
        %v928 = vmul.f32 %v919, %v814
        %v929 = vmul.f32 %v923, %v814
        %v930 = vmul.f32 %v919, %v818
        %v931 = vmul.f32 %v923, %v818
        %v932 = vadd.f32 %v908, %v924
        %v933 = vadd.f32 %v909, %v925
        %v934 = vadd.f32 %v910, %v926
        %v935 = vadd.f32 %v911, %v927
        %v936 = vadd.f32 %v912, %v928
        %v937 = vadd.f32 %v913, %v929
        %v938 = vadd.f32 %v914, %v930
        %v939 = vadd.f32 %v915, %v931
        %v940 = vadd.f32 %v932, %v838
        %v941 = vadd.f32 %v933, %v838
        %v942 = vadd.f32 %v934, %v842
        %v943 = vadd.f32 %v935, %v842
        %v944 = vadd.f32 %v936, %v846
        %v945 = vadd.f32 %v937, %v846
        %v946 = vadd.f32 %v938, %v850
        %v947 = vadd.f32 %v939, %v850
        %v948 = vmax.f32 %v940, 0.0
        %v949 = vmax.f32 %v941, 0.0
        %v950 = vmax.f32 %v942, 0.0
        %v951 = vmax.f32 %v943, 0.0
        %v952 = vmax.f32 %v944, 0.0
        %v953 = vmax.f32 %v945, 0.0
        %v954 = vmax.f32 %v946, 0.0
        %v955 = vmax.f32 %v947, 0.0
        %s956 = scalar_lea.vmem [#allocation2], 64
        %957 = vst [vmem:[%s956] sm:$0xff] %v948
        %958 = vst [vmem:[%s956 + $0x8] sm:$0xff] %v949
        %959 = vst [vmem:[%s956 + $0x10] sm:$0xff] %v950
        %960 = vst [vmem:[%s956 + $0x18] sm:$0xff] %v951
        %961 = vst [vmem:[%s956 + $0x20] sm:$0xff] %v952
        %962 = vst [vmem:[%s956 + $0x28] sm:$0xff] %v953
        %963 = vst [vmem:[%s956 + $0x30] sm:$0xff] %v954
        %964 = vst [vmem:[%s956 + $0x38] sm:$0xff] %v955
        %v965 = vlaneseq
        %v966 = vshrl.u32 %v965, 7
        %v967 = vsub.s32 2, %v966
        %v968 = vrot.slane %v712, %v967
        %v969 = vlaneseq
        %v970 = vshrl.u32 %v969, 7
        %v971 = vsub.s32 2, %v970
        %v972 = vrot.slane %v713, %v971
        %v973 = vmul.f32 %v968, %v731
        %v974 = vmul.f32 %v972, %v731
        %v975 = vmul.f32 %v968, %v736
        %v976 = vmul.f32 %v972, %v736
        %v977 = vmul.f32 %v968, %v741
        %v978 = vmul.f32 %v972, %v741
        %v979 = vmul.f32 %v968, %v746
        %v980 = vmul.f32 %v972, %v746
        %v981 = vlaneseq
        %v982 = vshrl.u32 %v981, 7
        %v983 = vsub.s32 2, %v982
        %v984 = vrot.slane %v715, %v983
        %v985 = vlaneseq
        %v986 = vshrl.u32 %v985, 7
        %v987 = vsub.s32 2, %v986
        %v988 = vrot.slane %v716, %v987
        %v989 = vmul.f32 %v984, %v766
        %v990 = vmul.f32 %v988, %v766
        %v991 = vmul.f32 %v984, %v770
        %v992 = vmul.f32 %v988, %v770
        %v993 = vmul.f32 %v984, %v774
        %v994 = vmul.f32 %v988, %v774
        %v995 = vmul.f32 %v984, %v778
        %v996 = vmul.f32 %v988, %v778
        %v997 = vadd.f32 %v973, %v989
        %v998 = vadd.f32 %v974, %v990
        %v999 = vadd.f32 %v975, %v991
        %v1000 = vadd.f32 %v976, %v992
        %v1001 = vadd.f32 %v977, %v993
        %v1002 = vadd.f32 %v978, %v994
        %v1003 = vadd.f32 %v979, %v995
        %v1004 = vadd.f32 %v980, %v996
        %v1005 = vlaneseq
        %v1006 = vshrl.u32 %v1005, 7
        %v1007 = vsub.s32 2, %v1006
        %v1008 = vrot.slane %v718, %v1007
        %v1009 = vlaneseq
        %v1010 = vshrl.u32 %v1009, 7
        %v1011 = vsub.s32 2, %v1010
        %v1012 = vrot.slane %v719, %v1011
        %v1013 = vmul.f32 %v1008, %v806
        %v1014 = vmul.f32 %v1012, %v806
        %v1015 = vmul.f32 %v1008, %v810
        %v1016 = vmul.f32 %v1012, %v810
        %v1017 = vmul.f32 %v1008, %v814
        %v1018 = vmul.f32 %v1012, %v814
        %v1019 = vmul.f32 %v1008, %v818
        %v1020 = vmul.f32 %v1012, %v818
        %v1021 = vadd.f32 %v997, %v1013
        %v1022 = vadd.f32 %v998, %v1014
        %v1023 = vadd.f32 %v999, %v1015
        %v1024 = vadd.f32 %v1000, %v1016
        %v1025 = vadd.f32 %v1001, %v1017
        %v1026 = vadd.f32 %v1002, %v1018
        %v1027 = vadd.f32 %v1003, %v1019
        %v1028 = vadd.f32 %v1004, %v1020
        %v1029 = vadd.f32 %v1021, %v838
        %v1030 = vadd.f32 %v1022, %v838
        %v1031 = vadd.f32 %v1023, %v842
        %v1032 = vadd.f32 %v1024, %v842
        %v1033 = vadd.f32 %v1025, %v846
        %v1034 = vadd.f32 %v1026, %v846
        %v1035 = vadd.f32 %v1027, %v850
        %v1036 = vadd.f32 %v1028, %v850
        %v1037 = vmax.f32 %v1029, 0.0
        %v1038 = vmax.f32 %v1030, 0.0
        %v1039 = vmax.f32 %v1031, 0.0
        %v1040 = vmax.f32 %v1032, 0.0
        %v1041 = vmax.f32 %v1033, 0.0
        %v1042 = vmax.f32 %v1034, 0.0
        %v1043 = vmax.f32 %v1035, 0.0
        %v1044 = vmax.f32 %v1036, 0.0
        %s1045 = scalar_lea.vmem [#allocation2], 128
        %1046 = vst [vmem:[%s1045] sm:$0xff] %v1037
        %1047 = vst [vmem:[%s1045 + $0x8] sm:$0xff] %v1038
        %1048 = vst [vmem:[%s1045 + $0x10] sm:$0xff] %v1039
        %1049 = vst [vmem:[%s1045 + $0x18] sm:$0xff] %v1040
        %1050 = vst [vmem:[%s1045 + $0x20] sm:$0xff] %v1041
        %1051 = vst [vmem:[%s1045 + $0x28] sm:$0xff] %v1042
        %1052 = vst [vmem:[%s1045 + $0x30] sm:$0xff] %v1043
        %1053 = vst [vmem:[%s1045 + $0x38] sm:$0xff] %v1044
        %v1054 = vlaneseq
        %v1055 = vshrl.u32 %v1054, 7
        %v1056 = vsub.s32 3, %v1055
        %v1057 = vrot.slane %v712, %v1056
        %v1058 = vlaneseq
        %v1059 = vshrl.u32 %v1058, 7
        %v1060 = vsub.s32 3, %v1059
        %v1061 = vrot.slane %v713, %v1060
        %v1062 = vmul.f32 %v1057, %v731
        %v1063 = vmul.f32 %v1061, %v731
        %v1064 = vmul.f32 %v1057, %v736
        %v1065 = vmul.f32 %v1061, %v736
        %v1066 = vmul.f32 %v1057, %v741
        %v1067 = vmul.f32 %v1061, %v741
        %v1068 = vmul.f32 %v1057, %v746
        %v1069 = vmul.f32 %v1061, %v746
        %v1070 = vlaneseq
        %v1071 = vshrl.u32 %v1070, 7
        %v1072 = vsub.s32 3, %v1071
        %v1073 = vrot.slane %v715, %v1072
        %v1074 = vlaneseq
        %v1075 = vshrl.u32 %v1074, 7
        %v1076 = vsub.s32 3, %v1075
        %v1077 = vrot.slane %v716, %v1076
        %v1078 = vmul.f32 %v1073, %v766
        %v1079 = vmul.f32 %v1077, %v766
        %v1080 = vmul.f32 %v1073, %v770
        %v1081 = vmul.f32 %v1077, %v770
        %v1082 = vmul.f32 %v1073, %v774
        %v1083 = vmul.f32 %v1077, %v774
        %v1084 = vmul.f32 %v1073, %v778
        %v1085 = vmul.f32 %v1077, %v778
        %v1086 = vadd.f32 %v1062, %v1078
        %v1087 = vadd.f32 %v1063, %v1079
        %v1088 = vadd.f32 %v1064, %v1080
        %v1089 = vadd.f32 %v1065, %v1081
        %v1090 = vadd.f32 %v1066, %v1082
        %v1091 = vadd.f32 %v1067, %v1083
        %v1092 = vadd.f32 %v1068, %v1084
        %v1093 = vadd.f32 %v1069, %v1085
        %v1094 = vlaneseq
        %v1095 = vshrl.u32 %v1094, 7
        %v1096 = vsub.s32 3, %v1095
        %v1097 = vrot.slane %v718, %v1096
        %v1098 = vlaneseq
        %v1099 = vshrl.u32 %v1098, 7
        %v1100 = vsub.s32 3, %v1099
        %v1101 = vrot.slane %v719, %v1100
        %v1102 = vmul.f32 %v1097, %v806
        %v1103 = vmul.f32 %v1101, %v806
        %v1104 = vmul.f32 %v1097, %v810
        %v1105 = vmul.f32 %v1101, %v810
        %v1106 = vmul.f32 %v1097, %v814
        %v1107 = vmul.f32 %v1101, %v814
        %v1108 = vmul.f32 %v1097, %v818
        %v1109 = vmul.f32 %v1101, %v818
        %v1110 = vadd.f32 %v1086, %v1102
        %v1111 = vadd.f32 %v1087, %v1103
        %v1112 = vadd.f32 %v1088, %v1104
        %v1113 = vadd.f32 %v1089, %v1105
        %v1114 = vadd.f32 %v1090, %v1106
        %v1115 = vadd.f32 %v1091, %v1107
        %v1116 = vadd.f32 %v1092, %v1108
        %v1117 = vadd.f32 %v1093, %v1109
        %v1118 = vadd.f32 %v1110, %v838
        %v1119 = vadd.f32 %v1111, %v838
        %v1120 = vadd.f32 %v1112, %v842
        %v1121 = vadd.f32 %v1113, %v842
        %v1122 = vadd.f32 %v1114, %v846
        %v1123 = vadd.f32 %v1115, %v846
        %v1124 = vadd.f32 %v1116, %v850
        %v1125 = vadd.f32 %v1117, %v850
        %v1126 = vmax.f32 %v1118, 0.0
        %v1127 = vmax.f32 %v1119, 0.0
        %v1128 = vmax.f32 %v1120, 0.0
        %v1129 = vmax.f32 %v1121, 0.0
        %v1130 = vmax.f32 %v1122, 0.0
        %v1131 = vmax.f32 %v1123, 0.0
        %v1132 = vmax.f32 %v1124, 0.0
        %v1133 = vmax.f32 %v1125, 0.0
        %s1134 = scalar_lea.vmem [#allocation2], 192
        %1135 = vst [vmem:[%s1134] sm:$0xff] %v1126
        %1136 = vst [vmem:[%s1134 + $0x8] sm:$0xff] %v1127
        %1137 = vst [vmem:[%s1134 + $0x10] sm:$0xff] %v1128
        %1138 = vst [vmem:[%s1134 + $0x18] sm:$0xff] %v1129
        %1139 = vst [vmem:[%s1134 + $0x20] sm:$0xff] %v1130
        %1140 = vst [vmem:[%s1134 + $0x28] sm:$0xff] %v1131
        %1141 = vst [vmem:[%s1134 + $0x30] sm:$0xff] %v1132
        %1142 = vst [vmem:[%s1134 + $0x38] sm:$0xff] %v1133
        %v1143 = vlaneseq
        %v1144 = vshrl.u32 %v1143, 7
        %v1145 = vsub.s32 4, %v1144
        %v1146 = vrot.slane %v712, %v1145
        %v1147 = vlaneseq
        %v1148 = vshrl.u32 %v1147, 7
        %v1149 = vsub.s32 4, %v1148
        %v1150 = vrot.slane %v713, %v1149
        %v1151 = vmul.f32 %v1146, %v731
        %v1152 = vmul.f32 %v1150, %v731
        %v1153 = vmul.f32 %v1146, %v736
        %v1154 = vmul.f32 %v1150, %v736
        %v1155 = vmul.f32 %v1146, %v741
        %v1156 = vmul.f32 %v1150, %v741
        %v1157 = vmul.f32 %v1146, %v746
        %v1158 = vmul.f32 %v1150, %v746
        %v1159 = vlaneseq
        %v1160 = vshrl.u32 %v1159, 7
        %v1161 = vsub.s32 4, %v1160
        %v1162 = vrot.slane %v715, %v1161
        %v1163 = vlaneseq
        %v1164 = vshrl.u32 %v1163, 7
        %v1165 = vsub.s32 4, %v1164
        %v1166 = vrot.slane %v716, %v1165
        %v1167 = vmul.f32 %v1162, %v766
        %v1168 = vmul.f32 %v1166, %v766
        %v1169 = vmul.f32 %v1162, %v770
        %v1170 = vmul.f32 %v1166, %v770
        %v1171 = vmul.f32 %v1162, %v774
        %v1172 = vmul.f32 %v1166, %v774
        %v1173 = vmul.f32 %v1162, %v778
        %v1174 = vmul.f32 %v1166, %v778
        %v1175 = vadd.f32 %v1151, %v1167
        %v1176 = vadd.f32 %v1152, %v1168
        %v1177 = vadd.f32 %v1153, %v1169
        %v1178 = vadd.f32 %v1154, %v1170
        %v1179 = vadd.f32 %v1155, %v1171
        %v1180 = vadd.f32 %v1156, %v1172
        %v1181 = vadd.f32 %v1157, %v1173
        %v1182 = vadd.f32 %v1158, %v1174
        %v1183 = vlaneseq
        %v1184 = vshrl.u32 %v1183, 7
        %v1185 = vsub.s32 4, %v1184
        %v1186 = vrot.slane %v718, %v1185
        %v1187 = vlaneseq
        %v1188 = vshrl.u32 %v1187, 7
        %v1189 = vsub.s32 4, %v1188
        %v1190 = vrot.slane %v719, %v1189
        %v1191 = vmul.f32 %v1186, %v806
        %v1192 = vmul.f32 %v1190, %v806
        %v1193 = vmul.f32 %v1186, %v810
        %v1194 = vmul.f32 %v1190, %v810
        %v1195 = vmul.f32 %v1186, %v814
        %v1196 = vmul.f32 %v1190, %v814
        %v1197 = vmul.f32 %v1186, %v818
        %v1198 = vmul.f32 %v1190, %v818
        %v1199 = vadd.f32 %v1175, %v1191
        %v1200 = vadd.f32 %v1176, %v1192
        %v1201 = vadd.f32 %v1177, %v1193
        %v1202 = vadd.f32 %v1178, %v1194
        %v1203 = vadd.f32 %v1179, %v1195
        %v1204 = vadd.f32 %v1180, %v1196
        %v1205 = vadd.f32 %v1181, %v1197
        %v1206 = vadd.f32 %v1182, %v1198
        %v1207 = vadd.f32 %v1199, %v838
        %v1208 = vadd.f32 %v1200, %v838
        %v1209 = vadd.f32 %v1201, %v842
        %v1210 = vadd.f32 %v1202, %v842
        %v1211 = vadd.f32 %v1203, %v846
        %v1212 = vadd.f32 %v1204, %v846
        %v1213 = vadd.f32 %v1205, %v850
        %v1214 = vadd.f32 %v1206, %v850
        %v1215 = vmax.f32 %v1207, 0.0
        %v1216 = vmax.f32 %v1208, 0.0
        %v1217 = vmax.f32 %v1209, 0.0
        %v1218 = vmax.f32 %v1210, 0.0
        %v1219 = vmax.f32 %v1211, 0.0
        %v1220 = vmax.f32 %v1212, 0.0
        %v1221 = vmax.f32 %v1213, 0.0
        %v1222 = vmax.f32 %v1214, 0.0
        %s1223 = scalar_lea.vmem [#allocation2], 256
        %1224 = vst [vmem:[%s1223] sm:$0xff] %v1215
        %1225 = vst [vmem:[%s1223 + $0x8] sm:$0xff] %v1216
        %1226 = vst [vmem:[%s1223 + $0x10] sm:$0xff] %v1217
        %1227 = vst [vmem:[%s1223 + $0x18] sm:$0xff] %v1218
        %1228 = vst [vmem:[%s1223 + $0x20] sm:$0xff] %v1219
        %1229 = vst [vmem:[%s1223 + $0x28] sm:$0xff] %v1220
        %1230 = vst [vmem:[%s1223 + $0x30] sm:$0xff] %v1221
        %1231 = vst [vmem:[%s1223 + $0x38] sm:$0xff] %v1222
        %v1232 = vlaneseq
        %v1233 = vshrl.u32 %v1232, 7
        %v1234 = vsub.s32 5, %v1233
        %v1235 = vrot.slane %v712, %v1234
        %v1236 = vlaneseq
        %v1237 = vshrl.u32 %v1236, 7
        %v1238 = vsub.s32 5, %v1237
        %v1239 = vrot.slane %v713, %v1238
        %v1240 = vmul.f32 %v1235, %v731
        %v1241 = vmul.f32 %v1239, %v731
        %v1242 = vmul.f32 %v1235, %v736
        %v1243 = vmul.f32 %v1239, %v736
        %v1244 = vmul.f32 %v1235, %v741
        %v1245 = vmul.f32 %v1239, %v741
        %v1246 = vmul.f32 %v1235, %v746
        %v1247 = vmul.f32 %v1239, %v746
        %v1248 = vlaneseq
        %v1249 = vshrl.u32 %v1248, 7
        %v1250 = vsub.s32 5, %v1249
        %v1251 = vrot.slane %v715, %v1250
        %v1252 = vlaneseq
        %v1253 = vshrl.u32 %v1252, 7
        %v1254 = vsub.s32 5, %v1253
        %v1255 = vrot.slane %v716, %v1254
        %v1256 = vmul.f32 %v1251, %v766
        %v1257 = vmul.f32 %v1255, %v766
        %v1258 = vmul.f32 %v1251, %v770
        %v1259 = vmul.f32 %v1255, %v770
        %v1260 = vmul.f32 %v1251, %v774
        %v1261 = vmul.f32 %v1255, %v774
        %v1262 = vmul.f32 %v1251, %v778
        %v1263 = vmul.f32 %v1255, %v778
        %v1264 = vadd.f32 %v1240, %v1256
        %v1265 = vadd.f32 %v1241, %v1257
        %v1266 = vadd.f32 %v1242, %v1258
        %v1267 = vadd.f32 %v1243, %v1259
        %v1268 = vadd.f32 %v1244, %v1260
        %v1269 = vadd.f32 %v1245, %v1261
        %v1270 = vadd.f32 %v1246, %v1262
        %v1271 = vadd.f32 %v1247, %v1263
        %v1272 = vlaneseq
        %v1273 = vshrl.u32 %v1272, 7
        %v1274 = vsub.s32 5, %v1273
        %v1275 = vrot.slane %v718, %v1274
        %v1276 = vlaneseq
        %v1277 = vshrl.u32 %v1276, 7
        %v1278 = vsub.s32 5, %v1277
        %v1279 = vrot.slane %v719, %v1278
        %v1280 = vmul.f32 %v1275, %v806
        %v1281 = vmul.f32 %v1279, %v806
        %v1282 = vmul.f32 %v1275, %v810
        %v1283 = vmul.f32 %v1279, %v810
        %v1284 = vmul.f32 %v1275, %v814
        %v1285 = vmul.f32 %v1279, %v814
        %v1286 = vmul.f32 %v1275, %v818
        %v1287 = vmul.f32 %v1279, %v818
        %v1288 = vadd.f32 %v1264, %v1280
        %v1289 = vadd.f32 %v1265, %v1281
        %v1290 = vadd.f32 %v1266, %v1282
        %v1291 = vadd.f32 %v1267, %v1283
        %v1292 = vadd.f32 %v1268, %v1284
        %v1293 = vadd.f32 %v1269, %v1285
        %v1294 = vadd.f32 %v1270, %v1286
        %v1295 = vadd.f32 %v1271, %v1287
        %v1296 = vadd.f32 %v1288, %v838
        %v1297 = vadd.f32 %v1289, %v838
        %v1298 = vadd.f32 %v1290, %v842
        %v1299 = vadd.f32 %v1291, %v842
        %v1300 = vadd.f32 %v1292, %v846
        %v1301 = vadd.f32 %v1293, %v846
        %v1302 = vadd.f32 %v1294, %v850
        %v1303 = vadd.f32 %v1295, %v850
        %v1304 = vmax.f32 %v1296, 0.0
        %v1305 = vmax.f32 %v1297, 0.0
        %v1306 = vmax.f32 %v1298, 0.0
        %v1307 = vmax.f32 %v1299, 0.0
        %v1308 = vmax.f32 %v1300, 0.0
        %v1309 = vmax.f32 %v1301, 0.0
        %v1310 = vmax.f32 %v1302, 0.0
        %v1311 = vmax.f32 %v1303, 0.0
        %s1312 = scalar_lea.vmem [#allocation2], 320
        %1313 = vst [vmem:[%s1312] sm:$0xff] %v1304
        %1314 = vst [vmem:[%s1312 + $0x8] sm:$0xff] %v1305
        %1315 = vst [vmem:[%s1312 + $0x10] sm:$0xff] %v1306
        %1316 = vst [vmem:[%s1312 + $0x18] sm:$0xff] %v1307
        %1317 = vst [vmem:[%s1312 + $0x20] sm:$0xff] %v1308
        %1318 = vst [vmem:[%s1312 + $0x28] sm:$0xff] %v1309
        %1319 = vst [vmem:[%s1312 + $0x30] sm:$0xff] %v1310
        %1320 = vst [vmem:[%s1312 + $0x38] sm:$0xff] %v1311
        %v1321 = vlaneseq
        %v1322 = vshrl.u32 %v1321, 7
        %v1323 = vsub.s32 6, %v1322
        %v1324 = vrot.slane %v712, %v1323
        %v1325 = vlaneseq
        %v1326 = vshrl.u32 %v1325, 7
        %v1327 = vsub.s32 6, %v1326
        %v1328 = vrot.slane %v713, %v1327
        %v1329 = vmul.f32 %v1324, %v731
        %v1330 = vmul.f32 %v1328, %v731
        %v1331 = vmul.f32 %v1324, %v736
        %v1332 = vmul.f32 %v1328, %v736
        %v1333 = vmul.f32 %v1324, %v741
        %v1334 = vmul.f32 %v1328, %v741
        %v1335 = vmul.f32 %v1324, %v746
        %v1336 = vmul.f32 %v1328, %v746
        %v1337 = vlaneseq
        %v1338 = vshrl.u32 %v1337, 7
        %v1339 = vsub.s32 6, %v1338
        %v1340 = vrot.slane %v715, %v1339
        %v1341 = vlaneseq
        %v1342 = vshrl.u32 %v1341, 7
        %v1343 = vsub.s32 6, %v1342
        %v1344 = vrot.slane %v716, %v1343
        %v1345 = vmul.f32 %v1340, %v766
        %v1346 = vmul.f32 %v1344, %v766
        %v1347 = vmul.f32 %v1340, %v770
        %v1348 = vmul.f32 %v1344, %v770
        %v1349 = vmul.f32 %v1340, %v774
        %v1350 = vmul.f32 %v1344, %v774
        %v1351 = vmul.f32 %v1340, %v778
        %v1352 = vmul.f32 %v1344, %v778
        %v1353 = vadd.f32 %v1329, %v1345
        %v1354 = vadd.f32 %v1330, %v1346
        %v1355 = vadd.f32 %v1331, %v1347
        %v1356 = vadd.f32 %v1332, %v1348
        %v1357 = vadd.f32 %v1333, %v1349
        %v1358 = vadd.f32 %v1334, %v1350
        %v1359 = vadd.f32 %v1335, %v1351
        %v1360 = vadd.f32 %v1336, %v1352
        %v1361 = vlaneseq
        %v1362 = vshrl.u32 %v1361, 7
        %v1363 = vsub.s32 6, %v1362
        %v1364 = vrot.slane %v718, %v1363
        %v1365 = vlaneseq
        %v1366 = vshrl.u32 %v1365, 7
        %v1367 = vsub.s32 6, %v1366
        %v1368 = vrot.slane %v719, %v1367
        %v1369 = vmul.f32 %v1364, %v806
        %v1370 = vmul.f32 %v1368, %v806
        %v1371 = vmul.f32 %v1364, %v810
        %v1372 = vmul.f32 %v1368, %v810
        %v1373 = vmul.f32 %v1364, %v814
        %v1374 = vmul.f32 %v1368, %v814
        %v1375 = vmul.f32 %v1364, %v818
        %v1376 = vmul.f32 %v1368, %v818
        %v1377 = vadd.f32 %v1353, %v1369
        %v1378 = vadd.f32 %v1354, %v1370
        %v1379 = vadd.f32 %v1355, %v1371
        %v1380 = vadd.f32 %v1356, %v1372
        %v1381 = vadd.f32 %v1357, %v1373
        %v1382 = vadd.f32 %v1358, %v1374
        %v1383 = vadd.f32 %v1359, %v1375
        %v1384 = vadd.f32 %v1360, %v1376
        %v1385 = vadd.f32 %v1377, %v838
        %v1386 = vadd.f32 %v1378, %v838
        %v1387 = vadd.f32 %v1379, %v842
        %v1388 = vadd.f32 %v1380, %v842
        %v1389 = vadd.f32 %v1381, %v846
        %v1390 = vadd.f32 %v1382, %v846
        %v1391 = vadd.f32 %v1383, %v850
        %v1392 = vadd.f32 %v1384, %v850
        %v1393 = vmax.f32 %v1385, 0.0
        %v1394 = vmax.f32 %v1386, 0.0
        %v1395 = vmax.f32 %v1387, 0.0
        %v1396 = vmax.f32 %v1388, 0.0
        %v1397 = vmax.f32 %v1389, 0.0
        %v1398 = vmax.f32 %v1390, 0.0
        %v1399 = vmax.f32 %v1391, 0.0
        %v1400 = vmax.f32 %v1392, 0.0
        %s1401 = scalar_lea.vmem [#allocation2], 384
        %1402 = vst [vmem:[%s1401] sm:$0xff] %v1393
        %1403 = vst [vmem:[%s1401 + $0x8] sm:$0xff] %v1394
        %1404 = vst [vmem:[%s1401 + $0x10] sm:$0xff] %v1395
        %1405 = vst [vmem:[%s1401 + $0x18] sm:$0xff] %v1396
        %1406 = vst [vmem:[%s1401 + $0x20] sm:$0xff] %v1397
        %1407 = vst [vmem:[%s1401 + $0x28] sm:$0xff] %v1398
        %1408 = vst [vmem:[%s1401 + $0x30] sm:$0xff] %v1399
        %1409 = vst [vmem:[%s1401 + $0x38] sm:$0xff] %v1400
        %v1410 = vlaneseq
        %v1411 = vshrl.u32 %v1410, 7
        %v1412 = vsub.s32 7, %v1411
        %v1413 = vrot.slane %v712, %v1412
        %v1414 = vlaneseq
        %v1415 = vshrl.u32 %v1414, 7
        %v1416 = vsub.s32 7, %v1415
        %v1417 = vrot.slane %v713, %v1416
        %v1418 = vmul.f32 %v1413, %v731
        %v1419 = vmul.f32 %v1417, %v731
        %v1420 = vmul.f32 %v1413, %v736
        %v1421 = vmul.f32 %v1417, %v736
        %v1422 = vmul.f32 %v1413, %v741
        %v1423 = vmul.f32 %v1417, %v741
        %v1424 = vmul.f32 %v1413, %v746
        %v1425 = vmul.f32 %v1417, %v746
        %v1426 = vlaneseq
        %v1427 = vshrl.u32 %v1426, 7
        %v1428 = vsub.s32 7, %v1427
        %v1429 = vrot.slane %v715, %v1428
        %v1430 = vlaneseq
        %v1431 = vshrl.u32 %v1430, 7
        %v1432 = vsub.s32 7, %v1431
        %v1433 = vrot.slane %v716, %v1432
        %v1434 = vmul.f32 %v1429, %v766
        %v1435 = vmul.f32 %v1433, %v766
        %v1436 = vmul.f32 %v1429, %v770
        %v1437 = vmul.f32 %v1433, %v770
        %v1438 = vmul.f32 %v1429, %v774
        %v1439 = vmul.f32 %v1433, %v774
        %v1440 = vmul.f32 %v1429, %v778
        %v1441 = vmul.f32 %v1433, %v778
        %v1442 = vadd.f32 %v1418, %v1434
        %v1443 = vadd.f32 %v1419, %v1435
        %v1444 = vadd.f32 %v1420, %v1436
        %v1445 = vadd.f32 %v1421, %v1437
        %v1446 = vadd.f32 %v1422, %v1438
        %v1447 = vadd.f32 %v1423, %v1439
        %v1448 = vadd.f32 %v1424, %v1440
        %v1449 = vadd.f32 %v1425, %v1441
        %v1450 = vlaneseq
        %v1451 = vshrl.u32 %v1450, 7
        %v1452 = vsub.s32 7, %v1451
        %v1453 = vrot.slane %v718, %v1452
        %v1454 = vlaneseq
        %v1455 = vshrl.u32 %v1454, 7
        %v1456 = vsub.s32 7, %v1455
        %v1457 = vrot.slane %v719, %v1456
        %v1458 = vmul.f32 %v1453, %v806
        %v1459 = vmul.f32 %v1457, %v806
        %v1460 = vmul.f32 %v1453, %v810
        %v1461 = vmul.f32 %v1457, %v810
        %v1462 = vmul.f32 %v1453, %v814
        %v1463 = vmul.f32 %v1457, %v814
        %v1464 = vmul.f32 %v1453, %v818
        %v1465 = vmul.f32 %v1457, %v818
        %v1466 = vadd.f32 %v1442, %v1458
        %v1467 = vadd.f32 %v1443, %v1459
        %v1468 = vadd.f32 %v1444, %v1460
        %v1469 = vadd.f32 %v1445, %v1461
        %v1470 = vadd.f32 %v1446, %v1462
        %v1471 = vadd.f32 %v1447, %v1463
        %v1472 = vadd.f32 %v1448, %v1464
        %v1473 = vadd.f32 %v1449, %v1465
        %v1474 = vadd.f32 %v1466, %v838
        %v1475 = vadd.f32 %v1467, %v838
        %v1476 = vadd.f32 %v1468, %v842
        %v1477 = vadd.f32 %v1469, %v842
        %v1478 = vadd.f32 %v1470, %v846
        %v1479 = vadd.f32 %v1471, %v846
        %v1480 = vadd.f32 %v1472, %v850
        %v1481 = vadd.f32 %v1473, %v850
        %v1482 = vmax.f32 %v1474, 0.0
        %v1483 = vmax.f32 %v1475, 0.0
        %v1484 = vmax.f32 %v1476, 0.0
        %v1485 = vmax.f32 %v1477, 0.0
        %v1486 = vmax.f32 %v1478, 0.0
        %v1487 = vmax.f32 %v1479, 0.0
        %v1488 = vmax.f32 %v1480, 0.0
        %v1489 = vmax.f32 %v1481, 0.0
        %s1490 = scalar_lea.vmem [#allocation2], 448
        %1491 = vst [vmem:[%s1490] sm:$0xff] %v1482
        %1492 = vst [vmem:[%s1490 + $0x8] sm:$0xff] %v1483
        %1493 = vst [vmem:[%s1490 + $0x10] sm:$0xff] %v1484
        %1494 = vst [vmem:[%s1490 + $0x18] sm:$0xff] %v1485
        %1495 = vst [vmem:[%s1490 + $0x20] sm:$0xff] %v1486
        %1496 = vst [vmem:[%s1490 + $0x28] sm:$0xff] %v1487
        %1497 = vst [vmem:[%s1490 + $0x30] sm:$0xff] %v1488
        %1498 = vst [vmem:[%s1490 + $0x38] sm:$0xff] %v1489
        %v1499 = vld [vmem:[%s348] sm:$0xff]
        %v1500 = vunpack.c.l.bf16 %v1499
        %v1501 = vunpack.c.h.bf16 %v1499
        %v1502 = vmul.f32 %v1500, %v705
        %v1503 = vmul.f32 %v1501, %v707
        %v1504 = vld [vmem:[#allocation2] sm:$0xff]
        %v1505 = vld [vmem:[#allocation2 + $0x8] sm:$0xff]
        %v1506 = vld [vmem:[#allocation2 + $0x10] sm:$0xff]
        %v1507 = vld [vmem:[#allocation2 + $0x18] sm:$0xff]
        %v1508 = vld [vmem:[#allocation2 + $0x20] sm:$0xff]
        %v1509 = vld [vmem:[#allocation2 + $0x28] sm:$0xff]
        %v1510 = vld [vmem:[#allocation2 + $0x30] sm:$0xff]
        %v1511 = vld [vmem:[#allocation2 + $0x38] sm:$0xff]
        %v1512 = vlaneseq
        %v1513 = vshrl.u32 %v1512, 7
        %v1514 = vsub.s32 0, %v1513
        %v1515 = vrot.slane %v1502, %v1514
        %v1516 = vlaneseq
        %v1517 = vshrl.u32 %v1516, 7
        %v1518 = vsub.s32 0, %v1517
        %v1519 = vrot.slane %v1503, %v1518
        %v1520 = vmul.f32 %v1515, %v1504
        %v1521 = vmul.f32 %v1519, %v1505
        %v1522 = vmul.f32 %v1515, %v1506
        %v1523 = vmul.f32 %v1519, %v1507
        %v1524 = vmul.f32 %v1515, %v1508
        %v1525 = vmul.f32 %v1519, %v1509
        %v1526 = vmul.f32 %v1515, %v1510
        %v1527 = vmul.f32 %v1519, %v1511
        %v1528 = vld [vmem:[%s956] sm:$0xff]
        %v1529 = vld [vmem:[%s956 + $0x8] sm:$0xff]
        %v1530 = vld [vmem:[%s956 + $0x10] sm:$0xff]
        %v1531 = vld [vmem:[%s956 + $0x18] sm:$0xff]
        %v1532 = vld [vmem:[%s956 + $0x20] sm:$0xff]
        %v1533 = vld [vmem:[%s956 + $0x28] sm:$0xff]
        %v1534 = vld [vmem:[%s956 + $0x30] sm:$0xff]
        %v1535 = vld [vmem:[%s956 + $0x38] sm:$0xff]
        %v1536 = vlaneseq
        %v1537 = vshrl.u32 %v1536, 7
        %v1538 = vsub.s32 1, %v1537
        %v1539 = vrot.slane %v1502, %v1538
        %v1540 = vlaneseq
        %v1541 = vshrl.u32 %v1540, 7
        %v1542 = vsub.s32 1, %v1541
        %v1543 = vrot.slane %v1503, %v1542
        %v1544 = vmul.f32 %v1539, %v1528
        %v1545 = vmul.f32 %v1543, %v1529
        %v1546 = vmul.f32 %v1539, %v1530
        %v1547 = vmul.f32 %v1543, %v1531
        %v1548 = vmul.f32 %v1539, %v1532
        %v1549 = vmul.f32 %v1543, %v1533
        %v1550 = vmul.f32 %v1539, %v1534
        %v1551 = vmul.f32 %v1543, %v1535
        %v1552 = vadd.f32 %v1520, %v1544
        %v1553 = vadd.f32 %v1521, %v1545
        %v1554 = vadd.f32 %v1522, %v1546
        %v1555 = vadd.f32 %v1523, %v1547
        %v1556 = vadd.f32 %v1524, %v1548
        %v1557 = vadd.f32 %v1525, %v1549
        %v1558 = vadd.f32 %v1526, %v1550
        %v1559 = vadd.f32 %v1527, %v1551
        %v1560 = vld [vmem:[%s1045] sm:$0xff]
        %v1561 = vld [vmem:[%s1045 + $0x8] sm:$0xff]
        %v1562 = vld [vmem:[%s1045 + $0x10] sm:$0xff]
        %v1563 = vld [vmem:[%s1045 + $0x18] sm:$0xff]
        %v1564 = vld [vmem:[%s1045 + $0x20] sm:$0xff]
        %v1565 = vld [vmem:[%s1045 + $0x28] sm:$0xff]
        %v1566 = vld [vmem:[%s1045 + $0x30] sm:$0xff]
        %v1567 = vld [vmem:[%s1045 + $0x38] sm:$0xff]
        %v1568 = vlaneseq
        %v1569 = vshrl.u32 %v1568, 7
        %v1570 = vsub.s32 2, %v1569
        %v1571 = vrot.slane %v1502, %v1570
        %v1572 = vlaneseq
        %v1573 = vshrl.u32 %v1572, 7
        %v1574 = vsub.s32 2, %v1573
        %v1575 = vrot.slane %v1503, %v1574
        %v1576 = vmul.f32 %v1571, %v1560
        %v1577 = vmul.f32 %v1575, %v1561
        %v1578 = vmul.f32 %v1571, %v1562
        %v1579 = vmul.f32 %v1575, %v1563
        %v1580 = vmul.f32 %v1571, %v1564
        %v1581 = vmul.f32 %v1575, %v1565
        %v1582 = vmul.f32 %v1571, %v1566
        %v1583 = vmul.f32 %v1575, %v1567
        %v1584 = vadd.f32 %v1552, %v1576
        %v1585 = vadd.f32 %v1553, %v1577
        %v1586 = vadd.f32 %v1554, %v1578
        %v1587 = vadd.f32 %v1555, %v1579
        %v1588 = vadd.f32 %v1556, %v1580
        %v1589 = vadd.f32 %v1557, %v1581
        %v1590 = vadd.f32 %v1558, %v1582
        %v1591 = vadd.f32 %v1559, %v1583
        %v1592 = vld [vmem:[%s1134] sm:$0xff]
        %v1593 = vld [vmem:[%s1134 + $0x8] sm:$0xff]
        %v1594 = vld [vmem:[%s1134 + $0x10] sm:$0xff]
        %v1595 = vld [vmem:[%s1134 + $0x18] sm:$0xff]
        %v1596 = vld [vmem:[%s1134 + $0x20] sm:$0xff]
        %v1597 = vld [vmem:[%s1134 + $0x28] sm:$0xff]
        %v1598 = vld [vmem:[%s1134 + $0x30] sm:$0xff]
        %v1599 = vld [vmem:[%s1134 + $0x38] sm:$0xff]
        %v1600 = vlaneseq
        %v1601 = vshrl.u32 %v1600, 7
        %v1602 = vsub.s32 3, %v1601
        %v1603 = vrot.slane %v1502, %v1602
        %v1604 = vlaneseq
        %v1605 = vshrl.u32 %v1604, 7
        %v1606 = vsub.s32 3, %v1605
        %v1607 = vrot.slane %v1503, %v1606
        %v1608 = vmul.f32 %v1603, %v1592
        %v1609 = vmul.f32 %v1607, %v1593
        %v1610 = vmul.f32 %v1603, %v1594
        %v1611 = vmul.f32 %v1607, %v1595
        %v1612 = vmul.f32 %v1603, %v1596
        %v1613 = vmul.f32 %v1607, %v1597
        %v1614 = vmul.f32 %v1603, %v1598
        %v1615 = vmul.f32 %v1607, %v1599
        %v1616 = vadd.f32 %v1584, %v1608
        %v1617 = vadd.f32 %v1585, %v1609
        %v1618 = vadd.f32 %v1586, %v1610
        %v1619 = vadd.f32 %v1587, %v1611
        %v1620 = vadd.f32 %v1588, %v1612
        %v1621 = vadd.f32 %v1589, %v1613
        %v1622 = vadd.f32 %v1590, %v1614
        %v1623 = vadd.f32 %v1591, %v1615
        %v1624 = vld [vmem:[%s1223] sm:$0xff]
        %v1625 = vld [vmem:[%s1223 + $0x8] sm:$0xff]
        %v1626 = vld [vmem:[%s1223 + $0x10] sm:$0xff]
        %v1627 = vld [vmem:[%s1223 + $0x18] sm:$0xff]
        %v1628 = vld [vmem:[%s1223 + $0x20] sm:$0xff]
        %v1629 = vld [vmem:[%s1223 + $0x28] sm:$0xff]
        %v1630 = vld [vmem:[%s1223 + $0x30] sm:$0xff]
        %v1631 = vld [vmem:[%s1223 + $0x38] sm:$0xff]
        %v1632 = vlaneseq
        %v1633 = vshrl.u32 %v1632, 7
        %v1634 = vsub.s32 4, %v1633
        %v1635 = vrot.slane %v1502, %v1634
        %v1636 = vlaneseq
        %v1637 = vshrl.u32 %v1636, 7
        %v1638 = vsub.s32 4, %v1637
        %v1639 = vrot.slane %v1503, %v1638
        %v1640 = vmul.f32 %v1635, %v1624
        %v1641 = vmul.f32 %v1639, %v1625
        %v1642 = vmul.f32 %v1635, %v1626
        %v1643 = vmul.f32 %v1639, %v1627
        %v1644 = vmul.f32 %v1635, %v1628
        %v1645 = vmul.f32 %v1639, %v1629
        %v1646 = vmul.f32 %v1635, %v1630
        %v1647 = vmul.f32 %v1639, %v1631
        %v1648 = vadd.f32 %v1616, %v1640
        %v1649 = vadd.f32 %v1617, %v1641
        %v1650 = vadd.f32 %v1618, %v1642
        %v1651 = vadd.f32 %v1619, %v1643
        %v1652 = vadd.f32 %v1620, %v1644
        %v1653 = vadd.f32 %v1621, %v1645
        %v1654 = vadd.f32 %v1622, %v1646
        %v1655 = vadd.f32 %v1623, %v1647
        %v1656 = vld [vmem:[%s1312] sm:$0xff]
        %v1657 = vld [vmem:[%s1312 + $0x8] sm:$0xff]
        %v1658 = vld [vmem:[%s1312 + $0x10] sm:$0xff]
        %v1659 = vld [vmem:[%s1312 + $0x18] sm:$0xff]
        %v1660 = vld [vmem:[%s1312 + $0x20] sm:$0xff]
        %v1661 = vld [vmem:[%s1312 + $0x28] sm:$0xff]
        %v1662 = vld [vmem:[%s1312 + $0x30] sm:$0xff]
        %v1663 = vld [vmem:[%s1312 + $0x38] sm:$0xff]
        %v1664 = vlaneseq
        %v1665 = vshrl.u32 %v1664, 7
        %v1666 = vsub.s32 5, %v1665
        %v1667 = vrot.slane %v1502, %v1666
        %v1668 = vlaneseq
        %v1669 = vshrl.u32 %v1668, 7
        %v1670 = vsub.s32 5, %v1669
        %v1671 = vrot.slane %v1503, %v1670
        %v1672 = vmul.f32 %v1667, %v1656
        %v1673 = vmul.f32 %v1671, %v1657
        %v1674 = vmul.f32 %v1667, %v1658
        %v1675 = vmul.f32 %v1671, %v1659
        %v1676 = vmul.f32 %v1667, %v1660
        %v1677 = vmul.f32 %v1671, %v1661
        %v1678 = vmul.f32 %v1667, %v1662
        %v1679 = vmul.f32 %v1671, %v1663
        %v1680 = vadd.f32 %v1648, %v1672
        %v1681 = vadd.f32 %v1649, %v1673
        %v1682 = vadd.f32 %v1650, %v1674
        %v1683 = vadd.f32 %v1651, %v1675
        %v1684 = vadd.f32 %v1652, %v1676
        %v1685 = vadd.f32 %v1653, %v1677
        %v1686 = vadd.f32 %v1654, %v1678
        %v1687 = vadd.f32 %v1655, %v1679
        %v1688 = vld [vmem:[%s1401] sm:$0xff]
        %v1689 = vld [vmem:[%s1401 + $0x8] sm:$0xff]
        %v1690 = vld [vmem:[%s1401 + $0x10] sm:$0xff]
        %v1691 = vld [vmem:[%s1401 + $0x18] sm:$0xff]
        %v1692 = vld [vmem:[%s1401 + $0x20] sm:$0xff]
        %v1693 = vld [vmem:[%s1401 + $0x28] sm:$0xff]
        %v1694 = vld [vmem:[%s1401 + $0x30] sm:$0xff]
        %v1695 = vld [vmem:[%s1401 + $0x38] sm:$0xff]
        %v1696 = vlaneseq
        %v1697 = vshrl.u32 %v1696, 7
        %v1698 = vsub.s32 6, %v1697
        %v1699 = vrot.slane %v1502, %v1698
        %v1700 = vlaneseq
        %v1701 = vshrl.u32 %v1700, 7
        %v1702 = vsub.s32 6, %v1701
        %v1703 = vrot.slane %v1503, %v1702
        %v1704 = vmul.f32 %v1699, %v1688
        %v1705 = vmul.f32 %v1703, %v1689
        %v1706 = vmul.f32 %v1699, %v1690
        %v1707 = vmul.f32 %v1703, %v1691
        %v1708 = vmul.f32 %v1699, %v1692
        %v1709 = vmul.f32 %v1703, %v1693
        %v1710 = vmul.f32 %v1699, %v1694
        %v1711 = vmul.f32 %v1703, %v1695
        %v1712 = vadd.f32 %v1680, %v1704
        %v1713 = vadd.f32 %v1681, %v1705
        %v1714 = vadd.f32 %v1682, %v1706
        %v1715 = vadd.f32 %v1683, %v1707
        %v1716 = vadd.f32 %v1684, %v1708
        %v1717 = vadd.f32 %v1685, %v1709
        %v1718 = vadd.f32 %v1686, %v1710
        %v1719 = vadd.f32 %v1687, %v1711
        %v1720 = vld [vmem:[%s1490] sm:$0xff]
        %v1721 = vld [vmem:[%s1490 + $0x8] sm:$0xff]
        %v1722 = vld [vmem:[%s1490 + $0x10] sm:$0xff]
        %v1723 = vld [vmem:[%s1490 + $0x18] sm:$0xff]
        %v1724 = vld [vmem:[%s1490 + $0x20] sm:$0xff]
        %v1725 = vld [vmem:[%s1490 + $0x28] sm:$0xff]
        %v1726 = vld [vmem:[%s1490 + $0x30] sm:$0xff]
        %v1727 = vld [vmem:[%s1490 + $0x38] sm:$0xff]
        %v1728 = vlaneseq
        %v1729 = vshrl.u32 %v1728, 7
        %v1730 = vsub.s32 7, %v1729
        %v1731 = vrot.slane %v1502, %v1730
        %v1732 = vlaneseq
        %v1733 = vshrl.u32 %v1732, 7
        %v1734 = vsub.s32 7, %v1733
        %v1735 = vrot.slane %v1503, %v1734
        %v1736 = vmul.f32 %v1731, %v1720
        %v1737 = vmul.f32 %v1735, %v1721
        %v1738 = vmul.f32 %v1731, %v1722
        %v1739 = vmul.f32 %v1735, %v1723
        %v1740 = vmul.f32 %v1731, %v1724
        %v1741 = vmul.f32 %v1735, %v1725
        %v1742 = vmul.f32 %v1731, %v1726
        %v1743 = vmul.f32 %v1735, %v1727
        %v1744 = vadd.f32 %v1712, %v1736
        %v1745 = vadd.f32 %v1713, %v1737
        %v1746 = vadd.f32 %v1714, %v1738
        %v1747 = vadd.f32 %v1715, %v1739
        %v1748 = vadd.f32 %v1716, %v1740
        %v1749 = vadd.f32 %v1717, %v1741
        %v1750 = vadd.f32 %v1718, %v1742
        %v1751 = vadd.f32 %v1719, %v1743
        %v1752 = vpack.c.bf16 %v1746, %v1744
        %v1753 = vpack.c.bf16 %v1747, %v1745
        %v1754 = vpack.c.bf16 %v1750, %v1748
        %v1755 = vpack.c.bf16 %v1751, %v1749
        %v1760 = vunpack.c.l.b16 %v1752
        %v1761 = vunpack.c.l.b16 %v1753
        %v1762 = vunpack.c.h.b16 %v1752
        %v1763 = vunpack.c.h.b16 %v1753
        %v1764 = vunpack.c.l.b16 %v1754
        %v1765 = vunpack.c.l.b16 %v1755
        %v1766 = vunpack.c.h.b16 %v1754
        %v1767 = vunpack.c.h.b16 %v1755
        %v1768 = vpack.c.b16 %v1761, %v1760
        %v1769 = vpack.c.b16 %v1763, %v1762
        %v1770 = vpack.c.b16 %v1765, %v1764
        %v1771 = vpack.c.b16 %v1767, %v1766
        %1776 = vst [vmem:[#allocation3] sm:$0xff] %v1768
        %1777 = vst [vmem:[#allocation3 + $0x8] sm:$0xff] %v1769
        %1778 = vst [vmem:[#allocation3 + $0x10] sm:$0xff] %v1770
        %1779 = vst [vmem:[#allocation3 + $0x18] sm:$0xff] %v1771
        %s1780 = scalar_lea.vmem %s348, 8 [#allocation4]
        %v1781 = vld [vmem:[%s1780] sm:$0xff]
        %v1782 = vunpack.c.l.bf16 %v1781
        %v1783 = vunpack.c.h.bf16 %v1781
        %v1784 = vmul.f32 %v1782, %v705
        %v1785 = vmul.f32 %v1783, %v707
        %v1786 = vld [vmem:[#allocation2] sm:$0xff]
        %v1787 = vld [vmem:[#allocation2 + $0x8] sm:$0xff]
        %v1788 = vld [vmem:[#allocation2 + $0x10] sm:$0xff]
        %v1789 = vld [vmem:[#allocation2 + $0x18] sm:$0xff]
        %v1790 = vld [vmem:[#allocation2 + $0x20] sm:$0xff]
        %v1791 = vld [vmem:[#allocation2 + $0x28] sm:$0xff]
        %v1792 = vld [vmem:[#allocation2 + $0x30] sm:$0xff]
        %v1793 = vld [vmem:[#allocation2 + $0x38] sm:$0xff]
        %v1794 = vlaneseq
        %v1795 = vshrl.u32 %v1794, 7
        %v1796 = vsub.s32 0, %v1795
        %v1797 = vrot.slane %v1784, %v1796
        %v1798 = vlaneseq
        %v1799 = vshrl.u32 %v1798, 7
        %v1800 = vsub.s32 0, %v1799
        %v1801 = vrot.slane %v1785, %v1800
        %v1802 = vmul.f32 %v1797, %v1786
        %v1803 = vmul.f32 %v1801, %v1787
        %v1804 = vmul.f32 %v1797, %v1788
        %v1805 = vmul.f32 %v1801, %v1789
        %v1806 = vmul.f32 %v1797, %v1790
        %v1807 = vmul.f32 %v1801, %v1791
        %v1808 = vmul.f32 %v1797, %v1792
        %v1809 = vmul.f32 %v1801, %v1793
        %v1810 = vld [vmem:[%s956] sm:$0xff]
        %v1811 = vld [vmem:[%s956 + $0x8] sm:$0xff]
        %v1812 = vld [vmem:[%s956 + $0x10] sm:$0xff]
        %v1813 = vld [vmem:[%s956 + $0x18] sm:$0xff]
        %v1814 = vld [vmem:[%s956 + $0x20] sm:$0xff]
        %v1815 = vld [vmem:[%s956 + $0x28] sm:$0xff]
        %v1816 = vld [vmem:[%s956 + $0x30] sm:$0xff]
        %v1817 = vld [vmem:[%s956 + $0x38] sm:$0xff]
        %v1818 = vlaneseq
        %v1819 = vshrl.u32 %v1818, 7
        %v1820 = vsub.s32 1, %v1819
        %v1821 = vrot.slane %v1784, %v1820
        %v1822 = vlaneseq
        %v1823 = vshrl.u32 %v1822, 7
        %v1824 = vsub.s32 1, %v1823
        %v1825 = vrot.slane %v1785, %v1824
        %v1826 = vmul.f32 %v1821, %v1810
        %v1827 = vmul.f32 %v1825, %v1811
        %v1828 = vmul.f32 %v1821, %v1812
        %v1829 = vmul.f32 %v1825, %v1813
        %v1830 = vmul.f32 %v1821, %v1814
        %v1831 = vmul.f32 %v1825, %v1815
        %v1832 = vmul.f32 %v1821, %v1816
        %v1833 = vmul.f32 %v1825, %v1817
        %v1834 = vadd.f32 %v1802, %v1826
        %v1835 = vadd.f32 %v1803, %v1827
        %v1836 = vadd.f32 %v1804, %v1828
        %v1837 = vadd.f32 %v1805, %v1829
        %v1838 = vadd.f32 %v1806, %v1830
        %v1839 = vadd.f32 %v1807, %v1831
        %v1840 = vadd.f32 %v1808, %v1832
        %v1841 = vadd.f32 %v1809, %v1833
        %v1842 = vld [vmem:[%s1045] sm:$0xff]
        %v1843 = vld [vmem:[%s1045 + $0x8] sm:$0xff]
        %v1844 = vld [vmem:[%s1045 + $0x10] sm:$0xff]
        %v1845 = vld [vmem:[%s1045 + $0x18] sm:$0xff]
        %v1846 = vld [vmem:[%s1045 + $0x20] sm:$0xff]
        %v1847 = vld [vmem:[%s1045 + $0x28] sm:$0xff]
        %v1848 = vld [vmem:[%s1045 + $0x30] sm:$0xff]
        %v1849 = vld [vmem:[%s1045 + $0x38] sm:$0xff]
        %v1850 = vlaneseq
        %v1851 = vshrl.u32 %v1850, 7
        %v1852 = vsub.s32 2, %v1851
        %v1853 = vrot.slane %v1784, %v1852
        %v1854 = vlaneseq
        %v1855 = vshrl.u32 %v1854, 7
        %v1856 = vsub.s32 2, %v1855
        %v1857 = vrot.slane %v1785, %v1856
        %v1858 = vmul.f32 %v1853, %v1842
        %v1859 = vmul.f32 %v1857, %v1843
        %v1860 = vmul.f32 %v1853, %v1844
        %v1861 = vmul.f32 %v1857, %v1845
        %v1862 = vmul.f32 %v1853, %v1846
        %v1863 = vmul.f32 %v1857, %v1847
        %v1864 = vmul.f32 %v1853, %v1848
        %v1865 = vmul.f32 %v1857, %v1849
        %v1866 = vadd.f32 %v1834, %v1858
        %v1867 = vadd.f32 %v1835, %v1859
        %v1868 = vadd.f32 %v1836, %v1860
        %v1869 = vadd.f32 %v1837, %v1861
        %v1870 = vadd.f32 %v1838, %v1862
        %v1871 = vadd.f32 %v1839, %v1863
        %v1872 = vadd.f32 %v1840, %v1864
        %v1873 = vadd.f32 %v1841, %v1865
        %v1874 = vld [vmem:[%s1134] sm:$0xff]
        %v1875 = vld [vmem:[%s1134 + $0x8] sm:$0xff]
        %v1876 = vld [vmem:[%s1134 + $0x10] sm:$0xff]
        %v1877 = vld [vmem:[%s1134 + $0x18] sm:$0xff]
        %v1878 = vld [vmem:[%s1134 + $0x20] sm:$0xff]
        %v1879 = vld [vmem:[%s1134 + $0x28] sm:$0xff]
        %v1880 = vld [vmem:[%s1134 + $0x30] sm:$0xff]
        %v1881 = vld [vmem:[%s1134 + $0x38] sm:$0xff]
        %v1882 = vlaneseq
        %v1883 = vshrl.u32 %v1882, 7
        %v1884 = vsub.s32 3, %v1883
        %v1885 = vrot.slane %v1784, %v1884
        %v1886 = vlaneseq
        %v1887 = vshrl.u32 %v1886, 7
        %v1888 = vsub.s32 3, %v1887
        %v1889 = vrot.slane %v1785, %v1888
        %v1890 = vmul.f32 %v1885, %v1874
        %v1891 = vmul.f32 %v1889, %v1875
        %v1892 = vmul.f32 %v1885, %v1876
        %v1893 = vmul.f32 %v1889, %v1877
        %v1894 = vmul.f32 %v1885, %v1878
        %v1895 = vmul.f32 %v1889, %v1879
        %v1896 = vmul.f32 %v1885, %v1880
        %v1897 = vmul.f32 %v1889, %v1881
        %v1898 = vadd.f32 %v1866, %v1890
        %v1899 = vadd.f32 %v1867, %v1891
        %v1900 = vadd.f32 %v1868, %v1892
        %v1901 = vadd.f32 %v1869, %v1893
        %v1902 = vadd.f32 %v1870, %v1894
        %v1903 = vadd.f32 %v1871, %v1895
        %v1904 = vadd.f32 %v1872, %v1896
        %v1905 = vadd.f32 %v1873, %v1897
        %v1906 = vld [vmem:[%s1223] sm:$0xff]
        %v1907 = vld [vmem:[%s1223 + $0x8] sm:$0xff]
        %v1908 = vld [vmem:[%s1223 + $0x10] sm:$0xff]
        %v1909 = vld [vmem:[%s1223 + $0x18] sm:$0xff]
        %v1910 = vld [vmem:[%s1223 + $0x20] sm:$0xff]
        %v1911 = vld [vmem:[%s1223 + $0x28] sm:$0xff]
        %v1912 = vld [vmem:[%s1223 + $0x30] sm:$0xff]
        %v1913 = vld [vmem:[%s1223 + $0x38] sm:$0xff]
        %v1914 = vlaneseq
        %v1915 = vshrl.u32 %v1914, 7
        %v1916 = vsub.s32 4, %v1915
        %v1917 = vrot.slane %v1784, %v1916
        %v1918 = vlaneseq
        %v1919 = vshrl.u32 %v1918, 7
        %v1920 = vsub.s32 4, %v1919
        %v1921 = vrot.slane %v1785, %v1920
        %v1922 = vmul.f32 %v1917, %v1906
        %v1923 = vmul.f32 %v1921, %v1907
        %v1924 = vmul.f32 %v1917, %v1908
        %v1925 = vmul.f32 %v1921, %v1909
        %v1926 = vmul.f32 %v1917, %v1910
        %v1927 = vmul.f32 %v1921, %v1911
        %v1928 = vmul.f32 %v1917, %v1912
        %v1929 = vmul.f32 %v1921, %v1913
        %v1930 = vadd.f32 %v1898, %v1922
        %v1931 = vadd.f32 %v1899, %v1923
        %v1932 = vadd.f32 %v1900, %v1924
        %v1933 = vadd.f32 %v1901, %v1925
        %v1934 = vadd.f32 %v1902, %v1926
        %v1935 = vadd.f32 %v1903, %v1927
        %v1936 = vadd.f32 %v1904, %v1928
        %v1937 = vadd.f32 %v1905, %v1929
        %v1938 = vld [vmem:[%s1312] sm:$0xff]
        %v1939 = vld [vmem:[%s1312 + $0x8] sm:$0xff]
        %v1940 = vld [vmem:[%s1312 + $0x10] sm:$0xff]
        %v1941 = vld [vmem:[%s1312 + $0x18] sm:$0xff]
        %v1942 = vld [vmem:[%s1312 + $0x20] sm:$0xff]
        %v1943 = vld [vmem:[%s1312 + $0x28] sm:$0xff]
        %v1944 = vld [vmem:[%s1312 + $0x30] sm:$0xff]
        %v1945 = vld [vmem:[%s1312 + $0x38] sm:$0xff]
        %v1946 = vlaneseq
        %v1947 = vshrl.u32 %v1946, 7
        %v1948 = vsub.s32 5, %v1947
        %v1949 = vrot.slane %v1784, %v1948
        %v1950 = vlaneseq
        %v1951 = vshrl.u32 %v1950, 7
        %v1952 = vsub.s32 5, %v1951
        %v1953 = vrot.slane %v1785, %v1952
        %v1954 = vmul.f32 %v1949, %v1938
        %v1955 = vmul.f32 %v1953, %v1939
        %v1956 = vmul.f32 %v1949, %v1940
        %v1957 = vmul.f32 %v1953, %v1941
        %v1958 = vmul.f32 %v1949, %v1942
        %v1959 = vmul.f32 %v1953, %v1943
        %v1960 = vmul.f32 %v1949, %v1944
        %v1961 = vmul.f32 %v1953, %v1945
        %v1962 = vadd.f32 %v1930, %v1954
        %v1963 = vadd.f32 %v1931, %v1955
        %v1964 = vadd.f32 %v1932, %v1956
        %v1965 = vadd.f32 %v1933, %v1957
        %v1966 = vadd.f32 %v1934, %v1958
        %v1967 = vadd.f32 %v1935, %v1959
        %v1968 = vadd.f32 %v1936, %v1960
        %v1969 = vadd.f32 %v1937, %v1961
        %v1970 = vld [vmem:[%s1401] sm:$0xff]
        %v1971 = vld [vmem:[%s1401 + $0x8] sm:$0xff]
        %v1972 = vld [vmem:[%s1401 + $0x10] sm:$0xff]
        %v1973 = vld [vmem:[%s1401 + $0x18] sm:$0xff]
        %v1974 = vld [vmem:[%s1401 + $0x20] sm:$0xff]
        %v1975 = vld [vmem:[%s1401 + $0x28] sm:$0xff]
        %v1976 = vld [vmem:[%s1401 + $0x30] sm:$0xff]
        %v1977 = vld [vmem:[%s1401 + $0x38] sm:$0xff]
        %v1978 = vlaneseq
        %v1979 = vshrl.u32 %v1978, 7
        %v1980 = vsub.s32 6, %v1979
        %v1981 = vrot.slane %v1784, %v1980
        %v1982 = vlaneseq
        %v1983 = vshrl.u32 %v1982, 7
        %v1984 = vsub.s32 6, %v1983
        %v1985 = vrot.slane %v1785, %v1984
        %v1986 = vmul.f32 %v1981, %v1970
        %v1987 = vmul.f32 %v1985, %v1971
        %v1988 = vmul.f32 %v1981, %v1972
        %v1989 = vmul.f32 %v1985, %v1973
        %v1990 = vmul.f32 %v1981, %v1974
        %v1991 = vmul.f32 %v1985, %v1975
        %v1992 = vmul.f32 %v1981, %v1976
        %v1993 = vmul.f32 %v1985, %v1977
        %v1994 = vadd.f32 %v1962, %v1986
        %v1995 = vadd.f32 %v1963, %v1987
        %v1996 = vadd.f32 %v1964, %v1988
        %v1997 = vadd.f32 %v1965, %v1989
        %v1998 = vadd.f32 %v1966, %v1990
        %v1999 = vadd.f32 %v1967, %v1991
        %v2000 = vadd.f32 %v1968, %v1992
        %v2001 = vadd.f32 %v1969, %v1993
        %v2002 = vld [vmem:[%s1490] sm:$0xff]
        %v2003 = vld [vmem:[%s1490 + $0x8] sm:$0xff]
        %v2004 = vld [vmem:[%s1490 + $0x10] sm:$0xff]
        %v2005 = vld [vmem:[%s1490 + $0x18] sm:$0xff]
        %v2006 = vld [vmem:[%s1490 + $0x20] sm:$0xff]
        %v2007 = vld [vmem:[%s1490 + $0x28] sm:$0xff]
        %v2008 = vld [vmem:[%s1490 + $0x30] sm:$0xff]
        %v2009 = vld [vmem:[%s1490 + $0x38] sm:$0xff]
        %v2010 = vlaneseq
        %v2011 = vshrl.u32 %v2010, 7
        %v2012 = vsub.s32 7, %v2011
        %v2013 = vrot.slane %v1784, %v2012
        %v2014 = vlaneseq
        %v2015 = vshrl.u32 %v2014, 7
        %v2016 = vsub.s32 7, %v2015
        %v2017 = vrot.slane %v1785, %v2016
        %v2018 = vmul.f32 %v2013, %v2002
        %v2019 = vmul.f32 %v2017, %v2003
        %v2020 = vmul.f32 %v2013, %v2004
        %v2021 = vmul.f32 %v2017, %v2005
        %v2022 = vmul.f32 %v2013, %v2006
        %v2023 = vmul.f32 %v2017, %v2007
        %v2024 = vmul.f32 %v2013, %v2008
        %v2025 = vmul.f32 %v2017, %v2009
        %v2026 = vadd.f32 %v1994, %v2018
        %v2027 = vadd.f32 %v1995, %v2019
        %v2028 = vadd.f32 %v1996, %v2020
        %v2029 = vadd.f32 %v1997, %v2021
        %v2030 = vadd.f32 %v1998, %v2022
        %v2031 = vadd.f32 %v1999, %v2023
        %v2032 = vadd.f32 %v2000, %v2024
        %v2033 = vadd.f32 %v2001, %v2025
        %v2034 = vpack.c.bf16 %v2028, %v2026
        %v2035 = vpack.c.bf16 %v2029, %v2027
        %v2036 = vpack.c.bf16 %v2032, %v2030
        %v2037 = vpack.c.bf16 %v2033, %v2031
        %v2042 = vunpack.c.l.b16 %v2034
        %v2043 = vunpack.c.l.b16 %v2035
        %v2044 = vunpack.c.h.b16 %v2034
        %v2045 = vunpack.c.h.b16 %v2035
        %v2046 = vunpack.c.l.b16 %v2036
        %v2047 = vunpack.c.l.b16 %v2037
        %v2048 = vunpack.c.h.b16 %v2036
        %v2049 = vunpack.c.h.b16 %v2037
        %v2050 = vpack.c.b16 %v2043, %v2042
        %v2051 = vpack.c.b16 %v2045, %v2044
        %v2052 = vpack.c.b16 %v2047, %v2046
        %v2053 = vpack.c.b16 %v2049, %v2048
        %2058 = vst [vmem:[#allocation3 + $0x20] sm:$0xff] %v2050
        %2059 = vst [vmem:[#allocation3 + $0x28] sm:$0xff] %v2051
        %2060 = vst [vmem:[#allocation3 + $0x30] sm:$0xff] %v2052
        %2061 = vst [vmem:[#allocation3 + $0x38] sm:$0xff] %v2053
        %s2062 = scalar_lea.vmem %s348, 16 [#allocation4]
        %v2063 = vld [vmem:[%s2062] sm:$0xff]
        %v2064 = vunpack.c.l.bf16 %v2063
        %v2065 = vunpack.c.h.bf16 %v2063
        %v2066 = vmul.f32 %v2064, %v705
        %v2067 = vmul.f32 %v2065, %v707
        %v2068 = vld [vmem:[#allocation2] sm:$0xff]
        %v2069 = vld [vmem:[#allocation2 + $0x8] sm:$0xff]
        %v2070 = vld [vmem:[#allocation2 + $0x10] sm:$0xff]
        %v2071 = vld [vmem:[#allocation2 + $0x18] sm:$0xff]
        %v2072 = vld [vmem:[#allocation2 + $0x20] sm:$0xff]
        %v2073 = vld [vmem:[#allocation2 + $0x28] sm:$0xff]
        %v2074 = vld [vmem:[#allocation2 + $0x30] sm:$0xff]
        %v2075 = vld [vmem:[#allocation2 + $0x38] sm:$0xff]
        %v2076 = vlaneseq
        %v2077 = vshrl.u32 %v2076, 7
        %v2078 = vsub.s32 0, %v2077
        %v2079 = vrot.slane %v2066, %v2078
        %v2080 = vlaneseq
        %v2081 = vshrl.u32 %v2080, 7
        %v2082 = vsub.s32 0, %v2081
        %v2083 = vrot.slane %v2067, %v2082
        %v2084 = vmul.f32 %v2079, %v2068
        %v2085 = vmul.f32 %v2083, %v2069
        %v2086 = vmul.f32 %v2079, %v2070
        %v2087 = vmul.f32 %v2083, %v2071
        %v2088 = vmul.f32 %v2079, %v2072
        %v2089 = vmul.f32 %v2083, %v2073
        %v2090 = vmul.f32 %v2079, %v2074
        %v2091 = vmul.f32 %v2083, %v2075
        %v2092 = vld [vmem:[%s956] sm:$0xff]
        %v2093 = vld [vmem:[%s956 + $0x8] sm:$0xff]
        %v2094 = vld [vmem:[%s956 + $0x10] sm:$0xff]
        %v2095 = vld [vmem:[%s956 + $0x18] sm:$0xff]
        %v2096 = vld [vmem:[%s956 + $0x20] sm:$0xff]
        %v2097 = vld [vmem:[%s956 + $0x28] sm:$0xff]
        %v2098 = vld [vmem:[%s956 + $0x30] sm:$0xff]
        %v2099 = vld [vmem:[%s956 + $0x38] sm:$0xff]
        %v2100 = vlaneseq
        %v2101 = vshrl.u32 %v2100, 7
        %v2102 = vsub.s32 1, %v2101
        %v2103 = vrot.slane %v2066, %v2102
        %v2104 = vlaneseq
        %v2105 = vshrl.u32 %v2104, 7
        %v2106 = vsub.s32 1, %v2105
        %v2107 = vrot.slane %v2067, %v2106
        %v2108 = vmul.f32 %v2103, %v2092
        %v2109 = vmul.f32 %v2107, %v2093
        %v2110 = vmul.f32 %v2103, %v2094
        %v2111 = vmul.f32 %v2107, %v2095
        %v2112 = vmul.f32 %v2103, %v2096
        %v2113 = vmul.f32 %v2107, %v2097
        %v2114 = vmul.f32 %v2103, %v2098
        %v2115 = vmul.f32 %v2107, %v2099
        %v2116 = vadd.f32 %v2084, %v2108
        %v2117 = vadd.f32 %v2085, %v2109
        %v2118 = vadd.f32 %v2086, %v2110
        %v2119 = vadd.f32 %v2087, %v2111
        %v2120 = vadd.f32 %v2088, %v2112
        %v2121 = vadd.f32 %v2089, %v2113
        %v2122 = vadd.f32 %v2090, %v2114
        %v2123 = vadd.f32 %v2091, %v2115
        %v2124 = vld [vmem:[%s1045] sm:$0xff]
        %v2125 = vld [vmem:[%s1045 + $0x8] sm:$0xff]
        %v2126 = vld [vmem:[%s1045 + $0x10] sm:$0xff]
        %v2127 = vld [vmem:[%s1045 + $0x18] sm:$0xff]
        %v2128 = vld [vmem:[%s1045 + $0x20] sm:$0xff]
        %v2129 = vld [vmem:[%s1045 + $0x28] sm:$0xff]
        %v2130 = vld [vmem:[%s1045 + $0x30] sm:$0xff]
        %v2131 = vld [vmem:[%s1045 + $0x38] sm:$0xff]
        %v2132 = vlaneseq
        %v2133 = vshrl.u32 %v2132, 7
        %v2134 = vsub.s32 2, %v2133
        %v2135 = vrot.slane %v2066, %v2134
        %v2136 = vlaneseq
        %v2137 = vshrl.u32 %v2136, 7
        %v2138 = vsub.s32 2, %v2137
        %v2139 = vrot.slane %v2067, %v2138
        %v2140 = vmul.f32 %v2135, %v2124
        %v2141 = vmul.f32 %v2139, %v2125
        %v2142 = vmul.f32 %v2135, %v2126
        %v2143 = vmul.f32 %v2139, %v2127
        %v2144 = vmul.f32 %v2135, %v2128
        %v2145 = vmul.f32 %v2139, %v2129
        %v2146 = vmul.f32 %v2135, %v2130
        %v2147 = vmul.f32 %v2139, %v2131
        %v2148 = vadd.f32 %v2116, %v2140
        %v2149 = vadd.f32 %v2117, %v2141
        %v2150 = vadd.f32 %v2118, %v2142
        %v2151 = vadd.f32 %v2119, %v2143
        %v2152 = vadd.f32 %v2120, %v2144
        %v2153 = vadd.f32 %v2121, %v2145
        %v2154 = vadd.f32 %v2122, %v2146
        %v2155 = vadd.f32 %v2123, %v2147
        %v2156 = vld [vmem:[%s1134] sm:$0xff]
        %v2157 = vld [vmem:[%s1134 + $0x8] sm:$0xff]
        %v2158 = vld [vmem:[%s1134 + $0x10] sm:$0xff]
        %v2159 = vld [vmem:[%s1134 + $0x18] sm:$0xff]
        %v2160 = vld [vmem:[%s1134 + $0x20] sm:$0xff]
        %v2161 = vld [vmem:[%s1134 + $0x28] sm:$0xff]
        %v2162 = vld [vmem:[%s1134 + $0x30] sm:$0xff]
        %v2163 = vld [vmem:[%s1134 + $0x38] sm:$0xff]
        %v2164 = vlaneseq
        %v2165 = vshrl.u32 %v2164, 7
        %v2166 = vsub.s32 3, %v2165
        %v2167 = vrot.slane %v2066, %v2166
        %v2168 = vlaneseq
        %v2169 = vshrl.u32 %v2168, 7
        %v2170 = vsub.s32 3, %v2169
        %v2171 = vrot.slane %v2067, %v2170
        %v2172 = vmul.f32 %v2167, %v2156
        %v2173 = vmul.f32 %v2171, %v2157
        %v2174 = vmul.f32 %v2167, %v2158
        %v2175 = vmul.f32 %v2171, %v2159
        %v2176 = vmul.f32 %v2167, %v2160
        %v2177 = vmul.f32 %v2171, %v2161
        %v2178 = vmul.f32 %v2167, %v2162
        %v2179 = vmul.f32 %v2171, %v2163
        %v2180 = vadd.f32 %v2148, %v2172
        %v2181 = vadd.f32 %v2149, %v2173
        %v2182 = vadd.f32 %v2150, %v2174
        %v2183 = vadd.f32 %v2151, %v2175
        %v2184 = vadd.f32 %v2152, %v2176
        %v2185 = vadd.f32 %v2153, %v2177
        %v2186 = vadd.f32 %v2154, %v2178
        %v2187 = vadd.f32 %v2155, %v2179
        %v2188 = vld [vmem:[%s1223] sm:$0xff]
        %v2189 = vld [vmem:[%s1223 + $0x8] sm:$0xff]
        %v2190 = vld [vmem:[%s1223 + $0x10] sm:$0xff]
        %v2191 = vld [vmem:[%s1223 + $0x18] sm:$0xff]
        %v2192 = vld [vmem:[%s1223 + $0x20] sm:$0xff]
        %v2193 = vld [vmem:[%s1223 + $0x28] sm:$0xff]
        %v2194 = vld [vmem:[%s1223 + $0x30] sm:$0xff]
        %v2195 = vld [vmem:[%s1223 + $0x38] sm:$0xff]
        %v2196 = vlaneseq
        %v2197 = vshrl.u32 %v2196, 7
        %v2198 = vsub.s32 4, %v2197
        %v2199 = vrot.slane %v2066, %v2198
        %v2200 = vlaneseq
        %v2201 = vshrl.u32 %v2200, 7
        %v2202 = vsub.s32 4, %v2201
        %v2203 = vrot.slane %v2067, %v2202
        %v2204 = vmul.f32 %v2199, %v2188
        %v2205 = vmul.f32 %v2203, %v2189
        %v2206 = vmul.f32 %v2199, %v2190
        %v2207 = vmul.f32 %v2203, %v2191
        %v2208 = vmul.f32 %v2199, %v2192
        %v2209 = vmul.f32 %v2203, %v2193
        %v2210 = vmul.f32 %v2199, %v2194
        %v2211 = vmul.f32 %v2203, %v2195
        %v2212 = vadd.f32 %v2180, %v2204
        %v2213 = vadd.f32 %v2181, %v2205
        %v2214 = vadd.f32 %v2182, %v2206
        %v2215 = vadd.f32 %v2183, %v2207
        %v2216 = vadd.f32 %v2184, %v2208
        %v2217 = vadd.f32 %v2185, %v2209
        %v2218 = vadd.f32 %v2186, %v2210
        %v2219 = vadd.f32 %v2187, %v2211
        %v2220 = vld [vmem:[%s1312] sm:$0xff]
        %v2221 = vld [vmem:[%s1312 + $0x8] sm:$0xff]
        %v2222 = vld [vmem:[%s1312 + $0x10] sm:$0xff]
        %v2223 = vld [vmem:[%s1312 + $0x18] sm:$0xff]
        %v2224 = vld [vmem:[%s1312 + $0x20] sm:$0xff]
        %v2225 = vld [vmem:[%s1312 + $0x28] sm:$0xff]
        %v2226 = vld [vmem:[%s1312 + $0x30] sm:$0xff]
        %v2227 = vld [vmem:[%s1312 + $0x38] sm:$0xff]
        %v2228 = vlaneseq
        %v2229 = vshrl.u32 %v2228, 7
        %v2230 = vsub.s32 5, %v2229
        %v2231 = vrot.slane %v2066, %v2230
        %v2232 = vlaneseq
        %v2233 = vshrl.u32 %v2232, 7
        %v2234 = vsub.s32 5, %v2233
        %v2235 = vrot.slane %v2067, %v2234
        %v2236 = vmul.f32 %v2231, %v2220
        %v2237 = vmul.f32 %v2235, %v2221
        %v2238 = vmul.f32 %v2231, %v2222
        %v2239 = vmul.f32 %v2235, %v2223
        %v2240 = vmul.f32 %v2231, %v2224
        %v2241 = vmul.f32 %v2235, %v2225
        %v2242 = vmul.f32 %v2231, %v2226
        %v2243 = vmul.f32 %v2235, %v2227
        %v2244 = vadd.f32 %v2212, %v2236
        %v2245 = vadd.f32 %v2213, %v2237
        %v2246 = vadd.f32 %v2214, %v2238
        %v2247 = vadd.f32 %v2215, %v2239
        %v2248 = vadd.f32 %v2216, %v2240
        %v2249 = vadd.f32 %v2217, %v2241
        %v2250 = vadd.f32 %v2218, %v2242
        %v2251 = vadd.f32 %v2219, %v2243
        %v2252 = vld [vmem:[%s1401] sm:$0xff]
        %v2253 = vld [vmem:[%s1401 + $0x8] sm:$0xff]
        %v2254 = vld [vmem:[%s1401 + $0x10] sm:$0xff]
        %v2255 = vld [vmem:[%s1401 + $0x18] sm:$0xff]
        %v2256 = vld [vmem:[%s1401 + $0x20] sm:$0xff]
        %v2257 = vld [vmem:[%s1401 + $0x28] sm:$0xff]
        %v2258 = vld [vmem:[%s1401 + $0x30] sm:$0xff]
        %v2259 = vld [vmem:[%s1401 + $0x38] sm:$0xff]
        %v2260 = vlaneseq
        %v2261 = vshrl.u32 %v2260, 7
        %v2262 = vsub.s32 6, %v2261
        %v2263 = vrot.slane %v2066, %v2262
        %v2264 = vlaneseq
        %v2265 = vshrl.u32 %v2264, 7
        %v2266 = vsub.s32 6, %v2265
        %v2267 = vrot.slane %v2067, %v2266
        %v2268 = vmul.f32 %v2263, %v2252
        %v2269 = vmul.f32 %v2267, %v2253
        %v2270 = vmul.f32 %v2263, %v2254
        %v2271 = vmul.f32 %v2267, %v2255
        %v2272 = vmul.f32 %v2263, %v2256
        %v2273 = vmul.f32 %v2267, %v2257
        %v2274 = vmul.f32 %v2263, %v2258
        %v2275 = vmul.f32 %v2267, %v2259
        %v2276 = vadd.f32 %v2244, %v2268
        %v2277 = vadd.f32 %v2245, %v2269
        %v2278 = vadd.f32 %v2246, %v2270
        %v2279 = vadd.f32 %v2247, %v2271
        %v2280 = vadd.f32 %v2248, %v2272
        %v2281 = vadd.f32 %v2249, %v2273
        %v2282 = vadd.f32 %v2250, %v2274
        %v2283 = vadd.f32 %v2251, %v2275
        %v2284 = vld [vmem:[%s1490] sm:$0xff]
        %v2285 = vld [vmem:[%s1490 + $0x8] sm:$0xff]
        %v2286 = vld [vmem:[%s1490 + $0x10] sm:$0xff]
        %v2287 = vld [vmem:[%s1490 + $0x18] sm:$0xff]
        %v2288 = vld [vmem:[%s1490 + $0x20] sm:$0xff]
        %v2289 = vld [vmem:[%s1490 + $0x28] sm:$0xff]
        %v2290 = vld [vmem:[%s1490 + $0x30] sm:$0xff]
        %v2291 = vld [vmem:[%s1490 + $0x38] sm:$0xff]
        %v2292 = vlaneseq
        %v2293 = vshrl.u32 %v2292, 7
        %v2294 = vsub.s32 7, %v2293
        %v2295 = vrot.slane %v2066, %v2294
        %v2296 = vlaneseq
        %v2297 = vshrl.u32 %v2296, 7
        %v2298 = vsub.s32 7, %v2297
        %v2299 = vrot.slane %v2067, %v2298
        %v2300 = vmul.f32 %v2295, %v2284
        %v2301 = vmul.f32 %v2299, %v2285
        %v2302 = vmul.f32 %v2295, %v2286
        %v2303 = vmul.f32 %v2299, %v2287
        %v2304 = vmul.f32 %v2295, %v2288
        %v2305 = vmul.f32 %v2299, %v2289
        %v2306 = vmul.f32 %v2295, %v2290
        %v2307 = vmul.f32 %v2299, %v2291
        %v2308 = vadd.f32 %v2276, %v2300
        %v2309 = vadd.f32 %v2277, %v2301
        %v2310 = vadd.f32 %v2278, %v2302
        %v2311 = vadd.f32 %v2279, %v2303
        %v2312 = vadd.f32 %v2280, %v2304
        %v2313 = vadd.f32 %v2281, %v2305
        %v2314 = vadd.f32 %v2282, %v2306
        %v2315 = vadd.f32 %v2283, %v2307
        %v2316 = vpack.c.bf16 %v2310, %v2308
        %v2317 = vpack.c.bf16 %v2311, %v2309
        %v2318 = vpack.c.bf16 %v2314, %v2312
        %v2319 = vpack.c.bf16 %v2315, %v2313
        %v2324 = vunpack.c.l.b16 %v2316
        %v2325 = vunpack.c.l.b16 %v2317
        %v2326 = vunpack.c.h.b16 %v2316
        %v2327 = vunpack.c.h.b16 %v2317
        %v2328 = vunpack.c.l.b16 %v2318
        %v2329 = vunpack.c.l.b16 %v2319
        %v2330 = vunpack.c.h.b16 %v2318
        %v2331 = vunpack.c.h.b16 %v2319
        %v2332 = vpack.c.b16 %v2325, %v2324
        %v2333 = vpack.c.b16 %v2327, %v2326
        %v2334 = vpack.c.b16 %v2329, %v2328
        %v2335 = vpack.c.b16 %v2331, %v2330
        %2340 = vst [vmem:[#allocation3 + $0x40] sm:$0xff] %v2332
        %2341 = vst [vmem:[#allocation3 + $0x48] sm:$0xff] %v2333
        %2342 = vst [vmem:[#allocation3 + $0x50] sm:$0xff] %v2334
        %2343 = vst [vmem:[#allocation3 + $0x58] sm:$0xff] %v2335
        %s2344 = scalar_lea.vmem %s348, 24 [#allocation4]
        %v2345 = vld [vmem:[%s2344] sm:$0xff]
        %v2346 = vunpack.c.l.bf16 %v2345
        %v2347 = vunpack.c.h.bf16 %v2345
        %v2348 = vmul.f32 %v2346, %v705
        %v2349 = vmul.f32 %v2347, %v707
        %v2350 = vld [vmem:[#allocation2] sm:$0xff]
        %v2351 = vld [vmem:[#allocation2 + $0x8] sm:$0xff]
        %v2352 = vld [vmem:[#allocation2 + $0x10] sm:$0xff]
        %v2353 = vld [vmem:[#allocation2 + $0x18] sm:$0xff]
        %v2354 = vld [vmem:[#allocation2 + $0x20] sm:$0xff]
        %v2355 = vld [vmem:[#allocation2 + $0x28] sm:$0xff]
        %v2356 = vld [vmem:[#allocation2 + $0x30] sm:$0xff]
        %v2357 = vld [vmem:[#allocation2 + $0x38] sm:$0xff]
        %v2358 = vlaneseq
        %v2359 = vshrl.u32 %v2358, 7
        %v2360 = vsub.s32 0, %v2359
        %v2361 = vrot.slane %v2348, %v2360
        %v2362 = vlaneseq
        %v2363 = vshrl.u32 %v2362, 7
        %v2364 = vsub.s32 0, %v2363
        %v2365 = vrot.slane %v2349, %v2364
        %v2366 = vmul.f32 %v2361, %v2350
        %v2367 = vmul.f32 %v2365, %v2351
        %v2368 = vmul.f32 %v2361, %v2352
        %v2369 = vmul.f32 %v2365, %v2353
        %v2370 = vmul.f32 %v2361, %v2354
        %v2371 = vmul.f32 %v2365, %v2355
        %v2372 = vmul.f32 %v2361, %v2356
        %v2373 = vmul.f32 %v2365, %v2357
        %v2374 = vld [vmem:[%s956] sm:$0xff]
        %v2375 = vld [vmem:[%s956 + $0x8] sm:$0xff]
        %v2376 = vld [vmem:[%s956 + $0x10] sm:$0xff]
        %v2377 = vld [vmem:[%s956 + $0x18] sm:$0xff]
        %v2378 = vld [vmem:[%s956 + $0x20] sm:$0xff]
        %v2379 = vld [vmem:[%s956 + $0x28] sm:$0xff]
        %v2380 = vld [vmem:[%s956 + $0x30] sm:$0xff]
        %v2381 = vld [vmem:[%s956 + $0x38] sm:$0xff]
        %v2382 = vlaneseq
        %v2383 = vshrl.u32 %v2382, 7
        %v2384 = vsub.s32 1, %v2383
        %v2385 = vrot.slane %v2348, %v2384
        %v2386 = vlaneseq
        %v2387 = vshrl.u32 %v2386, 7
        %v2388 = vsub.s32 1, %v2387
        %v2389 = vrot.slane %v2349, %v2388
        %v2390 = vmul.f32 %v2385, %v2374
        %v2391 = vmul.f32 %v2389, %v2375
        %v2392 = vmul.f32 %v2385, %v2376
        %v2393 = vmul.f32 %v2389, %v2377
        %v2394 = vmul.f32 %v2385, %v2378
        %v2395 = vmul.f32 %v2389, %v2379
        %v2396 = vmul.f32 %v2385, %v2380
        %v2397 = vmul.f32 %v2389, %v2381
        %v2398 = vadd.f32 %v2366, %v2390
        %v2399 = vadd.f32 %v2367, %v2391
        %v2400 = vadd.f32 %v2368, %v2392
        %v2401 = vadd.f32 %v2369, %v2393
        %v2402 = vadd.f32 %v2370, %v2394
        %v2403 = vadd.f32 %v2371, %v2395
        %v2404 = vadd.f32 %v2372, %v2396
        %v2405 = vadd.f32 %v2373, %v2397
        %v2406 = vld [vmem:[%s1045] sm:$0xff]
        %v2407 = vld [vmem:[%s1045 + $0x8] sm:$0xff]
        %v2408 = vld [vmem:[%s1045 + $0x10] sm:$0xff]
        %v2409 = vld [vmem:[%s1045 + $0x18] sm:$0xff]
        %v2410 = vld [vmem:[%s1045 + $0x20] sm:$0xff]
        %v2411 = vld [vmem:[%s1045 + $0x28] sm:$0xff]
        %v2412 = vld [vmem:[%s1045 + $0x30] sm:$0xff]
        %v2413 = vld [vmem:[%s1045 + $0x38] sm:$0xff]
        %v2414 = vlaneseq
        %v2415 = vshrl.u32 %v2414, 7
        %v2416 = vsub.s32 2, %v2415
        %v2417 = vrot.slane %v2348, %v2416
        %v2418 = vlaneseq
        %v2419 = vshrl.u32 %v2418, 7
        %v2420 = vsub.s32 2, %v2419
        %v2421 = vrot.slane %v2349, %v2420
        %v2422 = vmul.f32 %v2417, %v2406
        %v2423 = vmul.f32 %v2421, %v2407
        %v2424 = vmul.f32 %v2417, %v2408
        %v2425 = vmul.f32 %v2421, %v2409
        %v2426 = vmul.f32 %v2417, %v2410
        %v2427 = vmul.f32 %v2421, %v2411
        %v2428 = vmul.f32 %v2417, %v2412
        %v2429 = vmul.f32 %v2421, %v2413
        %v2430 = vadd.f32 %v2398, %v2422
        %v2431 = vadd.f32 %v2399, %v2423
        %v2432 = vadd.f32 %v2400, %v2424
        %v2433 = vadd.f32 %v2401, %v2425
        %v2434 = vadd.f32 %v2402, %v2426
        %v2435 = vadd.f32 %v2403, %v2427
        %v2436 = vadd.f32 %v2404, %v2428
        %v2437 = vadd.f32 %v2405, %v2429
        %v2438 = vld [vmem:[%s1134] sm:$0xff]
        %v2439 = vld [vmem:[%s1134 + $0x8] sm:$0xff]
        %v2440 = vld [vmem:[%s1134 + $0x10] sm:$0xff]
        %v2441 = vld [vmem:[%s1134 + $0x18] sm:$0xff]
        %v2442 = vld [vmem:[%s1134 + $0x20] sm:$0xff]
        %v2443 = vld [vmem:[%s1134 + $0x28] sm:$0xff]
        %v2444 = vld [vmem:[%s1134 + $0x30] sm:$0xff]
        %v2445 = vld [vmem:[%s1134 + $0x38] sm:$0xff]
        %v2446 = vlaneseq
        %v2447 = vshrl.u32 %v2446, 7
        %v2448 = vsub.s32 3, %v2447
        %v2449 = vrot.slane %v2348, %v2448
        %v2450 = vlaneseq
        %v2451 = vshrl.u32 %v2450, 7
        %v2452 = vsub.s32 3, %v2451
        %v2453 = vrot.slane %v2349, %v2452
        %v2454 = vmul.f32 %v2449, %v2438
        %v2455 = vmul.f32 %v2453, %v2439
        %v2456 = vmul.f32 %v2449, %v2440
        %v2457 = vmul.f32 %v2453, %v2441
        %v2458 = vmul.f32 %v2449, %v2442
        %v2459 = vmul.f32 %v2453, %v2443
        %v2460 = vmul.f32 %v2449, %v2444
        %v2461 = vmul.f32 %v2453, %v2445
        %v2462 = vadd.f32 %v2430, %v2454
        %v2463 = vadd.f32 %v2431, %v2455
        %v2464 = vadd.f32 %v2432, %v2456
        %v2465 = vadd.f32 %v2433, %v2457
        %v2466 = vadd.f32 %v2434, %v2458
        %v2467 = vadd.f32 %v2435, %v2459
        %v2468 = vadd.f32 %v2436, %v2460
        %v2469 = vadd.f32 %v2437, %v2461
        %v2470 = vld [vmem:[%s1223] sm:$0xff]
        %v2471 = vld [vmem:[%s1223 + $0x8] sm:$0xff]
        %v2472 = vld [vmem:[%s1223 + $0x10] sm:$0xff]
        %v2473 = vld [vmem:[%s1223 + $0x18] sm:$0xff]
        %v2474 = vld [vmem:[%s1223 + $0x20] sm:$0xff]
        %v2475 = vld [vmem:[%s1223 + $0x28] sm:$0xff]
        %v2476 = vld [vmem:[%s1223 + $0x30] sm:$0xff]
        %v2477 = vld [vmem:[%s1223 + $0x38] sm:$0xff]
        %v2478 = vlaneseq
        %v2479 = vshrl.u32 %v2478, 7
        %v2480 = vsub.s32 4, %v2479
        %v2481 = vrot.slane %v2348, %v2480
        %v2482 = vlaneseq
        %v2483 = vshrl.u32 %v2482, 7
        %v2484 = vsub.s32 4, %v2483
        %v2485 = vrot.slane %v2349, %v2484
        %v2486 = vmul.f32 %v2481, %v2470
        %v2487 = vmul.f32 %v2485, %v2471
        %v2488 = vmul.f32 %v2481, %v2472
        %v2489 = vmul.f32 %v2485, %v2473
        %v2490 = vmul.f32 %v2481, %v2474
        %v2491 = vmul.f32 %v2485, %v2475
        %v2492 = vmul.f32 %v2481, %v2476
        %v2493 = vmul.f32 %v2485, %v2477
        %v2494 = vadd.f32 %v2462, %v2486
        %v2495 = vadd.f32 %v2463, %v2487
        %v2496 = vadd.f32 %v2464, %v2488
        %v2497 = vadd.f32 %v2465, %v2489
        %v2498 = vadd.f32 %v2466, %v2490
        %v2499 = vadd.f32 %v2467, %v2491
        %v2500 = vadd.f32 %v2468, %v2492
        %v2501 = vadd.f32 %v2469, %v2493
        %v2502 = vld [vmem:[%s1312] sm:$0xff]
        %v2503 = vld [vmem:[%s1312 + $0x8] sm:$0xff]
        %v2504 = vld [vmem:[%s1312 + $0x10] sm:$0xff]
        %v2505 = vld [vmem:[%s1312 + $0x18] sm:$0xff]
        %v2506 = vld [vmem:[%s1312 + $0x20] sm:$0xff]
        %v2507 = vld [vmem:[%s1312 + $0x28] sm:$0xff]
        %v2508 = vld [vmem:[%s1312 + $0x30] sm:$0xff]
        %v2509 = vld [vmem:[%s1312 + $0x38] sm:$0xff]
        %v2510 = vlaneseq
        %v2511 = vshrl.u32 %v2510, 7
        %v2512 = vsub.s32 5, %v2511
        %v2513 = vrot.slane %v2348, %v2512
        %v2514 = vlaneseq
        %v2515 = vshrl.u32 %v2514, 7
        %v2516 = vsub.s32 5, %v2515
        %v2517 = vrot.slane %v2349, %v2516
        %v2518 = vmul.f32 %v2513, %v2502
        %v2519 = vmul.f32 %v2517, %v2503
        %v2520 = vmul.f32 %v2513, %v2504
        %v2521 = vmul.f32 %v2517, %v2505
        %v2522 = vmul.f32 %v2513, %v2506
        %v2523 = vmul.f32 %v2517, %v2507
        %v2524 = vmul.f32 %v2513, %v2508
        %v2525 = vmul.f32 %v2517, %v2509
        %v2526 = vadd.f32 %v2494, %v2518
        %v2527 = vadd.f32 %v2495, %v2519
        %v2528 = vadd.f32 %v2496, %v2520
        %v2529 = vadd.f32 %v2497, %v2521
        %v2530 = vadd.f32 %v2498, %v2522
        %v2531 = vadd.f32 %v2499, %v2523
        %v2532 = vadd.f32 %v2500, %v2524
        %v2533 = vadd.f32 %v2501, %v2525
        %v2534 = vld [vmem:[%s1401] sm:$0xff]
        %v2535 = vld [vmem:[%s1401 + $0x8] sm:$0xff]
        %v2536 = vld [vmem:[%s1401 + $0x10] sm:$0xff]
        %v2537 = vld [vmem:[%s1401 + $0x18] sm:$0xff]
        %v2538 = vld [vmem:[%s1401 + $0x20] sm:$0xff]
        %v2539 = vld [vmem:[%s1401 + $0x28] sm:$0xff]
        %v2540 = vld [vmem:[%s1401 + $0x30] sm:$0xff]
        %v2541 = vld [vmem:[%s1401 + $0x38] sm:$0xff]
        %v2542 = vlaneseq
        %v2543 = vshrl.u32 %v2542, 7
        %v2544 = vsub.s32 6, %v2543
        %v2545 = vrot.slane %v2348, %v2544
        %v2546 = vlaneseq
        %v2547 = vshrl.u32 %v2546, 7
        %v2548 = vsub.s32 6, %v2547
        %v2549 = vrot.slane %v2349, %v2548
        %v2550 = vmul.f32 %v2545, %v2534
        %v2551 = vmul.f32 %v2549, %v2535
        %v2552 = vmul.f32 %v2545, %v2536
        %v2553 = vmul.f32 %v2549, %v2537
        %v2554 = vmul.f32 %v2545, %v2538
        %v2555 = vmul.f32 %v2549, %v2539
        %v2556 = vmul.f32 %v2545, %v2540
        %v2557 = vmul.f32 %v2549, %v2541
        %v2558 = vadd.f32 %v2526, %v2550
        %v2559 = vadd.f32 %v2527, %v2551
        %v2560 = vadd.f32 %v2528, %v2552
        %v2561 = vadd.f32 %v2529, %v2553
        %v2562 = vadd.f32 %v2530, %v2554
        %v2563 = vadd.f32 %v2531, %v2555
        %v2564 = vadd.f32 %v2532, %v2556
        %v2565 = vadd.f32 %v2533, %v2557
        %v2566 = vld [vmem:[%s1490] sm:$0xff]
        %v2567 = vld [vmem:[%s1490 + $0x8] sm:$0xff]
        %v2568 = vld [vmem:[%s1490 + $0x10] sm:$0xff]
        %v2569 = vld [vmem:[%s1490 + $0x18] sm:$0xff]
        %v2570 = vld [vmem:[%s1490 + $0x20] sm:$0xff]
        %v2571 = vld [vmem:[%s1490 + $0x28] sm:$0xff]
        %v2572 = vld [vmem:[%s1490 + $0x30] sm:$0xff]
        %v2573 = vld [vmem:[%s1490 + $0x38] sm:$0xff]
        %v2574 = vlaneseq
        %v2575 = vshrl.u32 %v2574, 7
        %v2576 = vsub.s32 7, %v2575
        %v2577 = vrot.slane %v2348, %v2576
        %v2578 = vlaneseq
        %v2579 = vshrl.u32 %v2578, 7
        %v2580 = vsub.s32 7, %v2579
        %v2581 = vrot.slane %v2349, %v2580
        %v2582 = vmul.f32 %v2577, %v2566
        %v2583 = vmul.f32 %v2581, %v2567
        %v2584 = vmul.f32 %v2577, %v2568
        %v2585 = vmul.f32 %v2581, %v2569
        %v2586 = vmul.f32 %v2577, %v2570
        %v2587 = vmul.f32 %v2581, %v2571
        %v2588 = vmul.f32 %v2577, %v2572
        %v2589 = vmul.f32 %v2581, %v2573
        %v2590 = vadd.f32 %v2558, %v2582
        %v2591 = vadd.f32 %v2559, %v2583
        %v2592 = vadd.f32 %v2560, %v2584
        %v2593 = vadd.f32 %v2561, %v2585
        %v2594 = vadd.f32 %v2562, %v2586
        %v2595 = vadd.f32 %v2563, %v2587
        %v2596 = vadd.f32 %v2564, %v2588
        %v2597 = vadd.f32 %v2565, %v2589
        %v2598 = vpack.c.bf16 %v2592, %v2590
        %v2599 = vpack.c.bf16 %v2593, %v2591
        %v2600 = vpack.c.bf16 %v2596, %v2594
        %v2601 = vpack.c.bf16 %v2597, %v2595
        %v2606 = vunpack.c.l.b16 %v2598
        %v2607 = vunpack.c.l.b16 %v2599
        %v2608 = vunpack.c.h.b16 %v2598
        %v2609 = vunpack.c.h.b16 %v2599
        %v2610 = vunpack.c.l.b16 %v2600
        %v2611 = vunpack.c.l.b16 %v2601
        %v2612 = vunpack.c.h.b16 %v2600
        %v2613 = vunpack.c.h.b16 %v2601
        %v2614 = vpack.c.b16 %v2607, %v2606
        %v2615 = vpack.c.b16 %v2609, %v2608
        %v2616 = vpack.c.b16 %v2611, %v2610
        %v2617 = vpack.c.b16 %v2613, %v2612
        %2622 = vst [vmem:[#allocation3 + $0x60] sm:$0xff] %v2614
        %2623 = vst [vmem:[#allocation3 + $0x68] sm:$0xff] %v2615
        %2624 = vst [vmem:[#allocation3 + $0x70] sm:$0xff] %v2616
        %2625 = vst [vmem:[#allocation3 + $0x78] sm:$0xff] %v2617
        %s2626 = scalar_lea.vmem %s348, 32 [#allocation4]
        %v2627 = vld [vmem:[%s2626] sm:$0xff]
        %v2628 = vunpack.c.l.bf16 %v2627
        %v2629 = vunpack.c.h.bf16 %v2627
        %v2630 = vmul.f32 %v2628, %v705
        %v2631 = vmul.f32 %v2629, %v707
        %v2632 = vld [vmem:[#allocation2] sm:$0xff]
        %v2633 = vld [vmem:[#allocation2 + $0x8] sm:$0xff]
        %v2634 = vld [vmem:[#allocation2 + $0x10] sm:$0xff]
        %v2635 = vld [vmem:[#allocation2 + $0x18] sm:$0xff]
        %v2636 = vld [vmem:[#allocation2 + $0x20] sm:$0xff]
        %v2637 = vld [vmem:[#allocation2 + $0x28] sm:$0xff]
        %v2638 = vld [vmem:[#allocation2 + $0x30] sm:$0xff]
        %v2639 = vld [vmem:[#allocation2 + $0x38] sm:$0xff]
        %v2640 = vlaneseq
        %v2641 = vshrl.u32 %v2640, 7
        %v2642 = vsub.s32 0, %v2641
        %v2643 = vrot.slane %v2630, %v2642
        %v2644 = vlaneseq
        %v2645 = vshrl.u32 %v2644, 7
        %v2646 = vsub.s32 0, %v2645
        %v2647 = vrot.slane %v2631, %v2646
        %v2648 = vmul.f32 %v2643, %v2632
        %v2649 = vmul.f32 %v2647, %v2633
        %v2650 = vmul.f32 %v2643, %v2634
        %v2651 = vmul.f32 %v2647, %v2635
        %v2652 = vmul.f32 %v2643, %v2636
        %v2653 = vmul.f32 %v2647, %v2637
        %v2654 = vmul.f32 %v2643, %v2638
        %v2655 = vmul.f32 %v2647, %v2639
        %v2656 = vld [vmem:[%s956] sm:$0xff]
        %v2657 = vld [vmem:[%s956 + $0x8] sm:$0xff]
        %v2658 = vld [vmem:[%s956 + $0x10] sm:$0xff]
        %v2659 = vld [vmem:[%s956 + $0x18] sm:$0xff]
        %v2660 = vld [vmem:[%s956 + $0x20] sm:$0xff]
        %v2661 = vld [vmem:[%s956 + $0x28] sm:$0xff]
        %v2662 = vld [vmem:[%s956 + $0x30] sm:$0xff]
        %v2663 = vld [vmem:[%s956 + $0x38] sm:$0xff]
        %v2664 = vlaneseq
        %v2665 = vshrl.u32 %v2664, 7
        %v2666 = vsub.s32 1, %v2665
        %v2667 = vrot.slane %v2630, %v2666
        %v2668 = vlaneseq
        %v2669 = vshrl.u32 %v2668, 7
        %v2670 = vsub.s32 1, %v2669
        %v2671 = vrot.slane %v2631, %v2670
        %v2672 = vmul.f32 %v2667, %v2656
        %v2673 = vmul.f32 %v2671, %v2657
        %v2674 = vmul.f32 %v2667, %v2658
        %v2675 = vmul.f32 %v2671, %v2659
        %v2676 = vmul.f32 %v2667, %v2660
        %v2677 = vmul.f32 %v2671, %v2661
        %v2678 = vmul.f32 %v2667, %v2662
        %v2679 = vmul.f32 %v2671, %v2663
        %v2680 = vadd.f32 %v2648, %v2672
        %v2681 = vadd.f32 %v2649, %v2673
        %v2682 = vadd.f32 %v2650, %v2674
        %v2683 = vadd.f32 %v2651, %v2675
        %v2684 = vadd.f32 %v2652, %v2676
        %v2685 = vadd.f32 %v2653, %v2677
        %v2686 = vadd.f32 %v2654, %v2678
        %v2687 = vadd.f32 %v2655, %v2679
        %v2688 = vld [vmem:[%s1045] sm:$0xff]
        %v2689 = vld [vmem:[%s1045 + $0x8] sm:$0xff]
        %v2690 = vld [vmem:[%s1045 + $0x10] sm:$0xff]
        %v2691 = vld [vmem:[%s1045 + $0x18] sm:$0xff]
        %v2692 = vld [vmem:[%s1045 + $0x20] sm:$0xff]
        %v2693 = vld [vmem:[%s1045 + $0x28] sm:$0xff]
        %v2694 = vld [vmem:[%s1045 + $0x30] sm:$0xff]
        %v2695 = vld [vmem:[%s1045 + $0x38] sm:$0xff]
        %v2696 = vlaneseq
        %v2697 = vshrl.u32 %v2696, 7
        %v2698 = vsub.s32 2, %v2697
        %v2699 = vrot.slane %v2630, %v2698
        %v2700 = vlaneseq
        %v2701 = vshrl.u32 %v2700, 7
        %v2702 = vsub.s32 2, %v2701
        %v2703 = vrot.slane %v2631, %v2702
        %v2704 = vmul.f32 %v2699, %v2688
        %v2705 = vmul.f32 %v2703, %v2689
        %v2706 = vmul.f32 %v2699, %v2690
        %v2707 = vmul.f32 %v2703, %v2691
        %v2708 = vmul.f32 %v2699, %v2692
        %v2709 = vmul.f32 %v2703, %v2693
        %v2710 = vmul.f32 %v2699, %v2694
        %v2711 = vmul.f32 %v2703, %v2695
        %v2712 = vadd.f32 %v2680, %v2704
        %v2713 = vadd.f32 %v2681, %v2705
        %v2714 = vadd.f32 %v2682, %v2706
        %v2715 = vadd.f32 %v2683, %v2707
        %v2716 = vadd.f32 %v2684, %v2708
        %v2717 = vadd.f32 %v2685, %v2709
        %v2718 = vadd.f32 %v2686, %v2710
        %v2719 = vadd.f32 %v2687, %v2711
        %v2720 = vld [vmem:[%s1134] sm:$0xff]
        %v2721 = vld [vmem:[%s1134 + $0x8] sm:$0xff]
        %v2722 = vld [vmem:[%s1134 + $0x10] sm:$0xff]
        %v2723 = vld [vmem:[%s1134 + $0x18] sm:$0xff]
        %v2724 = vld [vmem:[%s1134 + $0x20] sm:$0xff]
        %v2725 = vld [vmem:[%s1134 + $0x28] sm:$0xff]
        %v2726 = vld [vmem:[%s1134 + $0x30] sm:$0xff]
        %v2727 = vld [vmem:[%s1134 + $0x38] sm:$0xff]
        %v2728 = vlaneseq
        %v2729 = vshrl.u32 %v2728, 7
        %v2730 = vsub.s32 3, %v2729
        %v2731 = vrot.slane %v2630, %v2730
        %v2732 = vlaneseq
        %v2733 = vshrl.u32 %v2732, 7
        %v2734 = vsub.s32 3, %v2733
        %v2735 = vrot.slane %v2631, %v2734
        %v2736 = vmul.f32 %v2731, %v2720
        %v2737 = vmul.f32 %v2735, %v2721
        %v2738 = vmul.f32 %v2731, %v2722
        %v2739 = vmul.f32 %v2735, %v2723
        %v2740 = vmul.f32 %v2731, %v2724
        %v2741 = vmul.f32 %v2735, %v2725
        %v2742 = vmul.f32 %v2731, %v2726
        %v2743 = vmul.f32 %v2735, %v2727
        %v2744 = vadd.f32 %v2712, %v2736
        %v2745 = vadd.f32 %v2713, %v2737
        %v2746 = vadd.f32 %v2714, %v2738
        %v2747 = vadd.f32 %v2715, %v2739
        %v2748 = vadd.f32 %v2716, %v2740
        %v2749 = vadd.f32 %v2717, %v2741
        %v2750 = vadd.f32 %v2718, %v2742
        %v2751 = vadd.f32 %v2719, %v2743
        %v2752 = vld [vmem:[%s1223] sm:$0xff]
        %v2753 = vld [vmem:[%s1223 + $0x8] sm:$0xff]
        %v2754 = vld [vmem:[%s1223 + $0x10] sm:$0xff]
        %v2755 = vld [vmem:[%s1223 + $0x18] sm:$0xff]
        %v2756 = vld [vmem:[%s1223 + $0x20] sm:$0xff]
        %v2757 = vld [vmem:[%s1223 + $0x28] sm:$0xff]
        %v2758 = vld [vmem:[%s1223 + $0x30] sm:$0xff]
        %v2759 = vld [vmem:[%s1223 + $0x38] sm:$0xff]
        %v2760 = vlaneseq
        %v2761 = vshrl.u32 %v2760, 7
        %v2762 = vsub.s32 4, %v2761
        %v2763 = vrot.slane %v2630, %v2762
        %v2764 = vlaneseq
        %v2765 = vshrl.u32 %v2764, 7
        %v2766 = vsub.s32 4, %v2765
        %v2767 = vrot.slane %v2631, %v2766
        %v2768 = vmul.f32 %v2763, %v2752
        %v2769 = vmul.f32 %v2767, %v2753
        %v2770 = vmul.f32 %v2763, %v2754
        %v2771 = vmul.f32 %v2767, %v2755
        %v2772 = vmul.f32 %v2763, %v2756
        %v2773 = vmul.f32 %v2767, %v2757
        %v2774 = vmul.f32 %v2763, %v2758
        %v2775 = vmul.f32 %v2767, %v2759
        %v2776 = vadd.f32 %v2744, %v2768
        %v2777 = vadd.f32 %v2745, %v2769
        %v2778 = vadd.f32 %v2746, %v2770
        %v2779 = vadd.f32 %v2747, %v2771
        %v2780 = vadd.f32 %v2748, %v2772
        %v2781 = vadd.f32 %v2749, %v2773
        %v2782 = vadd.f32 %v2750, %v2774
        %v2783 = vadd.f32 %v2751, %v2775
        %v2784 = vld [vmem:[%s1312] sm:$0xff]
        %v2785 = vld [vmem:[%s1312 + $0x8] sm:$0xff]
        %v2786 = vld [vmem:[%s1312 + $0x10] sm:$0xff]
        %v2787 = vld [vmem:[%s1312 + $0x18] sm:$0xff]
        %v2788 = vld [vmem:[%s1312 + $0x20] sm:$0xff]
        %v2789 = vld [vmem:[%s1312 + $0x28] sm:$0xff]
        %v2790 = vld [vmem:[%s1312 + $0x30] sm:$0xff]
        %v2791 = vld [vmem:[%s1312 + $0x38] sm:$0xff]
        %v2792 = vlaneseq
        %v2793 = vshrl.u32 %v2792, 7
        %v2794 = vsub.s32 5, %v2793
        %v2795 = vrot.slane %v2630, %v2794
        %v2796 = vlaneseq
        %v2797 = vshrl.u32 %v2796, 7
        %v2798 = vsub.s32 5, %v2797
        %v2799 = vrot.slane %v2631, %v2798
        %v2800 = vmul.f32 %v2795, %v2784
        %v2801 = vmul.f32 %v2799, %v2785
        %v2802 = vmul.f32 %v2795, %v2786
        %v2803 = vmul.f32 %v2799, %v2787
        %v2804 = vmul.f32 %v2795, %v2788
        %v2805 = vmul.f32 %v2799, %v2789
        %v2806 = vmul.f32 %v2795, %v2790
        %v2807 = vmul.f32 %v2799, %v2791
        %v2808 = vadd.f32 %v2776, %v2800
        %v2809 = vadd.f32 %v2777, %v2801
        %v2810 = vadd.f32 %v2778, %v2802
        %v2811 = vadd.f32 %v2779, %v2803
        %v2812 = vadd.f32 %v2780, %v2804
        %v2813 = vadd.f32 %v2781, %v2805
        %v2814 = vadd.f32 %v2782, %v2806
        %v2815 = vadd.f32 %v2783, %v2807
        %v2816 = vld [vmem:[%s1401] sm:$0xff]
        %v2817 = vld [vmem:[%s1401 + $0x8] sm:$0xff]
        %v2818 = vld [vmem:[%s1401 + $0x10] sm:$0xff]
        %v2819 = vld [vmem:[%s1401 + $0x18] sm:$0xff]
        %v2820 = vld [vmem:[%s1401 + $0x20] sm:$0xff]
        %v2821 = vld [vmem:[%s1401 + $0x28] sm:$0xff]
        %v2822 = vld [vmem:[%s1401 + $0x30] sm:$0xff]
        %v2823 = vld [vmem:[%s1401 + $0x38] sm:$0xff]
        %v2824 = vlaneseq
        %v2825 = vshrl.u32 %v2824, 7
        %v2826 = vsub.s32 6, %v2825
        %v2827 = vrot.slane %v2630, %v2826
        %v2828 = vlaneseq
        %v2829 = vshrl.u32 %v2828, 7
        %v2830 = vsub.s32 6, %v2829
        %v2831 = vrot.slane %v2631, %v2830
        %v2832 = vmul.f32 %v2827, %v2816
        %v2833 = vmul.f32 %v2831, %v2817
        %v2834 = vmul.f32 %v2827, %v2818
        %v2835 = vmul.f32 %v2831, %v2819
        %v2836 = vmul.f32 %v2827, %v2820
        %v2837 = vmul.f32 %v2831, %v2821
        %v2838 = vmul.f32 %v2827, %v2822
        %v2839 = vmul.f32 %v2831, %v2823
        %v2840 = vadd.f32 %v2808, %v2832
        %v2841 = vadd.f32 %v2809, %v2833
        %v2842 = vadd.f32 %v2810, %v2834
        %v2843 = vadd.f32 %v2811, %v2835
        %v2844 = vadd.f32 %v2812, %v2836
        %v2845 = vadd.f32 %v2813, %v2837
        %v2846 = vadd.f32 %v2814, %v2838
        %v2847 = vadd.f32 %v2815, %v2839
        %v2848 = vld [vmem:[%s1490] sm:$0xff]
        %v2849 = vld [vmem:[%s1490 + $0x8] sm:$0xff]
        %v2850 = vld [vmem:[%s1490 + $0x10] sm:$0xff]
        %v2851 = vld [vmem:[%s1490 + $0x18] sm:$0xff]
        %v2852 = vld [vmem:[%s1490 + $0x20] sm:$0xff]
        %v2853 = vld [vmem:[%s1490 + $0x28] sm:$0xff]
        %v2854 = vld [vmem:[%s1490 + $0x30] sm:$0xff]
        %v2855 = vld [vmem:[%s1490 + $0x38] sm:$0xff]
        %v2856 = vlaneseq
        %v2857 = vshrl.u32 %v2856, 7
        %v2858 = vsub.s32 7, %v2857
        %v2859 = vrot.slane %v2630, %v2858
        %v2860 = vlaneseq
        %v2861 = vshrl.u32 %v2860, 7
        %v2862 = vsub.s32 7, %v2861
        %v2863 = vrot.slane %v2631, %v2862
        %v2864 = vmul.f32 %v2859, %v2848
        %v2865 = vmul.f32 %v2863, %v2849
        %v2866 = vmul.f32 %v2859, %v2850
        %v2867 = vmul.f32 %v2863, %v2851
        %v2868 = vmul.f32 %v2859, %v2852
        %v2869 = vmul.f32 %v2863, %v2853
        %v2870 = vmul.f32 %v2859, %v2854
        %v2871 = vmul.f32 %v2863, %v2855
        %v2872 = vadd.f32 %v2840, %v2864
        %v2873 = vadd.f32 %v2841, %v2865
        %v2874 = vadd.f32 %v2842, %v2866
        %v2875 = vadd.f32 %v2843, %v2867
        %v2876 = vadd.f32 %v2844, %v2868
        %v2877 = vadd.f32 %v2845, %v2869
        %v2878 = vadd.f32 %v2846, %v2870
        %v2879 = vadd.f32 %v2847, %v2871
        %v2880 = vpack.c.bf16 %v2874, %v2872
        %v2881 = vpack.c.bf16 %v2875, %v2873
        %v2882 = vpack.c.bf16 %v2878, %v2876
        %v2883 = vpack.c.bf16 %v2879, %v2877
        %v2888 = vunpack.c.l.b16 %v2880
        %v2889 = vunpack.c.l.b16 %v2881
        %v2890 = vunpack.c.h.b16 %v2880
        %v2891 = vunpack.c.h.b16 %v2881
        %v2892 = vunpack.c.l.b16 %v2882
        %v2893 = vunpack.c.l.b16 %v2883
        %v2894 = vunpack.c.h.b16 %v2882
        %v2895 = vunpack.c.h.b16 %v2883
        %v2896 = vpack.c.b16 %v2889, %v2888
        %v2897 = vpack.c.b16 %v2891, %v2890
        %v2898 = vpack.c.b16 %v2893, %v2892
        %v2899 = vpack.c.b16 %v2895, %v2894
        %2904 = vst [vmem:[#allocation3 + $0x80] sm:$0xff] %v2896
        %2905 = vst [vmem:[#allocation3 + $0x88] sm:$0xff] %v2897
        %2906 = vst [vmem:[#allocation3 + $0x90] sm:$0xff] %v2898
        %2907 = vst [vmem:[#allocation3 + $0x98] sm:$0xff] %v2899
        %s2908 = scalar_lea.vmem %s348, 40 [#allocation4]
        %v2909 = vld [vmem:[%s2908] sm:$0xff]
        %v2910 = vunpack.c.l.bf16 %v2909
        %v2911 = vunpack.c.h.bf16 %v2909
        %v2912 = vmul.f32 %v2910, %v705
        %v2913 = vmul.f32 %v2911, %v707
        %v2914 = vld [vmem:[#allocation2] sm:$0xff]
        %v2915 = vld [vmem:[#allocation2 + $0x8] sm:$0xff]
        %v2916 = vld [vmem:[#allocation2 + $0x10] sm:$0xff]
        %v2917 = vld [vmem:[#allocation2 + $0x18] sm:$0xff]
        %v2918 = vld [vmem:[#allocation2 + $0x20] sm:$0xff]
        %v2919 = vld [vmem:[#allocation2 + $0x28] sm:$0xff]
        %v2920 = vld [vmem:[#allocation2 + $0x30] sm:$0xff]
        %v2921 = vld [vmem:[#allocation2 + $0x38] sm:$0xff]
        %v2922 = vlaneseq
        %v2923 = vshrl.u32 %v2922, 7
        %v2924 = vsub.s32 0, %v2923
        %v2925 = vrot.slane %v2912, %v2924
        %v2926 = vlaneseq
        %v2927 = vshrl.u32 %v2926, 7
        %v2928 = vsub.s32 0, %v2927
        %v2929 = vrot.slane %v2913, %v2928
        %v2930 = vmul.f32 %v2925, %v2914
        %v2931 = vmul.f32 %v2929, %v2915
        %v2932 = vmul.f32 %v2925, %v2916
        %v2933 = vmul.f32 %v2929, %v2917
        %v2934 = vmul.f32 %v2925, %v2918
        %v2935 = vmul.f32 %v2929, %v2919
        %v2936 = vmul.f32 %v2925, %v2920
        %v2937 = vmul.f32 %v2929, %v2921
        %v2938 = vld [vmem:[%s956] sm:$0xff]
        %v2939 = vld [vmem:[%s956 + $0x8] sm:$0xff]
        %v2940 = vld [vmem:[%s956 + $0x10] sm:$0xff]
        %v2941 = vld [vmem:[%s956 + $0x18] sm:$0xff]
        %v2942 = vld [vmem:[%s956 + $0x20] sm:$0xff]
        %v2943 = vld [vmem:[%s956 + $0x28] sm:$0xff]
        %v2944 = vld [vmem:[%s956 + $0x30] sm:$0xff]
        %v2945 = vld [vmem:[%s956 + $0x38] sm:$0xff]
        %v2946 = vlaneseq
        %v2947 = vshrl.u32 %v2946, 7
        %v2948 = vsub.s32 1, %v2947
        %v2949 = vrot.slane %v2912, %v2948
        %v2950 = vlaneseq
        %v2951 = vshrl.u32 %v2950, 7
        %v2952 = vsub.s32 1, %v2951
        %v2953 = vrot.slane %v2913, %v2952
        %v2954 = vmul.f32 %v2949, %v2938
        %v2955 = vmul.f32 %v2953, %v2939
        %v2956 = vmul.f32 %v2949, %v2940
        %v2957 = vmul.f32 %v2953, %v2941
        %v2958 = vmul.f32 %v2949, %v2942
        %v2959 = vmul.f32 %v2953, %v2943
        %v2960 = vmul.f32 %v2949, %v2944
        %v2961 = vmul.f32 %v2953, %v2945
        %v2962 = vadd.f32 %v2930, %v2954
        %v2963 = vadd.f32 %v2931, %v2955
        %v2964 = vadd.f32 %v2932, %v2956
        %v2965 = vadd.f32 %v2933, %v2957
        %v2966 = vadd.f32 %v2934, %v2958
        %v2967 = vadd.f32 %v2935, %v2959
        %v2968 = vadd.f32 %v2936, %v2960
        %v2969 = vadd.f32 %v2937, %v2961
        %v2970 = vld [vmem:[%s1045] sm:$0xff]
        %v2971 = vld [vmem:[%s1045 + $0x8] sm:$0xff]
        %v2972 = vld [vmem:[%s1045 + $0x10] sm:$0xff]
        %v2973 = vld [vmem:[%s1045 + $0x18] sm:$0xff]
        %v2974 = vld [vmem:[%s1045 + $0x20] sm:$0xff]
        %v2975 = vld [vmem:[%s1045 + $0x28] sm:$0xff]
        %v2976 = vld [vmem:[%s1045 + $0x30] sm:$0xff]
        %v2977 = vld [vmem:[%s1045 + $0x38] sm:$0xff]
        %v2978 = vlaneseq
        %v2979 = vshrl.u32 %v2978, 7
        %v2980 = vsub.s32 2, %v2979
        %v2981 = vrot.slane %v2912, %v2980
        %v2982 = vlaneseq
        %v2983 = vshrl.u32 %v2982, 7
        %v2984 = vsub.s32 2, %v2983
        %v2985 = vrot.slane %v2913, %v2984
        %v2986 = vmul.f32 %v2981, %v2970
        %v2987 = vmul.f32 %v2985, %v2971
        %v2988 = vmul.f32 %v2981, %v2972
        %v2989 = vmul.f32 %v2985, %v2973
        %v2990 = vmul.f32 %v2981, %v2974
        %v2991 = vmul.f32 %v2985, %v2975
        %v2992 = vmul.f32 %v2981, %v2976
        %v2993 = vmul.f32 %v2985, %v2977
        %v2994 = vadd.f32 %v2962, %v2986
        %v2995 = vadd.f32 %v2963, %v2987
        %v2996 = vadd.f32 %v2964, %v2988
        %v2997 = vadd.f32 %v2965, %v2989
        %v2998 = vadd.f32 %v2966, %v2990
        %v2999 = vadd.f32 %v2967, %v2991
        %v3000 = vadd.f32 %v2968, %v2992
        %v3001 = vadd.f32 %v2969, %v2993
        %v3002 = vld [vmem:[%s1134] sm:$0xff]
        %v3003 = vld [vmem:[%s1134 + $0x8] sm:$0xff]
        %v3004 = vld [vmem:[%s1134 + $0x10] sm:$0xff]
        %v3005 = vld [vmem:[%s1134 + $0x18] sm:$0xff]
        %v3006 = vld [vmem:[%s1134 + $0x20] sm:$0xff]
        %v3007 = vld [vmem:[%s1134 + $0x28] sm:$0xff]
        %v3008 = vld [vmem:[%s1134 + $0x30] sm:$0xff]
        %v3009 = vld [vmem:[%s1134 + $0x38] sm:$0xff]
        %v3010 = vlaneseq
        %v3011 = vshrl.u32 %v3010, 7
        %v3012 = vsub.s32 3, %v3011
        %v3013 = vrot.slane %v2912, %v3012
        %v3014 = vlaneseq
        %v3015 = vshrl.u32 %v3014, 7
        %v3016 = vsub.s32 3, %v3015
        %v3017 = vrot.slane %v2913, %v3016
        %v3018 = vmul.f32 %v3013, %v3002
        %v3019 = vmul.f32 %v3017, %v3003
        %v3020 = vmul.f32 %v3013, %v3004
        %v3021 = vmul.f32 %v3017, %v3005
        %v3022 = vmul.f32 %v3013, %v3006
        %v3023 = vmul.f32 %v3017, %v3007
        %v3024 = vmul.f32 %v3013, %v3008
        %v3025 = vmul.f32 %v3017, %v3009
        %v3026 = vadd.f32 %v2994, %v3018
        %v3027 = vadd.f32 %v2995, %v3019
        %v3028 = vadd.f32 %v2996, %v3020
        %v3029 = vadd.f32 %v2997, %v3021
        %v3030 = vadd.f32 %v2998, %v3022
        %v3031 = vadd.f32 %v2999, %v3023
        %v3032 = vadd.f32 %v3000, %v3024
        %v3033 = vadd.f32 %v3001, %v3025
        %v3034 = vld [vmem:[%s1223] sm:$0xff]
        %v3035 = vld [vmem:[%s1223 + $0x8] sm:$0xff]
        %v3036 = vld [vmem:[%s1223 + $0x10] sm:$0xff]
        %v3037 = vld [vmem:[%s1223 + $0x18] sm:$0xff]
        %v3038 = vld [vmem:[%s1223 + $0x20] sm:$0xff]
        %v3039 = vld [vmem:[%s1223 + $0x28] sm:$0xff]
        %v3040 = vld [vmem:[%s1223 + $0x30] sm:$0xff]
        %v3041 = vld [vmem:[%s1223 + $0x38] sm:$0xff]
        %v3042 = vlaneseq
        %v3043 = vshrl.u32 %v3042, 7
        %v3044 = vsub.s32 4, %v3043
        %v3045 = vrot.slane %v2912, %v3044
        %v3046 = vlaneseq
        %v3047 = vshrl.u32 %v3046, 7
        %v3048 = vsub.s32 4, %v3047
        %v3049 = vrot.slane %v2913, %v3048
        %v3050 = vmul.f32 %v3045, %v3034
        %v3051 = vmul.f32 %v3049, %v3035
        %v3052 = vmul.f32 %v3045, %v3036
        %v3053 = vmul.f32 %v3049, %v3037
        %v3054 = vmul.f32 %v3045, %v3038
        %v3055 = vmul.f32 %v3049, %v3039
        %v3056 = vmul.f32 %v3045, %v3040
        %v3057 = vmul.f32 %v3049, %v3041
        %v3058 = vadd.f32 %v3026, %v3050
        %v3059 = vadd.f32 %v3027, %v3051
        %v3060 = vadd.f32 %v3028, %v3052
        %v3061 = vadd.f32 %v3029, %v3053
        %v3062 = vadd.f32 %v3030, %v3054
        %v3063 = vadd.f32 %v3031, %v3055
        %v3064 = vadd.f32 %v3032, %v3056
        %v3065 = vadd.f32 %v3033, %v3057
        %v3066 = vld [vmem:[%s1312] sm:$0xff]
        %v3067 = vld [vmem:[%s1312 + $0x8] sm:$0xff]
        %v3068 = vld [vmem:[%s1312 + $0x10] sm:$0xff]
        %v3069 = vld [vmem:[%s1312 + $0x18] sm:$0xff]
        %v3070 = vld [vmem:[%s1312 + $0x20] sm:$0xff]
        %v3071 = vld [vmem:[%s1312 + $0x28] sm:$0xff]
        %v3072 = vld [vmem:[%s1312 + $0x30] sm:$0xff]
        %v3073 = vld [vmem:[%s1312 + $0x38] sm:$0xff]
        %v3074 = vlaneseq
        %v3075 = vshrl.u32 %v3074, 7
        %v3076 = vsub.s32 5, %v3075
        %v3077 = vrot.slane %v2912, %v3076
        %v3078 = vlaneseq
        %v3079 = vshrl.u32 %v3078, 7
        %v3080 = vsub.s32 5, %v3079
        %v3081 = vrot.slane %v2913, %v3080
        %v3082 = vmul.f32 %v3077, %v3066
        %v3083 = vmul.f32 %v3081, %v3067
        %v3084 = vmul.f32 %v3077, %v3068
        %v3085 = vmul.f32 %v3081, %v3069
        %v3086 = vmul.f32 %v3077, %v3070
        %v3087 = vmul.f32 %v3081, %v3071
        %v3088 = vmul.f32 %v3077, %v3072
        %v3089 = vmul.f32 %v3081, %v3073
        %v3090 = vadd.f32 %v3058, %v3082
        %v3091 = vadd.f32 %v3059, %v3083
        %v3092 = vadd.f32 %v3060, %v3084
        %v3093 = vadd.f32 %v3061, %v3085
        %v3094 = vadd.f32 %v3062, %v3086
        %v3095 = vadd.f32 %v3063, %v3087
        %v3096 = vadd.f32 %v3064, %v3088
        %v3097 = vadd.f32 %v3065, %v3089
        %v3098 = vld [vmem:[%s1401] sm:$0xff]
        %v3099 = vld [vmem:[%s1401 + $0x8] sm:$0xff]
        %v3100 = vld [vmem:[%s1401 + $0x10] sm:$0xff]
        %v3101 = vld [vmem:[%s1401 + $0x18] sm:$0xff]
        %v3102 = vld [vmem:[%s1401 + $0x20] sm:$0xff]
        %v3103 = vld [vmem:[%s1401 + $0x28] sm:$0xff]
        %v3104 = vld [vmem:[%s1401 + $0x30] sm:$0xff]
        %v3105 = vld [vmem:[%s1401 + $0x38] sm:$0xff]
        %v3106 = vlaneseq
        %v3107 = vshrl.u32 %v3106, 7
        %v3108 = vsub.s32 6, %v3107
        %v3109 = vrot.slane %v2912, %v3108
        %v3110 = vlaneseq
        %v3111 = vshrl.u32 %v3110, 7
        %v3112 = vsub.s32 6, %v3111
        %v3113 = vrot.slane %v2913, %v3112
        %v3114 = vmul.f32 %v3109, %v3098
        %v3115 = vmul.f32 %v3113, %v3099
        %v3116 = vmul.f32 %v3109, %v3100
        %v3117 = vmul.f32 %v3113, %v3101
        %v3118 = vmul.f32 %v3109, %v3102
        %v3119 = vmul.f32 %v3113, %v3103
        %v3120 = vmul.f32 %v3109, %v3104
        %v3121 = vmul.f32 %v3113, %v3105
        %v3122 = vadd.f32 %v3090, %v3114
        %v3123 = vadd.f32 %v3091, %v3115
        %v3124 = vadd.f32 %v3092, %v3116
        %v3125 = vadd.f32 %v3093, %v3117
        %v3126 = vadd.f32 %v3094, %v3118
        %v3127 = vadd.f32 %v3095, %v3119
        %v3128 = vadd.f32 %v3096, %v3120
        %v3129 = vadd.f32 %v3097, %v3121
        %v3130 = vld [vmem:[%s1490] sm:$0xff]
        %v3131 = vld [vmem:[%s1490 + $0x8] sm:$0xff]
        %v3132 = vld [vmem:[%s1490 + $0x10] sm:$0xff]
        %v3133 = vld [vmem:[%s1490 + $0x18] sm:$0xff]
        %v3134 = vld [vmem:[%s1490 + $0x20] sm:$0xff]
        %v3135 = vld [vmem:[%s1490 + $0x28] sm:$0xff]
        %v3136 = vld [vmem:[%s1490 + $0x30] sm:$0xff]
        %v3137 = vld [vmem:[%s1490 + $0x38] sm:$0xff]
        %v3138 = vlaneseq
        %v3139 = vshrl.u32 %v3138, 7
        %v3140 = vsub.s32 7, %v3139
        %v3141 = vrot.slane %v2912, %v3140
        %v3142 = vlaneseq
        %v3143 = vshrl.u32 %v3142, 7
        %v3144 = vsub.s32 7, %v3143
        %v3145 = vrot.slane %v2913, %v3144
        %v3146 = vmul.f32 %v3141, %v3130
        %v3147 = vmul.f32 %v3145, %v3131
        %v3148 = vmul.f32 %v3141, %v3132
        %v3149 = vmul.f32 %v3145, %v3133
        %v3150 = vmul.f32 %v3141, %v3134
        %v3151 = vmul.f32 %v3145, %v3135
        %v3152 = vmul.f32 %v3141, %v3136
        %v3153 = vmul.f32 %v3145, %v3137
        %v3154 = vadd.f32 %v3122, %v3146
        %v3155 = vadd.f32 %v3123, %v3147
        %v3156 = vadd.f32 %v3124, %v3148
        %v3157 = vadd.f32 %v3125, %v3149
        %v3158 = vadd.f32 %v3126, %v3150
        %v3159 = vadd.f32 %v3127, %v3151
        %v3160 = vadd.f32 %v3128, %v3152
        %v3161 = vadd.f32 %v3129, %v3153
        %v3162 = vpack.c.bf16 %v3156, %v3154
        %v3163 = vpack.c.bf16 %v3157, %v3155
        %v3164 = vpack.c.bf16 %v3160, %v3158
        %v3165 = vpack.c.bf16 %v3161, %v3159
        %v3170 = vunpack.c.l.b16 %v3162
        %v3171 = vunpack.c.l.b16 %v3163
        %v3172 = vunpack.c.h.b16 %v3162
        %v3173 = vunpack.c.h.b16 %v3163
        %v3174 = vunpack.c.l.b16 %v3164
        %v3175 = vunpack.c.l.b16 %v3165
        %v3176 = vunpack.c.h.b16 %v3164
        %v3177 = vunpack.c.h.b16 %v3165
        %v3178 = vpack.c.b16 %v3171, %v3170
        %v3179 = vpack.c.b16 %v3173, %v3172
        %v3180 = vpack.c.b16 %v3175, %v3174
        %v3181 = vpack.c.b16 %v3177, %v3176
        %3186 = vst [vmem:[#allocation3 + $0xa0] sm:$0xff] %v3178
        %3187 = vst [vmem:[#allocation3 + $0xa8] sm:$0xff] %v3179
        %3188 = vst [vmem:[#allocation3 + $0xb0] sm:$0xff] %v3180
        %3189 = vst [vmem:[#allocation3 + $0xb8] sm:$0xff] %v3181
        %s3190 = scalar_lea.vmem %s348, 48 [#allocation4]
        %v3191 = vld [vmem:[%s3190] sm:$0xff]
        %v3192 = vunpack.c.l.bf16 %v3191
        %v3193 = vunpack.c.h.bf16 %v3191
        %v3194 = vmul.f32 %v3192, %v705
        %v3195 = vmul.f32 %v3193, %v707
        %v3196 = vld [vmem:[#allocation2] sm:$0xff]
        %v3197 = vld [vmem:[#allocation2 + $0x8] sm:$0xff]
        %v3198 = vld [vmem:[#allocation2 + $0x10] sm:$0xff]
        %v3199 = vld [vmem:[#allocation2 + $0x18] sm:$0xff]
        %v3200 = vld [vmem:[#allocation2 + $0x20] sm:$0xff]
        %v3201 = vld [vmem:[#allocation2 + $0x28] sm:$0xff]
        %v3202 = vld [vmem:[#allocation2 + $0x30] sm:$0xff]
        %v3203 = vld [vmem:[#allocation2 + $0x38] sm:$0xff]
        %v3204 = vlaneseq
        %v3205 = vshrl.u32 %v3204, 7
        %v3206 = vsub.s32 0, %v3205
        %v3207 = vrot.slane %v3194, %v3206
        %v3208 = vlaneseq
        %v3209 = vshrl.u32 %v3208, 7
        %v3210 = vsub.s32 0, %v3209
        %v3211 = vrot.slane %v3195, %v3210
        %v3212 = vmul.f32 %v3207, %v3196
        %v3213 = vmul.f32 %v3211, %v3197
        %v3214 = vmul.f32 %v3207, %v3198
        %v3215 = vmul.f32 %v3211, %v3199
        %v3216 = vmul.f32 %v3207, %v3200
        %v3217 = vmul.f32 %v3211, %v3201
        %v3218 = vmul.f32 %v3207, %v3202
        %v3219 = vmul.f32 %v3211, %v3203
        %v3220 = vld [vmem:[%s956] sm:$0xff]
        %v3221 = vld [vmem:[%s956 + $0x8] sm:$0xff]
        %v3222 = vld [vmem:[%s956 + $0x10] sm:$0xff]
        %v3223 = vld [vmem:[%s956 + $0x18] sm:$0xff]
        %v3224 = vld [vmem:[%s956 + $0x20] sm:$0xff]
        %v3225 = vld [vmem:[%s956 + $0x28] sm:$0xff]
        %v3226 = vld [vmem:[%s956 + $0x30] sm:$0xff]
        %v3227 = vld [vmem:[%s956 + $0x38] sm:$0xff]
        %v3228 = vlaneseq
        %v3229 = vshrl.u32 %v3228, 7
        %v3230 = vsub.s32 1, %v3229
        %v3231 = vrot.slane %v3194, %v3230
        %v3232 = vlaneseq
        %v3233 = vshrl.u32 %v3232, 7
        %v3234 = vsub.s32 1, %v3233
        %v3235 = vrot.slane %v3195, %v3234
        %v3236 = vmul.f32 %v3231, %v3220
        %v3237 = vmul.f32 %v3235, %v3221
        %v3238 = vmul.f32 %v3231, %v3222
        %v3239 = vmul.f32 %v3235, %v3223
        %v3240 = vmul.f32 %v3231, %v3224
        %v3241 = vmul.f32 %v3235, %v3225
        %v3242 = vmul.f32 %v3231, %v3226
        %v3243 = vmul.f32 %v3235, %v3227
        %v3244 = vadd.f32 %v3212, %v3236
        %v3245 = vadd.f32 %v3213, %v3237
        %v3246 = vadd.f32 %v3214, %v3238
        %v3247 = vadd.f32 %v3215, %v3239
        %v3248 = vadd.f32 %v3216, %v3240
        %v3249 = vadd.f32 %v3217, %v3241
        %v3250 = vadd.f32 %v3218, %v3242
        %v3251 = vadd.f32 %v3219, %v3243
        %v3252 = vld [vmem:[%s1045] sm:$0xff]
        %v3253 = vld [vmem:[%s1045 + $0x8] sm:$0xff]
        %v3254 = vld [vmem:[%s1045 + $0x10] sm:$0xff]
        %v3255 = vld [vmem:[%s1045 + $0x18] sm:$0xff]
        %v3256 = vld [vmem:[%s1045 + $0x20] sm:$0xff]
        %v3257 = vld [vmem:[%s1045 + $0x28] sm:$0xff]
        %v3258 = vld [vmem:[%s1045 + $0x30] sm:$0xff]
        %v3259 = vld [vmem:[%s1045 + $0x38] sm:$0xff]
        %v3260 = vlaneseq
        %v3261 = vshrl.u32 %v3260, 7
        %v3262 = vsub.s32 2, %v3261
        %v3263 = vrot.slane %v3194, %v3262
        %v3264 = vlaneseq
        %v3265 = vshrl.u32 %v3264, 7
        %v3266 = vsub.s32 2, %v3265
        %v3267 = vrot.slane %v3195, %v3266
        %v3268 = vmul.f32 %v3263, %v3252
        %v3269 = vmul.f32 %v3267, %v3253
        %v3270 = vmul.f32 %v3263, %v3254
        %v3271 = vmul.f32 %v3267, %v3255
        %v3272 = vmul.f32 %v3263, %v3256
        %v3273 = vmul.f32 %v3267, %v3257
        %v3274 = vmul.f32 %v3263, %v3258
        %v3275 = vmul.f32 %v3267, %v3259
        %v3276 = vadd.f32 %v3244, %v3268
        %v3277 = vadd.f32 %v3245, %v3269
        %v3278 = vadd.f32 %v3246, %v3270
        %v3279 = vadd.f32 %v3247, %v3271
        %v3280 = vadd.f32 %v3248, %v3272
        %v3281 = vadd.f32 %v3249, %v3273
        %v3282 = vadd.f32 %v3250, %v3274
        %v3283 = vadd.f32 %v3251, %v3275
        %v3284 = vld [vmem:[%s1134] sm:$0xff]
        %v3285 = vld [vmem:[%s1134 + $0x8] sm:$0xff]
        %v3286 = vld [vmem:[%s1134 + $0x10] sm:$0xff]
        %v3287 = vld [vmem:[%s1134 + $0x18] sm:$0xff]
        %v3288 = vld [vmem:[%s1134 + $0x20] sm:$0xff]
        %v3289 = vld [vmem:[%s1134 + $0x28] sm:$0xff]
        %v3290 = vld [vmem:[%s1134 + $0x30] sm:$0xff]
        %v3291 = vld [vmem:[%s1134 + $0x38] sm:$0xff]
        %v3292 = vlaneseq
        %v3293 = vshrl.u32 %v3292, 7
        %v3294 = vsub.s32 3, %v3293
        %v3295 = vrot.slane %v3194, %v3294
        %v3296 = vlaneseq
        %v3297 = vshrl.u32 %v3296, 7
        %v3298 = vsub.s32 3, %v3297
        %v3299 = vrot.slane %v3195, %v3298
        %v3300 = vmul.f32 %v3295, %v3284
        %v3301 = vmul.f32 %v3299, %v3285
        %v3302 = vmul.f32 %v3295, %v3286
        %v3303 = vmul.f32 %v3299, %v3287
        %v3304 = vmul.f32 %v3295, %v3288
        %v3305 = vmul.f32 %v3299, %v3289
        %v3306 = vmul.f32 %v3295, %v3290
        %v3307 = vmul.f32 %v3299, %v3291
        %v3308 = vadd.f32 %v3276, %v3300
        %v3309 = vadd.f32 %v3277, %v3301
        %v3310 = vadd.f32 %v3278, %v3302
        %v3311 = vadd.f32 %v3279, %v3303
        %v3312 = vadd.f32 %v3280, %v3304
        %v3313 = vadd.f32 %v3281, %v3305
        %v3314 = vadd.f32 %v3282, %v3306
        %v3315 = vadd.f32 %v3283, %v3307
        %v3316 = vld [vmem:[%s1223] sm:$0xff]
        %v3317 = vld [vmem:[%s1223 + $0x8] sm:$0xff]
        %v3318 = vld [vmem:[%s1223 + $0x10] sm:$0xff]
        %v3319 = vld [vmem:[%s1223 + $0x18] sm:$0xff]
        %v3320 = vld [vmem:[%s1223 + $0x20] sm:$0xff]
        %v3321 = vld [vmem:[%s1223 + $0x28] sm:$0xff]
        %v3322 = vld [vmem:[%s1223 + $0x30] sm:$0xff]
        %v3323 = vld [vmem:[%s1223 + $0x38] sm:$0xff]
        %v3324 = vlaneseq
        %v3325 = vshrl.u32 %v3324, 7
        %v3326 = vsub.s32 4, %v3325
        %v3327 = vrot.slane %v3194, %v3326
        %v3328 = vlaneseq
        %v3329 = vshrl.u32 %v3328, 7
        %v3330 = vsub.s32 4, %v3329
        %v3331 = vrot.slane %v3195, %v3330
        %v3332 = vmul.f32 %v3327, %v3316
        %v3333 = vmul.f32 %v3331, %v3317
        %v3334 = vmul.f32 %v3327, %v3318
        %v3335 = vmul.f32 %v3331, %v3319
        %v3336 = vmul.f32 %v3327, %v3320
        %v3337 = vmul.f32 %v3331, %v3321
        %v3338 = vmul.f32 %v3327, %v3322
        %v3339 = vmul.f32 %v3331, %v3323
        %v3340 = vadd.f32 %v3308, %v3332
        %v3341 = vadd.f32 %v3309, %v3333
        %v3342 = vadd.f32 %v3310, %v3334
        %v3343 = vadd.f32 %v3311, %v3335
        %v3344 = vadd.f32 %v3312, %v3336
        %v3345 = vadd.f32 %v3313, %v3337
        %v3346 = vadd.f32 %v3314, %v3338
        %v3347 = vadd.f32 %v3315, %v3339
        %v3348 = vld [vmem:[%s1312] sm:$0xff]
        %v3349 = vld [vmem:[%s1312 + $0x8] sm:$0xff]
        %v3350 = vld [vmem:[%s1312 + $0x10] sm:$0xff]
        %v3351 = vld [vmem:[%s1312 + $0x18] sm:$0xff]
        %v3352 = vld [vmem:[%s1312 + $0x20] sm:$0xff]
        %v3353 = vld [vmem:[%s1312 + $0x28] sm:$0xff]
        %v3354 = vld [vmem:[%s1312 + $0x30] sm:$0xff]
        %v3355 = vld [vmem:[%s1312 + $0x38] sm:$0xff]
        %v3356 = vlaneseq
        %v3357 = vshrl.u32 %v3356, 7
        %v3358 = vsub.s32 5, %v3357
        %v3359 = vrot.slane %v3194, %v3358
        %v3360 = vlaneseq
        %v3361 = vshrl.u32 %v3360, 7
        %v3362 = vsub.s32 5, %v3361
        %v3363 = vrot.slane %v3195, %v3362
        %v3364 = vmul.f32 %v3359, %v3348
        %v3365 = vmul.f32 %v3363, %v3349
        %v3366 = vmul.f32 %v3359, %v3350
        %v3367 = vmul.f32 %v3363, %v3351
        %v3368 = vmul.f32 %v3359, %v3352
        %v3369 = vmul.f32 %v3363, %v3353
        %v3370 = vmul.f32 %v3359, %v3354
        %v3371 = vmul.f32 %v3363, %v3355
        %v3372 = vadd.f32 %v3340, %v3364
        %v3373 = vadd.f32 %v3341, %v3365
        %v3374 = vadd.f32 %v3342, %v3366
        %v3375 = vadd.f32 %v3343, %v3367
        %v3376 = vadd.f32 %v3344, %v3368
        %v3377 = vadd.f32 %v3345, %v3369
        %v3378 = vadd.f32 %v3346, %v3370
        %v3379 = vadd.f32 %v3347, %v3371
        %v3380 = vld [vmem:[%s1401] sm:$0xff]
        %v3381 = vld [vmem:[%s1401 + $0x8] sm:$0xff]
        %v3382 = vld [vmem:[%s1401 + $0x10] sm:$0xff]
        %v3383 = vld [vmem:[%s1401 + $0x18] sm:$0xff]
        %v3384 = vld [vmem:[%s1401 + $0x20] sm:$0xff]
        %v3385 = vld [vmem:[%s1401 + $0x28] sm:$0xff]
        %v3386 = vld [vmem:[%s1401 + $0x30] sm:$0xff]
        %v3387 = vld [vmem:[%s1401 + $0x38] sm:$0xff]
        %v3388 = vlaneseq
        %v3389 = vshrl.u32 %v3388, 7
        %v3390 = vsub.s32 6, %v3389
        %v3391 = vrot.slane %v3194, %v3390
        %v3392 = vlaneseq
        %v3393 = vshrl.u32 %v3392, 7
        %v3394 = vsub.s32 6, %v3393
        %v3395 = vrot.slane %v3195, %v3394
        %v3396 = vmul.f32 %v3391, %v3380
        %v3397 = vmul.f32 %v3395, %v3381
        %v3398 = vmul.f32 %v3391, %v3382
        %v3399 = vmul.f32 %v3395, %v3383
        %v3400 = vmul.f32 %v3391, %v3384
        %v3401 = vmul.f32 %v3395, %v3385
        %v3402 = vmul.f32 %v3391, %v3386
        %v3403 = vmul.f32 %v3395, %v3387
        %v3404 = vadd.f32 %v3372, %v3396
        %v3405 = vadd.f32 %v3373, %v3397
        %v3406 = vadd.f32 %v3374, %v3398
        %v3407 = vadd.f32 %v3375, %v3399
        %v3408 = vadd.f32 %v3376, %v3400
        %v3409 = vadd.f32 %v3377, %v3401
        %v3410 = vadd.f32 %v3378, %v3402
        %v3411 = vadd.f32 %v3379, %v3403
        %v3412 = vld [vmem:[%s1490] sm:$0xff]
        %v3413 = vld [vmem:[%s1490 + $0x8] sm:$0xff]
        %v3414 = vld [vmem:[%s1490 + $0x10] sm:$0xff]
        %v3415 = vld [vmem:[%s1490 + $0x18] sm:$0xff]
        %v3416 = vld [vmem:[%s1490 + $0x20] sm:$0xff]
        %v3417 = vld [vmem:[%s1490 + $0x28] sm:$0xff]
        %v3418 = vld [vmem:[%s1490 + $0x30] sm:$0xff]
        %v3419 = vld [vmem:[%s1490 + $0x38] sm:$0xff]
        %v3420 = vlaneseq
        %v3421 = vshrl.u32 %v3420, 7
        %v3422 = vsub.s32 7, %v3421
        %v3423 = vrot.slane %v3194, %v3422
        %v3424 = vlaneseq
        %v3425 = vshrl.u32 %v3424, 7
        %v3426 = vsub.s32 7, %v3425
        %v3427 = vrot.slane %v3195, %v3426
        %v3428 = vmul.f32 %v3423, %v3412
        %v3429 = vmul.f32 %v3427, %v3413
        %v3430 = vmul.f32 %v3423, %v3414
        %v3431 = vmul.f32 %v3427, %v3415
        %v3432 = vmul.f32 %v3423, %v3416
        %v3433 = vmul.f32 %v3427, %v3417
        %v3434 = vmul.f32 %v3423, %v3418
        %v3435 = vmul.f32 %v3427, %v3419
        %v3436 = vadd.f32 %v3404, %v3428
        %v3437 = vadd.f32 %v3405, %v3429
        %v3438 = vadd.f32 %v3406, %v3430
        %v3439 = vadd.f32 %v3407, %v3431
        %v3440 = vadd.f32 %v3408, %v3432
        %v3441 = vadd.f32 %v3409, %v3433
        %v3442 = vadd.f32 %v3410, %v3434
        %v3443 = vadd.f32 %v3411, %v3435
        %v3444 = vpack.c.bf16 %v3438, %v3436
        %v3445 = vpack.c.bf16 %v3439, %v3437
        %v3446 = vpack.c.bf16 %v3442, %v3440
        %v3447 = vpack.c.bf16 %v3443, %v3441
        %v3452 = vunpack.c.l.b16 %v3444
        %v3453 = vunpack.c.l.b16 %v3445
        %v3454 = vunpack.c.h.b16 %v3444
        %v3455 = vunpack.c.h.b16 %v3445
        %v3456 = vunpack.c.l.b16 %v3446
        %v3457 = vunpack.c.l.b16 %v3447
        %v3458 = vunpack.c.h.b16 %v3446
        %v3459 = vunpack.c.h.b16 %v3447
        %v3460 = vpack.c.b16 %v3453, %v3452
        %v3461 = vpack.c.b16 %v3455, %v3454
        %v3462 = vpack.c.b16 %v3457, %v3456
        %v3463 = vpack.c.b16 %v3459, %v3458
        %3468 = vst [vmem:[#allocation3 + $0xc0] sm:$0xff] %v3460
        %3469 = vst [vmem:[#allocation3 + $0xc8] sm:$0xff] %v3461
        %3470 = vst [vmem:[#allocation3 + $0xd0] sm:$0xff] %v3462
        %3471 = vst [vmem:[#allocation3 + $0xd8] sm:$0xff] %v3463
        %s3472 = scalar_lea.vmem %s348, 56 [#allocation4]
        %v3473 = vld [vmem:[%s3472] sm:$0xff]
        %v3474 = vunpack.c.l.bf16 %v3473
        %v3475 = vunpack.c.h.bf16 %v3473
        %v3476 = vmul.f32 %v3474, %v705
        %v3477 = vmul.f32 %v3475, %v707
        %v3478 = vld [vmem:[#allocation2] sm:$0xff]
        %v3479 = vld [vmem:[#allocation2 + $0x8] sm:$0xff]
        %v3480 = vld [vmem:[#allocation2 + $0x10] sm:$0xff]
        %v3481 = vld [vmem:[#allocation2 + $0x18] sm:$0xff]
        %v3482 = vld [vmem:[#allocation2 + $0x20] sm:$0xff]
        %v3483 = vld [vmem:[#allocation2 + $0x28] sm:$0xff]
        %v3484 = vld [vmem:[#allocation2 + $0x30] sm:$0xff]
        %v3485 = vld [vmem:[#allocation2 + $0x38] sm:$0xff]
        %v3486 = vlaneseq
        %v3487 = vshrl.u32 %v3486, 7
        %v3488 = vsub.s32 0, %v3487
        %v3489 = vrot.slane %v3476, %v3488
        %v3490 = vlaneseq
        %v3491 = vshrl.u32 %v3490, 7
        %v3492 = vsub.s32 0, %v3491
        %v3493 = vrot.slane %v3477, %v3492
        %v3494 = vmul.f32 %v3489, %v3478
        %v3495 = vmul.f32 %v3493, %v3479
        %v3496 = vmul.f32 %v3489, %v3480
        %v3497 = vmul.f32 %v3493, %v3481
        %v3498 = vmul.f32 %v3489, %v3482
        %v3499 = vmul.f32 %v3493, %v3483
        %v3500 = vmul.f32 %v3489, %v3484
        %v3501 = vmul.f32 %v3493, %v3485
        %v3502 = vld [vmem:[%s956] sm:$0xff]
        %v3503 = vld [vmem:[%s956 + $0x8] sm:$0xff]
        %v3504 = vld [vmem:[%s956 + $0x10] sm:$0xff]
        %v3505 = vld [vmem:[%s956 + $0x18] sm:$0xff]
        %v3506 = vld [vmem:[%s956 + $0x20] sm:$0xff]
        %v3507 = vld [vmem:[%s956 + $0x28] sm:$0xff]
        %v3508 = vld [vmem:[%s956 + $0x30] sm:$0xff]
        %v3509 = vld [vmem:[%s956 + $0x38] sm:$0xff]
        %v3510 = vlaneseq
        %v3511 = vshrl.u32 %v3510, 7
        %v3512 = vsub.s32 1, %v3511
        %v3513 = vrot.slane %v3476, %v3512
        %v3514 = vlaneseq
        %v3515 = vshrl.u32 %v3514, 7
        %v3516 = vsub.s32 1, %v3515
        %v3517 = vrot.slane %v3477, %v3516
        %v3518 = vmul.f32 %v3513, %v3502
        %v3519 = vmul.f32 %v3517, %v3503
        %v3520 = vmul.f32 %v3513, %v3504
        %v3521 = vmul.f32 %v3517, %v3505
        %v3522 = vmul.f32 %v3513, %v3506
        %v3523 = vmul.f32 %v3517, %v3507
        %v3524 = vmul.f32 %v3513, %v3508
        %v3525 = vmul.f32 %v3517, %v3509
        %v3526 = vadd.f32 %v3494, %v3518
        %v3527 = vadd.f32 %v3495, %v3519
        %v3528 = vadd.f32 %v3496, %v3520
        %v3529 = vadd.f32 %v3497, %v3521
        %v3530 = vadd.f32 %v3498, %v3522
        %v3531 = vadd.f32 %v3499, %v3523
        %v3532 = vadd.f32 %v3500, %v3524
        %v3533 = vadd.f32 %v3501, %v3525
        %v3534 = vld [vmem:[%s1045] sm:$0xff]
        %v3535 = vld [vmem:[%s1045 + $0x8] sm:$0xff]
        %v3536 = vld [vmem:[%s1045 + $0x10] sm:$0xff]
        %v3537 = vld [vmem:[%s1045 + $0x18] sm:$0xff]
        %v3538 = vld [vmem:[%s1045 + $0x20] sm:$0xff]
        %v3539 = vld [vmem:[%s1045 + $0x28] sm:$0xff]
        %v3540 = vld [vmem:[%s1045 + $0x30] sm:$0xff]
        %v3541 = vld [vmem:[%s1045 + $0x38] sm:$0xff]
        %v3542 = vlaneseq
        %v3543 = vshrl.u32 %v3542, 7
        %v3544 = vsub.s32 2, %v3543
        %v3545 = vrot.slane %v3476, %v3544
        %v3546 = vlaneseq
        %v3547 = vshrl.u32 %v3546, 7
        %v3548 = vsub.s32 2, %v3547
        %v3549 = vrot.slane %v3477, %v3548
        %v3550 = vmul.f32 %v3545, %v3534
        %v3551 = vmul.f32 %v3549, %v3535
        %v3552 = vmul.f32 %v3545, %v3536
        %v3553 = vmul.f32 %v3549, %v3537
        %v3554 = vmul.f32 %v3545, %v3538
        %v3555 = vmul.f32 %v3549, %v3539
        %v3556 = vmul.f32 %v3545, %v3540
        %v3557 = vmul.f32 %v3549, %v3541
        %v3558 = vadd.f32 %v3526, %v3550
        %v3559 = vadd.f32 %v3527, %v3551
        %v3560 = vadd.f32 %v3528, %v3552
        %v3561 = vadd.f32 %v3529, %v3553
        %v3562 = vadd.f32 %v3530, %v3554
        %v3563 = vadd.f32 %v3531, %v3555
        %v3564 = vadd.f32 %v3532, %v3556
        %v3565 = vadd.f32 %v3533, %v3557
        %v3566 = vld [vmem:[%s1134] sm:$0xff]
        %v3567 = vld [vmem:[%s1134 + $0x8] sm:$0xff]
        %v3568 = vld [vmem:[%s1134 + $0x10] sm:$0xff]
        %v3569 = vld [vmem:[%s1134 + $0x18] sm:$0xff]
        %v3570 = vld [vmem:[%s1134 + $0x20] sm:$0xff]
        %v3571 = vld [vmem:[%s1134 + $0x28] sm:$0xff]
        %v3572 = vld [vmem:[%s1134 + $0x30] sm:$0xff]
        %v3573 = vld [vmem:[%s1134 + $0x38] sm:$0xff]
        %v3574 = vlaneseq
        %v3575 = vshrl.u32 %v3574, 7
        %v3576 = vsub.s32 3, %v3575
        %v3577 = vrot.slane %v3476, %v3576
        %v3578 = vlaneseq
        %v3579 = vshrl.u32 %v3578, 7
        %v3580 = vsub.s32 3, %v3579
        %v3581 = vrot.slane %v3477, %v3580
        %v3582 = vmul.f32 %v3577, %v3566
        %v3583 = vmul.f32 %v3581, %v3567
        %v3584 = vmul.f32 %v3577, %v3568
        %v3585 = vmul.f32 %v3581, %v3569
        %v3586 = vmul.f32 %v3577, %v3570
        %v3587 = vmul.f32 %v3581, %v3571
        %v3588 = vmul.f32 %v3577, %v3572
        %v3589 = vmul.f32 %v3581, %v3573
        %v3590 = vadd.f32 %v3558, %v3582
        %v3591 = vadd.f32 %v3559, %v3583
        %v3592 = vadd.f32 %v3560, %v3584
        %v3593 = vadd.f32 %v3561, %v3585
        %v3594 = vadd.f32 %v3562, %v3586
        %v3595 = vadd.f32 %v3563, %v3587
        %v3596 = vadd.f32 %v3564, %v3588
        %v3597 = vadd.f32 %v3565, %v3589
        %v3598 = vld [vmem:[%s1223] sm:$0xff]
        %v3599 = vld [vmem:[%s1223 + $0x8] sm:$0xff]
        %v3600 = vld [vmem:[%s1223 + $0x10] sm:$0xff]
        %v3601 = vld [vmem:[%s1223 + $0x18] sm:$0xff]
        %v3602 = vld [vmem:[%s1223 + $0x20] sm:$0xff]
        %v3603 = vld [vmem:[%s1223 + $0x28] sm:$0xff]
        %v3604 = vld [vmem:[%s1223 + $0x30] sm:$0xff]
        %v3605 = vld [vmem:[%s1223 + $0x38] sm:$0xff]
        %v3606 = vlaneseq
        %v3607 = vshrl.u32 %v3606, 7
        %v3608 = vsub.s32 4, %v3607
        %v3609 = vrot.slane %v3476, %v3608
        %v3610 = vlaneseq
        %v3611 = vshrl.u32 %v3610, 7
        %v3612 = vsub.s32 4, %v3611
        %v3613 = vrot.slane %v3477, %v3612
        %v3614 = vmul.f32 %v3609, %v3598
        %v3615 = vmul.f32 %v3613, %v3599
        %v3616 = vmul.f32 %v3609, %v3600
        %v3617 = vmul.f32 %v3613, %v3601
        %v3618 = vmul.f32 %v3609, %v3602
        %v3619 = vmul.f32 %v3613, %v3603
        %v3620 = vmul.f32 %v3609, %v3604
        %v3621 = vmul.f32 %v3613, %v3605
        %v3622 = vadd.f32 %v3590, %v3614
        %v3623 = vadd.f32 %v3591, %v3615
        %v3624 = vadd.f32 %v3592, %v3616
        %v3625 = vadd.f32 %v3593, %v3617
        %v3626 = vadd.f32 %v3594, %v3618
        %v3627 = vadd.f32 %v3595, %v3619
        %v3628 = vadd.f32 %v3596, %v3620
        %v3629 = vadd.f32 %v3597, %v3621
        %v3630 = vld [vmem:[%s1312] sm:$0xff]
        %v3631 = vld [vmem:[%s1312 + $0x8] sm:$0xff]
        %v3632 = vld [vmem:[%s1312 + $0x10] sm:$0xff]
        %v3633 = vld [vmem:[%s1312 + $0x18] sm:$0xff]
        %v3634 = vld [vmem:[%s1312 + $0x20] sm:$0xff]
        %v3635 = vld [vmem:[%s1312 + $0x28] sm:$0xff]
        %v3636 = vld [vmem:[%s1312 + $0x30] sm:$0xff]
        %v3637 = vld [vmem:[%s1312 + $0x38] sm:$0xff]
        %v3638 = vlaneseq
        %v3639 = vshrl.u32 %v3638, 7
        %v3640 = vsub.s32 5, %v3639
        %v3641 = vrot.slane %v3476, %v3640
        %v3642 = vlaneseq
        %v3643 = vshrl.u32 %v3642, 7
        %v3644 = vsub.s32 5, %v3643
        %v3645 = vrot.slane %v3477, %v3644
        %v3646 = vmul.f32 %v3641, %v3630
        %v3647 = vmul.f32 %v3645, %v3631
        %v3648 = vmul.f32 %v3641, %v3632
        %v3649 = vmul.f32 %v3645, %v3633
        %v3650 = vmul.f32 %v3641, %v3634
        %v3651 = vmul.f32 %v3645, %v3635
        %v3652 = vmul.f32 %v3641, %v3636
        %v3653 = vmul.f32 %v3645, %v3637
        %v3654 = vadd.f32 %v3622, %v3646
        %v3655 = vadd.f32 %v3623, %v3647
        %v3656 = vadd.f32 %v3624, %v3648
        %v3657 = vadd.f32 %v3625, %v3649
        %v3658 = vadd.f32 %v3626, %v3650
        %v3659 = vadd.f32 %v3627, %v3651
        %v3660 = vadd.f32 %v3628, %v3652
        %v3661 = vadd.f32 %v3629, %v3653
        %v3662 = vld [vmem:[%s1401] sm:$0xff]
        %v3663 = vld [vmem:[%s1401 + $0x8] sm:$0xff]
        %v3664 = vld [vmem:[%s1401 + $0x10] sm:$0xff]
        %v3665 = vld [vmem:[%s1401 + $0x18] sm:$0xff]
        %v3666 = vld [vmem:[%s1401 + $0x20] sm:$0xff]
        %v3667 = vld [vmem:[%s1401 + $0x28] sm:$0xff]
        %v3668 = vld [vmem:[%s1401 + $0x30] sm:$0xff]
        %v3669 = vld [vmem:[%s1401 + $0x38] sm:$0xff]
        %v3670 = vlaneseq
        %v3671 = vshrl.u32 %v3670, 7
        %v3672 = vsub.s32 6, %v3671
        %v3673 = vrot.slane %v3476, %v3672
        %v3674 = vlaneseq
        %v3675 = vshrl.u32 %v3674, 7
        %v3676 = vsub.s32 6, %v3675
        %v3677 = vrot.slane %v3477, %v3676
        %v3678 = vmul.f32 %v3673, %v3662
        %v3679 = vmul.f32 %v3677, %v3663
        %v3680 = vmul.f32 %v3673, %v3664
        %v3681 = vmul.f32 %v3677, %v3665
        %v3682 = vmul.f32 %v3673, %v3666
        %v3683 = vmul.f32 %v3677, %v3667
        %v3684 = vmul.f32 %v3673, %v3668
        %v3685 = vmul.f32 %v3677, %v3669
        %v3686 = vadd.f32 %v3654, %v3678
        %v3687 = vadd.f32 %v3655, %v3679
        %v3688 = vadd.f32 %v3656, %v3680
        %v3689 = vadd.f32 %v3657, %v3681
        %v3690 = vadd.f32 %v3658, %v3682
        %v3691 = vadd.f32 %v3659, %v3683
        %v3692 = vadd.f32 %v3660, %v3684
        %v3693 = vadd.f32 %v3661, %v3685
        %v3694 = vld [vmem:[%s1490] sm:$0xff]
        %v3695 = vld [vmem:[%s1490 + $0x8] sm:$0xff]
        %v3696 = vld [vmem:[%s1490 + $0x10] sm:$0xff]
        %v3697 = vld [vmem:[%s1490 + $0x18] sm:$0xff]
        %v3698 = vld [vmem:[%s1490 + $0x20] sm:$0xff]
        %v3699 = vld [vmem:[%s1490 + $0x28] sm:$0xff]
        %v3700 = vld [vmem:[%s1490 + $0x30] sm:$0xff]
        %v3701 = vld [vmem:[%s1490 + $0x38] sm:$0xff]
        %v3702 = vlaneseq
        %v3703 = vshrl.u32 %v3702, 7
        %v3704 = vsub.s32 7, %v3703
        %v3705 = vrot.slane %v3476, %v3704
        %v3706 = vlaneseq
        %v3707 = vshrl.u32 %v3706, 7
        %v3708 = vsub.s32 7, %v3707
        %v3709 = vrot.slane %v3477, %v3708
        %v3710 = vmul.f32 %v3705, %v3694
        %v3711 = vmul.f32 %v3709, %v3695
        %v3712 = vmul.f32 %v3705, %v3696
        %v3713 = vmul.f32 %v3709, %v3697
        %v3714 = vmul.f32 %v3705, %v3698
        %v3715 = vmul.f32 %v3709, %v3699
        %v3716 = vmul.f32 %v3705, %v3700
        %v3717 = vmul.f32 %v3709, %v3701
        %v3718 = vadd.f32 %v3686, %v3710
        %v3719 = vadd.f32 %v3687, %v3711
        %v3720 = vadd.f32 %v3688, %v3712
        %v3721 = vadd.f32 %v3689, %v3713
        %v3722 = vadd.f32 %v3690, %v3714
        %v3723 = vadd.f32 %v3691, %v3715
        %v3724 = vadd.f32 %v3692, %v3716
        %v3725 = vadd.f32 %v3693, %v3717
        %v3726 = vpack.c.bf16 %v3720, %v3718
        %v3727 = vpack.c.bf16 %v3721, %v3719
        %v3728 = vpack.c.bf16 %v3724, %v3722
        %v3729 = vpack.c.bf16 %v3725, %v3723
        %v3734 = vunpack.c.l.b16 %v3726
        %v3735 = vunpack.c.l.b16 %v3727
        %v3736 = vunpack.c.h.b16 %v3726
        %v3737 = vunpack.c.h.b16 %v3727
        %v3738 = vunpack.c.l.b16 %v3728
        %v3739 = vunpack.c.l.b16 %v3729
        %v3740 = vunpack.c.h.b16 %v3728
        %v3741 = vunpack.c.h.b16 %v3729
        %v3742 = vpack.c.b16 %v3735, %v3734
        %v3743 = vpack.c.b16 %v3737, %v3736
        %v3744 = vpack.c.b16 %v3739, %v3738
        %v3745 = vpack.c.b16 %v3741, %v3740
        %3750 = vst [vmem:[#allocation3 + $0xe0] sm:$0xff] %v3742
        %3751 = vst [vmem:[#allocation3 + $0xe8] sm:$0xff] %v3743
        %3752 = vst [vmem:[#allocation3 + $0xf0] sm:$0xff] %v3744
        %3753 = vst [vmem:[#allocation3 + $0xf8] sm:$0xff] %v3745
        %v3754 = vld [vmem:[%s4] sm:$0xff]
        %v3755 = vld [vmem:[%s4 + $0x8] sm:$0xff]
        %v3756 = vld [vmem:[#allocation3] sm:$0xff]
        %v3757 = vld [vmem:[#allocation3 + $0x8] sm:$0xff]
        %v3758 = vld [vmem:[#allocation3 + $0x10] sm:$0xff]
        %v3759 = vld [vmem:[#allocation3 + $0x18] sm:$0xff]
        %v3760 = vld [vmem:[#allocation3 + $0x20] sm:$0xff]
        %v3761 = vld [vmem:[#allocation3 + $0x28] sm:$0xff]
        %v3762 = vld [vmem:[#allocation3 + $0x30] sm:$0xff]
        %v3763 = vld [vmem:[#allocation3 + $0x38] sm:$0xff]
        %v3764 = vld [vmem:[#allocation3 + $0x40] sm:$0xff]
        %v3765 = vld [vmem:[#allocation3 + $0x48] sm:$0xff]
        %v3766 = vld [vmem:[#allocation3 + $0x50] sm:$0xff]
        %v3767 = vld [vmem:[#allocation3 + $0x58] sm:$0xff]
        %v3768 = vld [vmem:[#allocation3 + $0x60] sm:$0xff]
        %v3769 = vld [vmem:[#allocation3 + $0x68] sm:$0xff]
        %v3770 = vld [vmem:[#allocation3 + $0x70] sm:$0xff]
        %v3771 = vld [vmem:[#allocation3 + $0x78] sm:$0xff]
        %v3772 = vld [vmem:[#allocation3 + $0x80] sm:$0xff]
        %v3773 = vld [vmem:[#allocation3 + $0x88] sm:$0xff]
        %v3774 = vld [vmem:[#allocation3 + $0x90] sm:$0xff]
        %v3775 = vld [vmem:[#allocation3 + $0x98] sm:$0xff]
        %v3776 = vld [vmem:[#allocation3 + $0xa0] sm:$0xff]
        %v3777 = vld [vmem:[#allocation3 + $0xa8] sm:$0xff]
        %v3778 = vld [vmem:[#allocation3 + $0xb0] sm:$0xff]
        %v3779 = vld [vmem:[#allocation3 + $0xb8] sm:$0xff]
        %v3780 = vld [vmem:[#allocation3 + $0xc0] sm:$0xff]
        %v3781 = vld [vmem:[#allocation3 + $0xc8] sm:$0xff]
        %v3782 = vld [vmem:[#allocation3 + $0xd0] sm:$0xff]
        %v3783 = vld [vmem:[#allocation3 + $0xd8] sm:$0xff]
        %v3784 = vld [vmem:[#allocation3 + $0xe0] sm:$0xff]
        %v3785 = vld [vmem:[#allocation3 + $0xe8] sm:$0xff]
        %v3786 = vld [vmem:[#allocation3 + $0xf0] sm:$0xff]
        %v3787 = vld [vmem:[#allocation3 + $0xf8] sm:$0xff]
        %v3788 = vld [vmem:[%s5] sm:$0xff]
        %v3789 = vld [vmem:[%s5 + $0x8] sm:$0xff]
        %3791 = vset.pattern.permute.xlu0 0
        %3792 = vperm.xlu0 %3791, %v3788
        %v3793 = vpop.permute.xlu0 %3792
        %3796 = vset.pattern.permute.xlu0 0
        %3797 = vperm.xlu0 %3796, %v3789
        %v3798 = vpop.permute.xlu0 %3797
        %v3802 = vunpack.c.l.b16 %v3754
        %v3803 = vunpack.c.h.b16 %v3754
        %v3804 = vunpack.c.l.b16 %v3755
        %v3805 = vunpack.c.h.b16 %v3755
        %v3806 = vpack.c.b16 %v3804, %v3802
        %v3807 = vpack.c.b16 %v3805, %v3803
        %v3842 = vunpack.c.l.b16 %v3756
        %v3843 = vunpack.c.h.b16 %v3756
        %v3844 = vunpack.c.l.b16 %v3757
        %v3845 = vunpack.c.h.b16 %v3757
        %v3846 = vunpack.c.l.b16 %v3758
        %v3847 = vunpack.c.h.b16 %v3758
        %v3848 = vunpack.c.l.b16 %v3759
        %v3849 = vunpack.c.h.b16 %v3759
        %v3850 = vunpack.c.l.b16 %v3760
        %v3851 = vunpack.c.h.b16 %v3760
        %v3852 = vunpack.c.l.b16 %v3761
        %v3853 = vunpack.c.h.b16 %v3761
        %v3854 = vunpack.c.l.b16 %v3762
        %v3855 = vunpack.c.h.b16 %v3762
        %v3856 = vunpack.c.l.b16 %v3763
        %v3857 = vunpack.c.h.b16 %v3763
        %v3858 = vunpack.c.l.b16 %v3764
        %v3859 = vunpack.c.h.b16 %v3764
        %v3860 = vunpack.c.l.b16 %v3765
        %v3861 = vunpack.c.h.b16 %v3765
        %v3862 = vunpack.c.l.b16 %v3766
        %v3863 = vunpack.c.h.b16 %v3766
        %v3864 = vunpack.c.l.b16 %v3767
        %v3865 = vunpack.c.h.b16 %v3767
        %v3866 = vunpack.c.l.b16 %v3768
        %v3867 = vunpack.c.h.b16 %v3768
        %v3868 = vunpack.c.l.b16 %v3769
        %v3869 = vunpack.c.h.b16 %v3769
        %v3870 = vunpack.c.l.b16 %v3770
        %v3871 = vunpack.c.h.b16 %v3770
        %v3872 = vunpack.c.l.b16 %v3771
        %v3873 = vunpack.c.h.b16 %v3771
        %v3874 = vunpack.c.l.b16 %v3772
        %v3875 = vunpack.c.h.b16 %v3772
        %v3876 = vunpack.c.l.b16 %v3773
        %v3877 = vunpack.c.h.b16 %v3773
        %v3878 = vunpack.c.l.b16 %v3774
        %v3879 = vunpack.c.h.b16 %v3774
        %v3880 = vunpack.c.l.b16 %v3775
        %v3881 = vunpack.c.h.b16 %v3775
        %v3882 = vunpack.c.l.b16 %v3776
        %v3883 = vunpack.c.h.b16 %v3776
        %v3884 = vunpack.c.l.b16 %v3777
        %v3885 = vunpack.c.h.b16 %v3777
        %v3886 = vunpack.c.l.b16 %v3778
        %v3887 = vunpack.c.h.b16 %v3778
        %v3888 = vunpack.c.l.b16 %v3779
        %v3889 = vunpack.c.h.b16 %v3779
        %v3890 = vunpack.c.l.b16 %v3780
        %v3891 = vunpack.c.h.b16 %v3780
        %v3892 = vunpack.c.l.b16 %v3781
        %v3893 = vunpack.c.h.b16 %v3781
        %v3894 = vunpack.c.l.b16 %v3782
        %v3895 = vunpack.c.h.b16 %v3782
        %v3896 = vunpack.c.l.b16 %v3783
        %v3897 = vunpack.c.h.b16 %v3783
        %v3898 = vunpack.c.l.b16 %v3784
        %v3899 = vunpack.c.h.b16 %v3784
        %v3900 = vunpack.c.l.b16 %v3785
        %v3901 = vunpack.c.h.b16 %v3785
        %v3902 = vunpack.c.l.b16 %v3786
        %v3903 = vunpack.c.h.b16 %v3786
        %v3904 = vunpack.c.l.b16 %v3787
        %v3905 = vunpack.c.h.b16 %v3787
        %v3906 = vpack.c.b16 %v3844, %v3842
        %v3907 = vpack.c.b16 %v3845, %v3843
        %v3908 = vpack.c.b16 %v3848, %v3846
        %v3909 = vpack.c.b16 %v3849, %v3847
        %v3910 = vpack.c.b16 %v3852, %v3850
        %v3911 = vpack.c.b16 %v3853, %v3851
        %v3912 = vpack.c.b16 %v3856, %v3854
        %v3913 = vpack.c.b16 %v3857, %v3855
        %v3914 = vpack.c.b16 %v3860, %v3858
        %v3915 = vpack.c.b16 %v3861, %v3859
        %v3916 = vpack.c.b16 %v3864, %v3862
        %v3917 = vpack.c.b16 %v3865, %v3863
        %v3918 = vpack.c.b16 %v3868, %v3866
        %v3919 = vpack.c.b16 %v3869, %v3867
        %v3920 = vpack.c.b16 %v3872, %v3870
        %v3921 = vpack.c.b16 %v3873, %v3871
        %v3922 = vpack.c.b16 %v3876, %v3874
        %v3923 = vpack.c.b16 %v3877, %v3875
        %v3924 = vpack.c.b16 %v3880, %v3878
        %v3925 = vpack.c.b16 %v3881, %v3879
        %v3926 = vpack.c.b16 %v3884, %v3882
        %v3927 = vpack.c.b16 %v3885, %v3883
        %v3928 = vpack.c.b16 %v3888, %v3886
        %v3929 = vpack.c.b16 %v3889, %v3887
        %v3930 = vpack.c.b16 %v3892, %v3890
        %v3931 = vpack.c.b16 %v3893, %v3891
        %v3932 = vpack.c.b16 %v3896, %v3894
        %v3933 = vpack.c.b16 %v3897, %v3895
        %v3934 = vpack.c.b16 %v3900, %v3898
        %v3935 = vpack.c.b16 %v3901, %v3899
        %v3936 = vpack.c.b16 %v3904, %v3902
        %v3937 = vpack.c.b16 %v3905, %v3903
        %3970 = vmatprep.subr.bf16.mxu0 %v3921
        %3971 = vmatpush1.bf16.msra.mxu0 %v3920
        %3972 = vmatprep.subr.bf16.mxu0 %v3919
        %3973 = vmatpush1.bf16.msra.mxu0 %v3918
        %3974 = vmatprep.subr.bf16.mxu0 %v3917
        %3975 = vmatpush1.bf16.msra.mxu0 %v3916
        %3976 = vmatprep.subr.bf16.mxu0 %v3915
        %3977 = vmatpush1.bf16.msra.mxu0 %v3914
        %3978 = vmatprep.subr.bf16.mxu0 %v3913
        %3979 = vmatpush1.bf16.msra.mxu0 %v3912
        %3980 = vmatprep.subr.bf16.mxu0 %v3911
        %3981 = vmatpush1.bf16.msra.mxu0 %v3910
        %3982 = vmatprep.subr.bf16.mxu0 %v3909
        %3983 = vmatpush1.bf16.msra.mxu0 %v3908
        %3984 = vmatprep.subr.bf16.mxu0 %v3907
        %3985 = vmatpush1.bf16.msra.mxu0 %v3906
        %3986 = vmatprep.subr.bf16.mxu0 %v3937
        %3987 = vmatpush2.bf16.msra.mxu0 %v3936
        %3988 = vmatprep.subr.bf16.mxu0 %v3935
        %3989 = vmatpush2.bf16.msra.mxu0 %v3934
        %3990 = vmatprep.subr.bf16.mxu0 %v3933
        %3991 = vmatpush2.bf16.msra.mxu0 %v3932
        %3992 = vmatprep.subr.bf16.mxu0 %v3931
        %3993 = vmatpush2.bf16.msra.mxu0 %v3930
        %3994 = vmatprep.subr.bf16.mxu0 %v3929
        %3995 = vmatpush2.bf16.msra.mxu0 %v3928
        %3996 = vmatprep.subr.bf16.mxu0 %v3927
        %3997 = vmatpush2.bf16.msra.mxu0 %v3926
        %3998 = vmatprep.subr.bf16.mxu0 %v3925
        %3999 = vmatpush2.bf16.msra.mxu0 %v3924
        %4000 = vmatprep.subr.bf16.mxu0 %v3923
        %4001 = vmatpush2.bf16.msra.mxu0 %v3922
        %4002 = vmatprep.mubr.bf16.mxu0 %v3807
        %4003 = vmatmul.mubr.bf16.gmra.mxu0 %v3806
        %v4004 = vpop.f32.mrf.mxu0
        %v4005 = vadd.f32 %v3793, %v4004
        %v4006 = vpop.f32.mrf.mxu0
        %v4007 = vadd.f32 %v3793, %v4006
        %v4008 = vpop.f32.mrf.mxu0
        %v4009 = vadd.f32 %v3798, %v4008
        %v4010 = vpop.f32.mrf.mxu0
        %v4011 = vadd.f32 %v3798, %v4010
        %4012 = vdwg.mxu0
        %4013 = vst [vmem:[%s411] sm:$0xff] %v4005
        %4014 = vst [vmem:[%s411 + $0x8] sm:$0xff] %v4007
        %4015 = vst [vmem:[%s411 + $0x10] sm:$0xff] %v4009
        %4016 = vst [vmem:[%s411 + $0x18] sm:$0xff] %v4011
        %s4017 = sand.u32 %s218, 1
        %s4018 = scalar_lea.sflag [#allocation6], %s4017
        %s4019 = sand.u32 %s218, 1
        %s4020 = smul.addr %s4019, 32
        %s4021 = scalar_lea.vmem [#allocation12], %s4020
        // Predicated region
        $region65: #{tpu_custom_call.1} parent=47 // pred_check
          %p4022 = pneg %p228
        $region66: #{tpu_custom_call.1} parent=47 // pred_check_branch
          %4024 = sbr.rel (%p4022) target = $region68
        $region67: #{tpu_custom_call.1} parent=47 // pred_region
          %s4025 = smul.u32 2, %s33
          %s4027 = ssub.s32 512, 512
          %4028 = vsyncadd %s4018, %s4027
          %s4029 = smul.addr %s32, 8
          %s4030 = sadd.s32 %s4025, %s4029
          %s4031 = smul.addr %s4030, 128
          %s4032 = scalar_lea.hbm %s7, %s4031
          %s4033 = sshll.u32 %s4021, 4
          %s4034 = int_to_ptr.vmem [resolvable:$true] %s4033
          %4039 = dma.vmem_to_hbm [thread:$0]  %s4034, 512, %s4032, %s4018, 256, 512, 16
        $region68: #{tpu_custom_call.1} parent=47 // pred_fallthru
          _
      $region48: #{tpu_custom_call.1} parent=5 // pred_fallthru
        _
      %p4040 = scmp.le.s32.totalorder 2, %s23
      // Predicated region
      $region69: #{tpu_custom_call.1} parent=5 // pred_check
        %p4041 = pneg %p4040
      $region70: #{tpu_custom_call.1} parent=5 // pred_check_branch
        %4043 = sbr.rel (%p4041) target = $region72
      $region71: #{tpu_custom_call.1} parent=5 // pred_region
        %s4044 = ssub.s32 %s23, 2
        // Predicated region
        $region73: #{tpu_custom_call.1} parent=71 // pred_check
          %p4045 = pneg %p234
        $region74: #{tpu_custom_call.1} parent=71 // pred_check_branch
          %4047 = sbr.rel (%p4045) target = $region76
        $region75: #{tpu_custom_call.1} parent=71 // pred_region
          %s4048 = sand.u32 %s219, 1
          %s4049 = scalar_lea.sflag [#allocation6], %s4048
          %s4050 = sand.u32 %s219, 1
          %s4051 = smul.addr %s4050, 32
          %s4052 = scalar_lea.vmem [#allocation12], %s4051
          %4053 = dma.done %s4049, 512
        $region76: #{tpu_custom_call.1} parent=71 // pred_fallthru
          _
      $region72: #{tpu_custom_call.1} parent=5 // pred_fallthru
        _
    $region6: #{tpu_custom_call.1} parent=1 // loop_footer
      %s27 = sadd.s32 1, %s23
    $region7: #{tpu_custom_call.1} parent=1 // loop_footer_branch
      %22 = sbr.rel target = $region3
    $region8: #{tpu_custom_call.1} parent=1 // loop_exit
      _
    %4054 = vsyncpa [#allocation5], 1
    %s4055 = scalar_lea.sflag [#allocation5], 1
    %4056 = vsyncpa %s4055, 1
    %4057 = vsyncpa [#allocation9], 1
    %s4058 = scalar_lea.sflag [#allocation9], 1
    %4059 = vsyncpa %s4058, 1
    %4060 = vsyncpa [#allocation6], 1
    %s4061 = scalar_lea.sflag [#allocation6], 1
    %4062 = vsyncpa %s4061, 1
    %4063 = vsyncpa [#allocation7], 1
    %s4064 = scalar_lea.sflag [#allocation7], 1
    %4065 = vsyncpa %s4064, 1

</llo_original>
